<compile_context>
chip_gen: v5e
topology: v5e:2x2
jax: 0.10.0
libtpu: 0.0.40
codegen_flags: <defaults>
</compile_context>

<pallas_src>
import functools

import jax
import jax.numpy as jnp
from jax import lax
from jax.experimental import pallas as pl
from jax.experimental.pallas import tpu as pltpu

VMEM = pl.BlockSpec(memory_space=pltpu.MemorySpace.VMEM)


# ----------------------------------------------------------------------------
# Fused forward kernel
# ----------------------------------------------------------------------------
def _forward_kernel(hist_ref, tgt_ref, len_ref,
                    seq_w_ref, seq_b_ref,
                    tgt_w0_ref, tgt_b0_ref, tgt_w1_ref, tgt_b1_ref,
                    wih_ref, bih_ref, whh_ref, bhh_ref,
                    wg_ref, wgb_ref, bg_ref, bgb_ref,
                    o_ref,
                    gx0_ref, gx1_ref,
                    *, T, B, D, L, CH):
    f32 = jnp.float32
    bf16 = jnp.bfloat16
    n_chunks = pl.cdiv(T, CH)
    gx_bufs = (gx0_ref, gx1_ref)

    # -- chunked, double-buffered input-side projection of BOTH GRUs ----------
    #    gx columns are gate-interleaved: [r_m r_z | z_m z_z | n_m n_z]
    def project(c):
        t0 = c * CH
        rows = min(CH, T - t0) * B                               # static
        buf = gx_bufs[c & 1]
        hist_c = hist_ref[pl.ds(t0 * B, rows), :]                # (rows, D) bf16
        act = jnp.tanh(
            jnp.dot(hist_c, seq_w_ref[...], preferred_element_type=f32)
            + seq_b_ref[...])                                    # _seq_trans
        gx = (jnp.dot(act.astype(bf16), wih_ref[...],
                      preferred_element_type=f32) + bih_ref[...])
        buf[pl.ds(0, rows), :] = gx.astype(bf16)                 # bf16 scratch

    # -- _target_trans (Dense+Tanh, Dense): independent of the recurrence -----
    tv = jnp.tanh(
        jnp.dot(tgt_ref[...], tgt_w0_ref[...], preferred_element_type=f32)
        + tgt_b0_ref[...])
    tv = (jnp.dot(tv.astype(bf16), tgt_w1_ref[...], preferred_element_type=f32)
          + tgt_b1_ref[...])                                     # (B, D) f32

    lens = len_ref[...]                                          # (B, 1) int32

    # -- recurrence: both GRUs fused; one (B,2D)@(2D,6D) MXU push per step ----
    h = jnp.zeros((B, 2 * D), f32)                               # [h_main|h_hyp]
    o = jnp.zeros((B, 2 * D), f32)                               # gathered state

    project(0)
    for c in range(n_chunks):
        if c + 1 < n_chunks:
            project(c + 1)             # independent; overlaps chunk-c recurrence
        buf = gx_bufs[c & 1]
        t0 = c * CH
        ch = min(CH, T - t0)

        def step(s, carry, _t0=t0, _buf=buf):
            h, o = carry
            row = pl.multiple_of(s * B, B)
            gx = _buf[pl.ds(row, B), :].astype(f32)              # (B, 6D)
            gh = (jnp.dot(h.astype(bf16), whh_ref[...],
                          preferred_element_type=f32) + bhh_ref[...])
            # PyTorch GRU gate math, vectorized over both GRUs (2D lanes/gate).
            rz = jax.nn.sigmoid(gx[:, :4 * D] + gh[:, :4 * D])
            r, z = rz[:, :2 * D], rz[:, 2 * D:]
            n = jnp.tanh(gx[:, 4 * D:] + r * gh[:, 4 * D:])
            h = (1.0 - z) * n + z * h
            o = jnp.where(lens == (_t0 + s), h, o)               # gather@seq_len
            return h, o

        h, o = lax.fori_loop(0, ch, step, (h, o), unroll=True)

    user_state = o[:, :D]                                        # main GRU
    zcode = o[:, D:]                                             # hypernet GRU

    # -- HyperNetwork_FC via reassociated MXU contraction ---------------------
    #    x_new = flatten(zc ⊗ x) @ wg_r[i] + x @ wgb_r[i] + (zc @ bg + bgb)
    zc16 = zcode.astype(bf16)
    biases = (jnp.dot(zc16, bg_ref[...], preferred_element_type=f32)
              + bgb_ref[...])                                    # (B, L*D) f32
    x = user_state
    for i in range(L):
        P = (zcode[:, :, None] * x[:, None, :]).reshape(B, D * D)
        x = (jnp.dot(P.astype(bf16), wg_ref[i], preferred_element_type=f32)
             + jnp.dot(x.astype(bf16), wgb_ref[i], preferred_element_type=f32)
             + biases[:, i * D:(i + 1) * D])
        if i < L - 1:
            x = jnp.tanh(x)

    o_ref[...] = jnp.sum(x * tv, axis=1, keepdims=True).astype(o_ref.dtype)


# ----------------------------------------------------------------------------
# Forward-pass wrapper (embedding gather + weight packing are glue)
# ----------------------------------------------------------------------------
def _interleave_gates(w, D):
    """[r_m z_m n_m | r_z z_z n_z] -> [r_m r_z | z_m z_z | n_m n_z] columns."""
    lead = w.shape[:-1]
    return jnp.swapaxes(w.reshape(lead + (2, 3, D)), -3, -2).reshape(lead + (6 * D,))


def gru4rec_forward(params, clk_seq, trigger_seq, target_id, *, chunk=4):
    # Trigger-sequence dense is dead compute on the fig1=False path -> dropped.
    del trigger_seq
    D = params["emb"].shape[1]
    B, T = clk_seq.shape
    L = params["wg"].shape[0]
    bf16 = jnp.bfloat16
    f32 = jnp.float32
    CH = max(1, min(chunk, T))

    # IDEncoder gathers; click history gathered time-major directly (row=t*B+b)
    hist_tm = params["emb"][clk_seq.T].reshape(T * B, D).astype(bf16)
    tgt = params["emb"][target_id].astype(bf16)

    # sequence lengths (no_grad block in torch); all-pad rows give length 0.
    mask = (clk_seq != 0).astype(jnp.int32)
    seq_len = jnp.maximum(jnp.sum(mask, axis=1) - 1, 0).astype(jnp.int32).reshape(B, 1)

    # fused input-side GRU weights (both GRUs), gate-interleaved columns
    wih_cat = _interleave_gates(
        jnp.concatenate([params["gru_wih"], params["hyp_wih"]], axis=1), D)
    bih_cat = _interleave_gates(
        jnp.concatenate([params["gru_bih"], params["hyp_bih"]], axis=0), D).reshape(1, 6 * D)
    # block-diagonal fused h-side weights: one MXU push per recurrence step
    z3 = jnp.zeros((D, 3 * D), f32)
    whh_bd = _interleave_gates(
        jnp.concatenate([
            jnp.concatenate([params["gru_whh"], z3], axis=1),
            jnp.concatenate([z3, params["hyp_whh"]], axis=1)], axis=0), D)   # (2D, 6D)
    bhh_cat = _interleave_gates(
        jnp.concatenate([params["gru_bhh"], params["hyp_bhh"]], axis=0), D).reshape(1, 6 * D)

    # hyper-network generators pre-shaped for the reassociated contraction:
    #   wg_r[(c*D+d), e] = wg[c, d*D+e] ;  wgb_r[d, e] = wgb[0, d*D+e]
    wg_r = params["wg"].reshape(L, D * D, D).astype(bf16)
    wgb_r = params["wgb"].reshape(L, D, D).astype(bf16)
    bg_cat = jnp.transpose(params["bg"], (1, 0, 2)).reshape(D, L * D).astype(bf16)
    bgb_cat = params["bgb"].reshape(1, L * D)

    operands = (
        hist_tm, tgt, seq_len,
        params["seq_w"].astype(bf16), params["seq_b"].reshape(1, D),
        params["tgt_w0"].astype(bf16), params["tgt_b0"].reshape(1, D),
        params["tgt_w1"].astype(bf16), params["tgt_b1"].reshape(1, D),
        wih_cat.astype(bf16), bih_cat,
        whh_bd.astype(bf16), bhh_cat,
        wg_r, wgb_r, bg_cat, bgb_cat,
    )

    # explicit scoped-VMEM limit sized to the real footprint (+headroom),
    # capped at v7x's 64 MiB physical VMEM.
    scratch_bytes = 2 * (CH * B) * (6 * D) * 2
    footprint = sum(int(a.size) * a.dtype.itemsize for a in operands) + B * 4 + scratch_bytes
    vmem_limit = int(min(max(4 * footprint, 32 << 20), 64 << 20))

    kernel = functools.partial(_forward_kernel, T=T, B=B, D=D, L=L, CH=CH)
    return pl.pallas_call(
        kernel,
        out_shape=jax.ShapeDtypeStruct((B, 1), jnp.float32),
        in_specs=[VMEM] * len(operands),
        out_specs=VMEM,
        scratch_shapes=[pltpu.VMEM((CH * B, 6 * D), jnp.bfloat16),
                        pltpu.VMEM((CH * B, 6 * D), jnp.bfloat16)],
        compiler_params=pltpu.CompilerParams(vmem_limit_bytes=vmem_limit),
    )(*operands)


# ----------------------------------------------------------------------------
# Deterministic parameter initialization (synthetic, not a checkpoint load)
# ----------------------------------------------------------------------------
def init_params(key, vocab, D, mlp_layers):
    ks = jax.random.split(key, 16)

    def w(k, shape, scale=0.05):
        return (scale * jax.random.normal(k, shape)).astype(jnp.float32)

    p = {}
    p["emb"] = w(ks[0], (vocab, D))
    p["seq_w"] = w(ks[1], (D, D)); p["seq_b"] = jnp.zeros((D,), jnp.float32)
    p["tgt_w0"] = w(ks[2], (D, D)); p["tgt_b0"] = jnp.zeros((D,), jnp.float32)
    p["tgt_w1"] = w(ks[3], (D, D)); p["tgt_b1"] = jnp.zeros((D,), jnp.float32)
    # GRU weights stored already transposed: (D, 3D), gate order [r, z, n]
    p["gru_wih"] = w(ks[4], (D, 3 * D)); p["gru_whh"] = w(ks[5], (D, 3 * D))
    p["gru_bih"] = w(ks[6], (3 * D,), 0.01); p["gru_bhh"] = w(ks[7], (3 * D,), 0.01)
    p["hyp_wih"] = w(ks[8], (D, 3 * D)); p["hyp_whh"] = w(ks[9], (D, 3 * D))
    p["hyp_bih"] = w(ks[10], (3 * D,), 0.01); p["hyp_bhh"] = w(ks[11], (3 * D,), 0.01)
    # hyper-network weight/bias generators, one per MLP layer
    L = mlp_layers
    p["wg"] = w(ks[12], (L, D, D * D))
    p["wgb"] = w(ks[13], (L, 1, D * D), 0.01)
    p["bg"] = w(ks[14], (L, D, D))
    p["bgb"] = w(ks[15], (L, 1, D), 0.01)
    return p


if __name__ == "__main__":
    # B chosen as a multiple of 16 so bf16 operands pack sublanes densely.
    # D kept at 32 for the demo (production should pad D to a multiple of 128).
    B, T, Tt, D, V, MLP_LAYERS = 16, 8, 4, 32, 100, 2
    key = jax.random.PRNGKey(0)
    kp, k1, k2, k3 = jax.random.split(key, 4)
    params = init_params(kp, V, D, MLP_LAYERS)

    # click sequence with zero padding (id 0 == pad)
    lengths = jnp.array([8, 7, 5, 3, 2, 1, 4, 6, 8, 1, 2, 7, 6, 5, 4, 3],
                        dtype=jnp.int32)
    ids = jax.random.randint(k1, (B, T), 1, V, dtype=jnp.int32)
    clk_seq = jnp.where(jnp.arange(T)[None, :] < lengths[:, None], ids, 0)

    trig_lengths = jnp.array([4, 3, 2, 1] * 4, dtype=jnp.int32)
    trig_ids = jax.random.randint(k2, (B, Tt), 1, V, dtype=jnp.int32)
    trigger_seq = jnp.where(jnp.arange(Tt)[None, :] < trig_lengths[:, None], trig_ids, 0)

    target_id = jax.random.randint(k3, (B,), 1, V, dtype=jnp.int32)

    fwd = jax.jit(gru4rec_forward)
    out = jax.block_until_ready(fwd(params, clk_seq, trigger_seq, target_id))
    assert out.shape == (B, 1), out.shape
    assert bool(jnp.all(jnp.isfinite(out)))
    print("KERNEL_OK")
</pallas_src>

<mosaic_0001>
module attributes {stable_mosaic.version = 11 : i64} {
  func.func @_forward_kernel(%arg0: memref<128x32xbf16, #tpu.memory_space<vmem>>, %arg1: memref<16x32xbf16, #tpu.memory_space<vmem>>, %arg2: memref<16x1xi32, #tpu.memory_space<vmem>>, %arg3: memref<32x32xbf16, #tpu.memory_space<vmem>>, %arg4: memref<1x32xf32, #tpu.memory_space<vmem>>, %arg5: memref<32x32xbf16, #tpu.memory_space<vmem>>, %arg6: memref<1x32xf32, #tpu.memory_space<vmem>>, %arg7: memref<32x32xbf16, #tpu.memory_space<vmem>>, %arg8: memref<1x32xf32, #tpu.memory_space<vmem>>, %arg9: memref<32x192xbf16, #tpu.memory_space<vmem>>, %arg10: memref<1x192xf32, #tpu.memory_space<vmem>>, %arg11: memref<64x192xbf16, #tpu.memory_space<vmem>>, %arg12: memref<1x192xf32, #tpu.memory_space<vmem>>, %arg13: memref<2x1024x32xbf16, #tpu.memory_space<vmem>>, %arg14: memref<2x32x32xbf16, #tpu.memory_space<vmem>>, %arg15: memref<32x64xbf16, #tpu.memory_space<vmem>>, %arg16: memref<1x64xf32, #tpu.memory_space<vmem>>, %arg17: memref<16x1xf32, #tpu.memory_space<vmem>>, %arg18: memref<64x192xbf16, #tpu.memory_space<vmem>>, %arg19: memref<64x192xbf16, #tpu.memory_space<vmem>>) attributes {dimension_semantics = [], scalar_prefetch = 0 : i64, scratch_operands = 2 : i64, tpu.core_type = #tpu.core_type<tc>} {
    %c0 = arith.constant 0 : index
    %c0_0 = arith.constant 0 : index
    %0 = vector.load %arg1[%c0, %c0_0] : memref<16x32xbf16, #tpu.memory_space<vmem>>, vector<16x32xbf16>
    %c0_1 = arith.constant 0 : index
    %c0_2 = arith.constant 0 : index
    %1 = vector.load %arg5[%c0_1, %c0_2] : memref<32x32xbf16, #tpu.memory_space<vmem>>, vector<32x32xbf16>
    %cst = arith.constant dense<0.000000e+00> : vector<16x32xf32>
    %2 = tpu.matmul %0, %1, %cst {dimension_numbers = #tpu.dot_dimension_numbers<[1], [0], [0], [1], [0, 0, 1, 1], [], []>} : vector<16x32xbf16>, vector<32x32xbf16>, vector<16x32xf32> -> vector<16x32xf32>
    %c0_3 = arith.constant 0 : index
    %c0_4 = arith.constant 0 : index
    %3 = vector.load %arg6[%c0_3, %c0_4] : memref<1x32xf32, #tpu.memory_space<vmem>>, vector<1x32xf32>
    %4 = vector.broadcast %3 : vector<1x32xf32> to vector<16x32xf32>
    %5 = arith.addf %2, %4 : vector<16x32xf32>
    %6 = math.tanh %5 : vector<16x32xf32>
    %7 = arith.truncf %6 : vector<16x32xf32> to vector<16x32xbf16>
    %c0_5 = arith.constant 0 : index
    %c0_6 = arith.constant 0 : index
    %8 = vector.load %arg7[%c0_5, %c0_6] : memref<32x32xbf16, #tpu.memory_space<vmem>>, vector<32x32xbf16>
    %cst_7 = arith.constant dense<0.000000e+00> : vector<16x32xf32>
    %9 = tpu.matmul %7, %8, %cst_7 {dimension_numbers = #tpu.dot_dimension_numbers<[1], [0], [0], [1], [0, 0, 1, 1], [], []>} : vector<16x32xbf16>, vector<32x32xbf16>, vector<16x32xf32> -> vector<16x32xf32>
    %c0_8 = arith.constant 0 : index
    %c0_9 = arith.constant 0 : index
    %10 = vector.load %arg8[%c0_8, %c0_9] : memref<1x32xf32, #tpu.memory_space<vmem>>, vector<1x32xf32>
    %11 = vector.broadcast %10 : vector<1x32xf32> to vector<16x32xf32>
    %12 = arith.addf %9, %11 : vector<16x32xf32>
    %c0_10 = arith.constant 0 : index
    %c0_11 = arith.constant 0 : index
    %13 = vector.load %arg2[%c0_10, %c0_11] : memref<16x1xi32, #tpu.memory_space<vmem>>, vector<16x1xi32>
    %cst_12 = arith.constant 0.000000e+00 : f32
    %14 = vector.broadcast %cst_12 : f32 to vector<16x64xf32>
    %cst_13 = arith.constant 0.000000e+00 : f32
    %15 = vector.broadcast %cst_13 : f32 to vector<16x64xf32>
    %c0_14 = arith.constant 0 : index
    %c0_15 = arith.constant 0 : index
    %16 = vector.load %arg0[%c0_14, %c0_15] : memref<128x32xbf16, #tpu.memory_space<vmem>>, vector<64x32xbf16>
    %c0_16 = arith.constant 0 : index
    %c0_17 = arith.constant 0 : index
    %17 = vector.load %arg3[%c0_16, %c0_17] : memref<32x32xbf16, #tpu.memory_space<vmem>>, vector<32x32xbf16>
    %cst_18 = arith.constant dense<0.000000e+00> : vector<64x32xf32>
    %18 = tpu.matmul %16, %17, %cst_18 {dimension_numbers = #tpu.dot_dimension_numbers<[1], [0], [0], [1], [0, 0, 1, 1], [], []>} : vector<64x32xbf16>, vector<32x32xbf16>, vector<64x32xf32> -> vector<64x32xf32>
    %c0_19 = arith.constant 0 : index
    %c0_20 = arith.constant 0 : index
    %19 = vector.load %arg4[%c0_19, %c0_20] : memref<1x32xf32, #tpu.memory_space<vmem>>, vector<1x32xf32>
    %20 = vector.broadcast %19 : vector<1x32xf32> to vector<64x32xf32>
    %21 = arith.addf %18, %20 : vector<64x32xf32>
    %22 = math.tanh %21 : vector<64x32xf32>
    %23 = arith.truncf %22 : vector<64x32xf32> to vector<64x32xbf16>
    %c0_21 = arith.constant 0 : index
    %c0_22 = arith.constant 0 : index
    %24 = vector.load %arg9[%c0_21, %c0_22] : memref<32x192xbf16, #tpu.memory_space<vmem>>, vector<32x192xbf16>
    %cst_23 = arith.constant dense<0.000000e+00> : vector<64x192xf32>
    %25 = tpu.matmul %23, %24, %cst_23 {dimension_numbers = #tpu.dot_dimension_numbers<[1], [0], [0], [1], [0, 0, 1, 1], [], []>} : vector<64x32xbf16>, vector<32x192xbf16>, vector<64x192xf32> -> vector<64x192xf32>
    %c0_24 = arith.constant 0 : index
    %c0_25 = arith.constant 0 : index
    %26 = vector.load %arg10[%c0_24, %c0_25] : memref<1x192xf32, #tpu.memory_space<vmem>>, vector<1x192xf32>
    %27 = vector.broadcast %26 : vector<1x192xf32> to vector<64x192xf32>
    %28 = arith.addf %25, %27 : vector<64x192xf32>
    %29 = arith.truncf %28 : vector<64x192xf32> to vector<64x192xbf16>
    %c0_26 = arith.constant 0 : index
    %c0_27 = arith.constant 0 : index
    %30 = vector.load %arg18[%c0_26, %c0_27] : memref<64x192xbf16, #tpu.memory_space<vmem>>, vector<64x192xbf16>
    tpu.vector_store %arg18[%c0_26, %c0_27], %29 {strides = array<i32>} : memref<64x192xbf16, #tpu.memory_space<vmem>>, vector<64x192xbf16>,
    %c64 = arith.constant 64 : index
    %c0_28 = arith.constant 0 : index
    %31 = vector.load %arg0[%c64, %c0_28] : memref<128x32xbf16, #tpu.memory_space<vmem>>, vector<64x32xbf16>
    %c0_29 = arith.constant 0 : index
    %c0_30 = arith.constant 0 : index
    %32 = vector.load %arg3[%c0_29, %c0_30] : memref<32x32xbf16, #tpu.memory_space<vmem>>, vector<32x32xbf16>
    %cst_31 = arith.constant dense<0.000000e+00> : vector<64x32xf32>
    %33 = tpu.matmul %31, %32, %cst_31 {dimension_numbers = #tpu.dot_dimension_numbers<[1], [0], [0], [1], [0, 0, 1, 1], [], []>} : vector<64x32xbf16>, vector<32x32xbf16>, vector<64x32xf32> -> vector<64x32xf32>
    %c0_32 = arith.constant 0 : index
    %c0_33 = arith.constant 0 : index
    %34 = vector.load %arg4[%c0_32, %c0_33] : memref<1x32xf32, #tpu.memory_space<vmem>>, vector<1x32xf32>
    %35 = vector.broadcast %34 : vector<1x32xf32> to vector<64x32xf32>
    %36 = arith.addf %33, %35 : vector<64x32xf32>
    %37 = math.tanh %36 : vector<64x32xf32>
    %38 = arith.truncf %37 : vector<64x32xf32> to vector<64x32xbf16>
    %c0_34 = arith.constant 0 : index
    %c0_35 = arith.constant 0 : index
    %39 = vector.load %arg9[%c0_34, %c0_35] : memref<32x192xbf16, #tpu.memory_space<vmem>>, vector<32x192xbf16>
    %cst_36 = arith.constant dense<0.000000e+00> : vector<64x192xf32>
    %40 = tpu.matmul %38, %39, %cst_36 {dimension_numbers = #tpu.dot_dimension_numbers<[1], [0], [0], [1], [0, 0, 1, 1], [], []>} : vector<64x32xbf16>, vector<32x192xbf16>, vector<64x192xf32> -> vector<64x192xf32>
    %c0_37 = arith.constant 0 : index
    %c0_38 = arith.constant 0 : index
    %41 = vector.load %arg10[%c0_37, %c0_38] : memref<1x192xf32, #tpu.memory_space<vmem>>, vector<1x192xf32>
    %42 = vector.broadcast %41 : vector<1x192xf32> to vector<64x192xf32>
    %43 = arith.addf %40, %42 : vector<64x192xf32>
    %44 = arith.truncf %43 : vector<64x192xf32> to vector<64x192xbf16>
    %c0_39 = arith.constant 0 : index
    %c0_40 = arith.constant 0 : index
    %45 = vector.load %arg19[%c0_39, %c0_40] : memref<64x192xbf16, #tpu.memory_space<vmem>>, vector<64x192xbf16>
    tpu.vector_store %arg19[%c0_39, %c0_40], %44 {strides = array<i32>} : memref<64x192xbf16, #tpu.memory_space<vmem>>, vector<64x192xbf16>,
    %c0_i32 = arith.constant 0 : i32
    %c16_i32 = arith.constant 16 : i32
    %46 = arith.muli %c0_i32, %c16_i32 : i32
    %47 = tpu.assume_multiple %46, 16 : i32
    %48 = arith.index_cast %47 : i32 to index
    %c0_41 = arith.constant 0 : index
    %49 = vector.load %arg18[%48, %c0_41] : memref<64x192xbf16, #tpu.memory_space<vmem>>, vector<16x192xbf16>
    %50 = arith.extf %49 : vector<16x192xbf16> to vector<16x192xf32>
    %51 = arith.truncf %14 : vector<16x64xf32> to vector<16x64xbf16>
    %c0_42 = arith.constant 0 : index
    %c0_43 = arith.constant 0 : index
    %52 = vector.load %arg11[%c0_42, %c0_43] : memref<64x192xbf16, #tpu.memory_space<vmem>>, vector<64x192xbf16>
    %cst_44 = arith.constant dense<0.000000e+00> : vector<16x192xf32>
    %53 = tpu.matmul %51, %52, %cst_44 {dimension_numbers = #tpu.dot_dimension_numbers<[1], [0], [0], [1], [0, 0, 1, 1], [], []>} : vector<16x64xbf16>, vector<64x192xbf16>, vector<16x192xf32> -> vector<16x192xf32>
    %c0_45 = arith.constant 0 : index
    %c0_46 = arith.constant 0 : index
    %54 = vector.load %arg12[%c0_45, %c0_46] : memref<1x192xf32, #tpu.memory_space<vmem>>, vector<1x192xf32>
    %55 = vector.broadcast %54 : vector<1x192xf32> to vector<16x192xf32>
    %56 = arith.addf %53, %55 : vector<16x192xf32>
    %57 = vector.extract_strided_slice %50 {offsets = [0, 0], sizes = [16, 128], strides = [1, 1]} : vector<16x192xf32> to vector<16x128xf32>
    %58 = vector.extract_strided_slice %56 {offsets = [0, 0], sizes = [16, 128], strides = [1, 1]} : vector<16x192xf32> to vector<16x128xf32>
    %59 = arith.addf %57, %58 : vector<16x128xf32>
    %60 = arith.negf %59 : vector<16x128xf32>
    %61 = math.exp %60 : vector<16x128xf32>
    %cst_47 = arith.constant 1.000000e+00 : f32
    %62 = vector.broadcast %cst_47 : f32 to vector<16x128xf32>
    %63 = arith.addf %62, %61 : vector<16x128xf32>
    %64 = arith.divf %62, %63 : vector<16x128xf32>
    %65 = vector.extract_strided_slice %64 {offsets = [0, 0], sizes = [16, 64], strides = [1, 1]} : vector<16x128xf32> to vector<16x64xf32>
    %66 = vector.extract_strided_slice %64 {offsets = [0, 64], sizes = [16, 64], strides = [1, 1]} : vector<16x128xf32> to vector<16x64xf32>
    %67 = vector.extract_strided_slice %50 {offsets = [0, 128], sizes = [16, 64], strides = [1, 1]} : vector<16x192xf32> to vector<16x64xf32>
    %68 = vector.extract_strided_slice %56 {offsets = [0, 128], sizes = [16, 64], strides = [1, 1]} : vector<16x192xf32> to vector<16x64xf32>
    %69 = arith.mulf %65, %68 : vector<16x64xf32>
    %70 = arith.addf %67, %69 : vector<16x64xf32>
    %71 = math.tanh %70 : vector<16x64xf32>
    %cst_48 = arith.constant 1.000000e+00 : f32
    %72 = vector.broadcast %cst_48 : f32 to vector<16x64xf32>
    %73 = arith.subf %72, %66 : vector<16x64xf32>
    %74 = arith.mulf %73, %71 : vector<16x64xf32>
    %75 = arith.mulf %66, %14 : vector<16x64xf32>
    %76 = arith.addf %74, %75 : vector<16x64xf32>
    %c0_i32_49 = arith.constant 0 : i32
    %77 = arith.addi %c0_i32_49, %c0_i32 : i32
    %78 = vector.broadcast %77 : i32 to vector<16x1xi32>
    %79 = arith.cmpi eq, %13, %78 : vector<16x1xi32>
    %80 = vector.shape_cast %79 : vector<16x1xi1> to vector<16x1xi1>
    %81 = vector.broadcast %80 : vector<16x1xi1> to vector<16x64xi1>
    %82 = arith.select %81, %76, %15 : vector<16x64xi1>, vector<16x64xf32>
    %c1_i32 = arith.constant 1 : i32
    %c16_i32_50 = arith.constant 16 : i32
    %83 = arith.muli %c1_i32, %c16_i32_50 : i32
    %84 = tpu.assume_multiple %83, 16 : i32
    %85 = arith.index_cast %84 : i32 to index
    %c0_51 = arith.constant 0 : index
    %86 = vector.load %arg18[%85, %c0_51] : memref<64x192xbf16, #tpu.memory_space<vmem>>, vector<16x192xbf16>
    %87 = arith.extf %86 : vector<16x192xbf16> to vector<16x192xf32>
    %88 = arith.truncf %76 : vector<16x64xf32> to vector<16x64xbf16>
    %c0_52 = arith.constant 0 : index
    %c0_53 = arith.constant 0 : index
    %89 = vector.load %arg11[%c0_52, %c0_53] : memref<64x192xbf16, #tpu.memory_space<vmem>>, vector<64x192xbf16>
    %cst_54 = arith.constant dense<0.000000e+00> : vector<16x192xf32>
    %90 = tpu.matmul %88, %89, %cst_54 {dimension_numbers = #tpu.dot_dimension_numbers<[1], [0], [0], [1], [0, 0, 1, 1], [], []>} : vector<16x64xbf16>, vector<64x192xbf16>, vector<16x192xf32> -> vector<16x192xf32>
    %c0_55 = arith.constant 0 : index
    %c0_56 = arith.constant 0 : index
    %91 = vector.load %arg12[%c0_55, %c0_56] : memref<1x192xf32, #tpu.memory_space<vmem>>, vector<1x192xf32>
    %92 = vector.broadcast %91 : vector<1x192xf32> to vector<16x192xf32>
    %93 = arith.addf %90, %92 : vector<16x192xf32>
    %94 = vector.extract_strided_slice %87 {offsets = [0, 0], sizes = [16, 128], strides = [1, 1]} : vector<16x192xf32> to vector<16x128xf32>
    %95 = vector.extract_strided_slice %93 {offsets = [0, 0], sizes = [16, 128], strides = [1, 1]} : vector<16x192xf32> to vector<16x128xf32>
    %96 = arith.addf %94, %95 : vector<16x128xf32>
    %97 = arith.negf %96 : vector<16x128xf32>
    %98 = math.exp %97 : vector<16x128xf32>
    %cst_57 = arith.constant 1.000000e+00 : f32
    %99 = vector.broadcast %cst_57 : f32 to vector<16x128xf32>
    %100 = arith.addf %99, %98 : vector<16x128xf32>
    %101 = arith.divf %99, %100 : vector<16x128xf32>
    %102 = vector.extract_strided_slice %101 {offsets = [0, 0], sizes = [16, 64], strides = [1, 1]} : vector<16x128xf32> to vector<16x64xf32>
    %103 = vector.extract_strided_slice %101 {offsets = [0, 64], sizes = [16, 64], strides = [1, 1]} : vector<16x128xf32> to vector<16x64xf32>
    %104 = vector.extract_strided_slice %87 {offsets = [0, 128], sizes = [16, 64], strides = [1, 1]} : vector<16x192xf32> to vector<16x64xf32>
    %105 = vector.extract_strided_slice %93 {offsets = [0, 128], sizes = [16, 64], strides = [1, 1]} : vector<16x192xf32> to vector<16x64xf32>
    %106 = arith.mulf %102, %105 : vector<16x64xf32>
    %107 = arith.addf %104, %106 : vector<16x64xf32>
    %108 = math.tanh %107 : vector<16x64xf32>
    %cst_58 = arith.constant 1.000000e+00 : f32
    %109 = vector.broadcast %cst_58 : f32 to vector<16x64xf32>
    %110 = arith.subf %109, %103 : vector<16x64xf32>
    %111 = arith.mulf %110, %108 : vector<16x64xf32>
    %112 = arith.mulf %103, %76 : vector<16x64xf32>
    %113 = arith.addf %111, %112 : vector<16x64xf32>
    %c0_i32_59 = arith.constant 0 : i32
    %114 = arith.addi %c0_i32_59, %c1_i32 : i32
    %115 = vector.broadcast %114 : i32 to vector<16x1xi32>
    %116 = arith.cmpi eq, %13, %115 : vector<16x1xi32>
    %117 = vector.shape_cast %116 : vector<16x1xi1> to vector<16x1xi1>
    %118 = vector.broadcast %117 : vector<16x1xi1> to vector<16x64xi1>
    %119 = arith.select %118, %113, %82 : vector<16x64xi1>, vector<16x64xf32>
    %c2_i32 = arith.constant 2 : i32
    %c16_i32_60 = arith.constant 16 : i32
    %120 = arith.muli %c2_i32, %c16_i32_60 : i32
    %121 = tpu.assume_multiple %120, 16 : i32
    %122 = arith.index_cast %121 : i32 to index
    %c0_61 = arith.constant 0 : index
    %123 = vector.load %arg18[%122, %c0_61] : memref<64x192xbf16, #tpu.memory_space<vmem>>, vector<16x192xbf16>
    %124 = arith.extf %123 : vector<16x192xbf16> to vector<16x192xf32>
    %125 = arith.truncf %113 : vector<16x64xf32> to vector<16x64xbf16>
    %c0_62 = arith.constant 0 : index
    %c0_63 = arith.constant 0 : index
    %126 = vector.load %arg11[%c0_62, %c0_63] : memref<64x192xbf16, #tpu.memory_space<vmem>>, vector<64x192xbf16>
    %cst_64 = arith.constant dense<0.000000e+00> : vector<16x192xf32>
    %127 = tpu.matmul %125, %126, %cst_64 {dimension_numbers = #tpu.dot_dimension_numbers<[1], [0], [0], [1], [0, 0, 1, 1], [], []>} : vector<16x64xbf16>, vector<64x192xbf16>, vector<16x192xf32> -> vector<16x192xf32>
    %c0_65 = arith.constant 0 : index
    %c0_66 = arith.constant 0 : index
    %128 = vector.load %arg12[%c0_65, %c0_66] : memref<1x192xf32, #tpu.memory_space<vmem>>, vector<1x192xf32>
    %129 = vector.broadcast %128 : vector<1x192xf32> to vector<16x192xf32>
    %130 = arith.addf %127, %129 : vector<16x192xf32>
    %131 = vector.extract_strided_slice %124 {offsets = [0, 0], sizes = [16, 128], strides = [1, 1]} : vector<16x192xf32> to vector<16x128xf32>
    %132 = vector.extract_strided_slice %130 {offsets = [0, 0], sizes = [16, 128], strides = [1, 1]} : vector<16x192xf32> to vector<16x128xf32>
    %133 = arith.addf %131, %132 : vector<16x128xf32>
    %134 = arith.negf %133 : vector<16x128xf32>
    %135 = math.exp %134 : vector<16x128xf32>
    %cst_67 = arith.constant 1.000000e+00 : f32
    %136 = vector.broadcast %cst_67 : f32 to vector<16x128xf32>
    %137 = arith.addf %136, %135 : vector<16x128xf32>
    %138 = arith.divf %136, %137 : vector<16x128xf32>
    %139 = vector.extract_strided_slice %138 {offsets = [0, 0], sizes = [16, 64], strides = [1, 1]} : vector<16x128xf32> to vector<16x64xf32>
    %140 = vector.extract_strided_slice %138 {offsets = [0, 64], sizes = [16, 64], strides = [1, 1]} : vector<16x128xf32> to vector<16x64xf32>
    %141 = vector.extract_strided_slice %124 {offsets = [0, 128], sizes = [16, 64], strides = [1, 1]} : vector<16x192xf32> to vector<16x64xf32>
    %142 = vector.extract_strided_slice %130 {offsets = [0, 128], sizes = [16, 64], strides = [1, 1]} : vector<16x192xf32> to vector<16x64xf32>
    %143 = arith.mulf %139, %142 : vector<16x64xf32>
    %144 = arith.addf %141, %143 : vector<16x64xf32>
    %145 = math.tanh %144 : vector<16x64xf32>
    %cst_68 = arith.constant 1.000000e+00 : f32
    %146 = vector.broadcast %cst_68 : f32 to vector<16x64xf32>
    %147 = arith.subf %146, %140 : vector<16x64xf32>
    %148 = arith.mulf %147, %145 : vector<16x64xf32>
    %149 = arith.mulf %140, %113 : vector<16x64xf32>
    %150 = arith.addf %148, %149 : vector<16x64xf32>
    %c0_i32_69 = arith.constant 0 : i32
    %151 = arith.addi %c0_i32_69, %c2_i32 : i32
    %152 = vector.broadcast %151 : i32 to vector<16x1xi32>
    %153 = arith.cmpi eq, %13, %152 : vector<16x1xi32>
    %154 = vector.shape_cast %153 : vector<16x1xi1> to vector<16x1xi1>
    %155 = vector.broadcast %154 : vector<16x1xi1> to vector<16x64xi1>
    %156 = arith.select %155, %150, %119 : vector<16x64xi1>, vector<16x64xf32>
    %c3_i32 = arith.constant 3 : i32
    %c16_i32_70 = arith.constant 16 : i32
    %157 = arith.muli %c3_i32, %c16_i32_70 : i32
    %158 = tpu.assume_multiple %157, 16 : i32
    %159 = arith.index_cast %158 : i32 to index
    %c0_71 = arith.constant 0 : index
    %160 = vector.load %arg18[%159, %c0_71] : memref<64x192xbf16, #tpu.memory_space<vmem>>, vector<16x192xbf16>
    %161 = arith.extf %160 : vector<16x192xbf16> to vector<16x192xf32>
    %162 = arith.truncf %150 : vector<16x64xf32> to vector<16x64xbf16>
    %c0_72 = arith.constant 0 : index
    %c0_73 = arith.constant 0 : index
    %163 = vector.load %arg11[%c0_72, %c0_73] : memref<64x192xbf16, #tpu.memory_space<vmem>>, vector<64x192xbf16>
    %cst_74 = arith.constant dense<0.000000e+00> : vector<16x192xf32>
    %164 = tpu.matmul %162, %163, %cst_74 {dimension_numbers = #tpu.dot_dimension_numbers<[1], [0], [0], [1], [0, 0, 1, 1], [], []>} : vector<16x64xbf16>, vector<64x192xbf16>, vector<16x192xf32> -> vector<16x192xf32>
    %c0_75 = arith.constant 0 : index
    %c0_76 = arith.constant 0 : index
    %165 = vector.load %arg12[%c0_75, %c0_76] : memref<1x192xf32, #tpu.memory_space<vmem>>, vector<1x192xf32>
    %166 = vector.broadcast %165 : vector<1x192xf32> to vector<16x192xf32>
    %167 = arith.addf %164, %166 : vector<16x192xf32>
    %168 = vector.extract_strided_slice %161 {offsets = [0, 0], sizes = [16, 128], strides = [1, 1]} : vector<16x192xf32> to vector<16x128xf32>
    %169 = vector.extract_strided_slice %167 {offsets = [0, 0], sizes = [16, 128], strides = [1, 1]} : vector<16x192xf32> to vector<16x128xf32>
    %170 = arith.addf %168, %169 : vector<16x128xf32>
    %171 = arith.negf %170 : vector<16x128xf32>
    %172 = math.exp %171 : vector<16x128xf32>
    %cst_77 = arith.constant 1.000000e+00 : f32
    %173 = vector.broadcast %cst_77 : f32 to vector<16x128xf32>
    %174 = arith.addf %173, %172 : vector<16x128xf32>
    %175 = arith.divf %173, %174 : vector<16x128xf32>
    %176 = vector.extract_strided_slice %175 {offsets = [0, 0], sizes = [16, 64], strides = [1, 1]} : vector<16x128xf32> to vector<16x64xf32>
    %177 = vector.extract_strided_slice %175 {offsets = [0, 64], sizes = [16, 64], strides = [1, 1]} : vector<16x128xf32> to vector<16x64xf32>
    %178 = vector.extract_strided_slice %161 {offsets = [0, 128], sizes = [16, 64], strides = [1, 1]} : vector<16x192xf32> to vector<16x64xf32>
    %179 = vector.extract_strided_slice %167 {offsets = [0, 128], sizes = [16, 64], strides = [1, 1]} : vector<16x192xf32> to vector<16x64xf32>
    %180 = arith.mulf %176, %179 : vector<16x64xf32>
    %181 = arith.addf %178, %180 : vector<16x64xf32>
    %182 = math.tanh %181 : vector<16x64xf32>
    %cst_78 = arith.constant 1.000000e+00 : f32
    %183 = vector.broadcast %cst_78 : f32 to vector<16x64xf32>
    %184 = arith.subf %183, %177 : vector<16x64xf32>
    %185 = arith.mulf %184, %182 : vector<16x64xf32>
    %186 = arith.mulf %177, %150 : vector<16x64xf32>
    %187 = arith.addf %185, %186 : vector<16x64xf32>
    %c0_i32_79 = arith.constant 0 : i32
    %188 = arith.addi %c0_i32_79, %c3_i32 : i32
    %189 = vector.broadcast %188 : i32 to vector<16x1xi32>
    %190 = arith.cmpi eq, %13, %189 : vector<16x1xi32>
    %191 = vector.shape_cast %190 : vector<16x1xi1> to vector<16x1xi1>
    %192 = vector.broadcast %191 : vector<16x1xi1> to vector<16x64xi1>
    %193 = arith.select %192, %187, %156 : vector<16x64xi1>, vector<16x64xf32>
    %c4_i32 = arith.constant 4 : i32
    %c0_i32_80 = arith.constant 0 : i32
    %c16_i32_81 = arith.constant 16 : i32
    %194 = arith.muli %c0_i32_80, %c16_i32_81 : i32
    %195 = tpu.assume_multiple %194, 16 : i32
    %196 = arith.index_cast %195 : i32 to index
    %c0_82 = arith.constant 0 : index
    %197 = vector.load %arg19[%196, %c0_82] : memref<64x192xbf16, #tpu.memory_space<vmem>>, vector<16x192xbf16>
    %198 = arith.extf %197 : vector<16x192xbf16> to vector<16x192xf32>
    %199 = arith.truncf %187 : vector<16x64xf32> to vector<16x64xbf16>
    %c0_83 = arith.constant 0 : index
    %c0_84 = arith.constant 0 : index
    %200 = vector.load %arg11[%c0_83, %c0_84] : memref<64x192xbf16, #tpu.memory_space<vmem>>, vector<64x192xbf16>
    %cst_85 = arith.constant dense<0.000000e+00> : vector<16x192xf32>
    %201 = tpu.matmul %199, %200, %cst_85 {dimension_numbers = #tpu.dot_dimension_numbers<[1], [0], [0], [1], [0, 0, 1, 1], [], []>} : vector<16x64xbf16>, vector<64x192xbf16>, vector<16x192xf32> -> vector<16x192xf32>
    %c0_86 = arith.constant 0 : index
    %c0_87 = arith.constant 0 : index
    %202 = vector.load %arg12[%c0_86, %c0_87] : memref<1x192xf32, #tpu.memory_space<vmem>>, vector<1x192xf32>
    %203 = vector.broadcast %202 : vector<1x192xf32> to vector<16x192xf32>
    %204 = arith.addf %201, %203 : vector<16x192xf32>
    %205 = vector.extract_strided_slice %198 {offsets = [0, 0], sizes = [16, 128], strides = [1, 1]} : vector<16x192xf32> to vector<16x128xf32>
    %206 = vector.extract_strided_slice %204 {offsets = [0, 0], sizes = [16, 128], strides = [1, 1]} : vector<16x192xf32> to vector<16x128xf32>
    %207 = arith.addf %205, %206 : vector<16x128xf32>
    %208 = arith.negf %207 : vector<16x128xf32>
    %209 = math.exp %208 : vector<16x128xf32>
    %cst_88 = arith.constant 1.000000e+00 : f32
    %210 = vector.broadcast %cst_88 : f32 to vector<16x128xf32>
    %211 = arith.addf %210, %209 : vector<16x128xf32>
    %212 = arith.divf %210, %211 : vector<16x128xf32>
    %213 = vector.extract_strided_slice %212 {offsets = [0, 0], sizes = [16, 64], strides = [1, 1]} : vector<16x128xf32> to vector<16x64xf32>
    %214 = vector.extract_strided_slice %212 {offsets = [0, 64], sizes = [16, 64], strides = [1, 1]} : vector<16x128xf32> to vector<16x64xf32>
    %215 = vector.extract_strided_slice %198 {offsets = [0, 128], sizes = [16, 64], strides = [1, 1]} : vector<16x192xf32> to vector<16x64xf32>
    %216 = vector.extract_strided_slice %204 {offsets = [0, 128], sizes = [16, 64], strides = [1, 1]} : vector<16x192xf32> to vector<16x64xf32>
    %217 = arith.mulf %213, %216 : vector<16x64xf32>
    %218 = arith.addf %215, %217 : vector<16x64xf32>
    %219 = math.tanh %218 : vector<16x64xf32>
    %cst_89 = arith.constant 1.000000e+00 : f32
    %220 = vector.broadcast %cst_89 : f32 to vector<16x64xf32>
    %221 = arith.subf %220, %214 : vector<16x64xf32>
    %222 = arith.mulf %221, %219 : vector<16x64xf32>
    %223 = arith.mulf %214, %187 : vector<16x64xf32>
    %224 = arith.addf %222, %223 : vector<16x64xf32>
    %c4_i32_90 = arith.constant 4 : i32
    %225 = arith.addi %c4_i32_90, %c0_i32_80 : i32
    %226 = vector.broadcast %225 : i32 to vector<16x1xi32>
    %227 = arith.cmpi eq, %13, %226 : vector<16x1xi32>
    %228 = vector.shape_cast %227 : vector<16x1xi1> to vector<16x1xi1>
    %229 = vector.broadcast %228 : vector<16x1xi1> to vector<16x64xi1>
    %230 = arith.select %229, %224, %193 : vector<16x64xi1>, vector<16x64xf32>
    %c1_i32_91 = arith.constant 1 : i32
    %c16_i32_92 = arith.constant 16 : i32
    %231 = arith.muli %c1_i32_91, %c16_i32_92 : i32
    %232 = tpu.assume_multiple %231, 16 : i32
    %233 = arith.index_cast %232 : i32 to index
    %c0_93 = arith.constant 0 : index
    %234 = vector.load %arg19[%233, %c0_93] : memref<64x192xbf16, #tpu.memory_space<vmem>>, vector<16x192xbf16>
    %235 = arith.extf %234 : vector<16x192xbf16> to vector<16x192xf32>
    %236 = arith.truncf %224 : vector<16x64xf32> to vector<16x64xbf16>
    %c0_94 = arith.constant 0 : index
    %c0_95 = arith.constant 0 : index
    %237 = vector.load %arg11[%c0_94, %c0_95] : memref<64x192xbf16, #tpu.memory_space<vmem>>, vector<64x192xbf16>
    %cst_96 = arith.constant dense<0.000000e+00> : vector<16x192xf32>
    %238 = tpu.matmul %236, %237, %cst_96 {dimension_numbers = #tpu.dot_dimension_numbers<[1], [0], [0], [1], [0, 0, 1, 1], [], []>} : vector<16x64xbf16>, vector<64x192xbf16>, vector<16x192xf32> -> vector<16x192xf32>
    %c0_97 = arith.constant 0 : index
    %c0_98 = arith.constant 0 : index
    %239 = vector.load %arg12[%c0_97, %c0_98] : memref<1x192xf32, #tpu.memory_space<vmem>>, vector<1x192xf32>
    %240 = vector.broadcast %239 : vector<1x192xf32> to vector<16x192xf32>
    %241 = arith.addf %238, %240 : vector<16x192xf32>
    %242 = vector.extract_strided_slice %235 {offsets = [0, 0], sizes = [16, 128], strides = [1, 1]} : vector<16x192xf32> to vector<16x128xf32>
    %243 = vector.extract_strided_slice %241 {offsets = [0, 0], sizes = [16, 128], strides = [1, 1]} : vector<16x192xf32> to vector<16x128xf32>
    %244 = arith.addf %242, %243 : vector<16x128xf32>
    %245 = arith.negf %244 : vector<16x128xf32>
    %246 = math.exp %245 : vector<16x128xf32>
    %cst_99 = arith.constant 1.000000e+00 : f32
    %247 = vector.broadcast %cst_99 : f32 to vector<16x128xf32>
    %248 = arith.addf %247, %246 : vector<16x128xf32>
    %249 = arith.divf %247, %248 : vector<16x128xf32>
    %250 = vector.extract_strided_slice %249 {offsets = [0, 0], sizes = [16, 64], strides = [1, 1]} : vector<16x128xf32> to vector<16x64xf32>
    %251 = vector.extract_strided_slice %249 {offsets = [0, 64], sizes = [16, 64], strides = [1, 1]} : vector<16x128xf32> to vector<16x64xf32>
    %252 = vector.extract_strided_slice %235 {offsets = [0, 128], sizes = [16, 64], strides = [1, 1]} : vector<16x192xf32> to vector<16x64xf32>
    %253 = vector.extract_strided_slice %241 {offsets = [0, 128], sizes = [16, 64], strides = [1, 1]} : vector<16x192xf32> to vector<16x64xf32>
    %254 = arith.mulf %250, %253 : vector<16x64xf32>
    %255 = arith.addf %252, %254 : vector<16x64xf32>
    %256 = math.tanh %255 : vector<16x64xf32>
    %cst_100 = arith.constant 1.000000e+00 : f32
    %257 = vector.broadcast %cst_100 : f32 to vector<16x64xf32>
    %258 = arith.subf %257, %251 : vector<16x64xf32>
    %259 = arith.mulf %258, %256 : vector<16x64xf32>
    %260 = arith.mulf %251, %224 : vector<16x64xf32>
    %261 = arith.addf %259, %260 : vector<16x64xf32>
    %c4_i32_101 = arith.constant 4 : i32
    %262 = arith.addi %c4_i32_101, %c1_i32_91 : i32
    %263 = vector.broadcast %262 : i32 to vector<16x1xi32>
    %264 = arith.cmpi eq, %13, %263 : vector<16x1xi32>
    %265 = vector.shape_cast %264 : vector<16x1xi1> to vector<16x1xi1>
    %266 = vector.broadcast %265 : vector<16x1xi1> to vector<16x64xi1>
    %267 = arith.select %266, %261, %230 : vector<16x64xi1>, vector<16x64xf32>
    %c2_i32_102 = arith.constant 2 : i32
    %c16_i32_103 = arith.constant 16 : i32
    %268 = arith.muli %c2_i32_102, %c16_i32_103 : i32
    %269 = tpu.assume_multiple %268, 16 : i32
    %270 = arith.index_cast %269 : i32 to index
    %c0_104 = arith.constant 0 : index
    %271 = vector.load %arg19[%270, %c0_104] : memref<64x192xbf16, #tpu.memory_space<vmem>>, vector<16x192xbf16>
    %272 = arith.extf %271 : vector<16x192xbf16> to vector<16x192xf32>
    %273 = arith.truncf %261 : vector<16x64xf32> to vector<16x64xbf16>
    %c0_105 = arith.constant 0 : index
    %c0_106 = arith.constant 0 : index
    %274 = vector.load %arg11[%c0_105, %c0_106] : memref<64x192xbf16, #tpu.memory_space<vmem>>, vector<64x192xbf16>
    %cst_107 = arith.constant dense<0.000000e+00> : vector<16x192xf32>
    %275 = tpu.matmul %273, %274, %cst_107 {dimension_numbers = #tpu.dot_dimension_numbers<[1], [0], [0], [1], [0, 0, 1, 1], [], []>} : vector<16x64xbf16>, vector<64x192xbf16>, vector<16x192xf32> -> vector<16x192xf32>
    %c0_108 = arith.constant 0 : index
    %c0_109 = arith.constant 0 : index
    %276 = vector.load %arg12[%c0_108, %c0_109] : memref<1x192xf32, #tpu.memory_space<vmem>>, vector<1x192xf32>
    %277 = vector.broadcast %276 : vector<1x192xf32> to vector<16x192xf32>
    %278 = arith.addf %275, %277 : vector<16x192xf32>
    %279 = vector.extract_strided_slice %272 {offsets = [0, 0], sizes = [16, 128], strides = [1, 1]} : vector<16x192xf32> to vector<16x128xf32>
    %280 = vector.extract_strided_slice %278 {offsets = [0, 0], sizes = [16, 128], strides = [1, 1]} : vector<16x192xf32> to vector<16x128xf32>
    %281 = arith.addf %279, %280 : vector<16x128xf32>
    %282 = arith.negf %281 : vector<16x128xf32>
    %283 = math.exp %282 : vector<16x128xf32>
    %cst_110 = arith.constant 1.000000e+00 : f32
    %284 = vector.broadcast %cst_110 : f32 to vector<16x128xf32>
    %285 = arith.addf %284, %283 : vector<16x128xf32>
    %286 = arith.divf %284, %285 : vector<16x128xf32>
    %287 = vector.extract_strided_slice %286 {offsets = [0, 0], sizes = [16, 64], strides = [1, 1]} : vector<16x128xf32> to vector<16x64xf32>
    %288 = vector.extract_strided_slice %286 {offsets = [0, 64], sizes = [16, 64], strides = [1, 1]} : vector<16x128xf32> to vector<16x64xf32>
    %289 = vector.extract_strided_slice %272 {offsets = [0, 128], sizes = [16, 64], strides = [1, 1]} : vector<16x192xf32> to vector<16x64xf32>
    %290 = vector.extract_strided_slice %278 {offsets = [0, 128], sizes = [16, 64], strides = [1, 1]} : vector<16x192xf32> to vector<16x64xf32>
    %291 = arith.mulf %287, %290 : vector<16x64xf32>
    %292 = arith.addf %289, %291 : vector<16x64xf32>
    %293 = math.tanh %292 : vector<16x64xf32>
    %cst_111 = arith.constant 1.000000e+00 : f32
    %294 = vector.broadcast %cst_111 : f32 to vector<16x64xf32>
    %295 = arith.subf %294, %288 : vector<16x64xf32>
    %296 = arith.mulf %295, %293 : vector<16x64xf32>
    %297 = arith.mulf %288, %261 : vector<16x64xf32>
    %298 = arith.addf %296, %297 : vector<16x64xf32>
    %c4_i32_112 = arith.constant 4 : i32
    %299 = arith.addi %c4_i32_112, %c2_i32_102 : i32
    %300 = vector.broadcast %299 : i32 to vector<16x1xi32>
    %301 = arith.cmpi eq, %13, %300 : vector<16x1xi32>
    %302 = vector.shape_cast %301 : vector<16x1xi1> to vector<16x1xi1>
    %303 = vector.broadcast %302 : vector<16x1xi1> to vector<16x64xi1>
    %304 = arith.select %303, %298, %267 : vector<16x64xi1>, vector<16x64xf32>
    %c3_i32_113 = arith.constant 3 : i32
    %c16_i32_114 = arith.constant 16 : i32
    %305 = arith.muli %c3_i32_113, %c16_i32_114 : i32
    %306 = tpu.assume_multiple %305, 16 : i32
    %307 = arith.index_cast %306 : i32 to index
    %c0_115 = arith.constant 0 : index
    %308 = vector.load %arg19[%307, %c0_115] : memref<64x192xbf16, #tpu.memory_space<vmem>>, vector<16x192xbf16>
    %309 = arith.extf %308 : vector<16x192xbf16> to vector<16x192xf32>
    %310 = arith.truncf %298 : vector<16x64xf32> to vector<16x64xbf16>
    %c0_116 = arith.constant 0 : index
    %c0_117 = arith.constant 0 : index
    %311 = vector.load %arg11[%c0_116, %c0_117] : memref<64x192xbf16, #tpu.memory_space<vmem>>, vector<64x192xbf16>
    %cst_118 = arith.constant dense<0.000000e+00> : vector<16x192xf32>
    %312 = tpu.matmul %310, %311, %cst_118 {dimension_numbers = #tpu.dot_dimension_numbers<[1], [0], [0], [1], [0, 0, 1, 1], [], []>} : vector<16x64xbf16>, vector<64x192xbf16>, vector<16x192xf32> -> vector<16x192xf32>
    %c0_119 = arith.constant 0 : index
    %c0_120 = arith.constant 0 : index
    %313 = vector.load %arg12[%c0_119, %c0_120] : memref<1x192xf32, #tpu.memory_space<vmem>>, vector<1x192xf32>
    %314 = vector.broadcast %313 : vector<1x192xf32> to vector<16x192xf32>
    %315 = arith.addf %312, %314 : vector<16x192xf32>
    %316 = vector.extract_strided_slice %309 {offsets = [0, 0], sizes = [16, 128], strides = [1, 1]} : vector<16x192xf32> to vector<16x128xf32>
    %317 = vector.extract_strided_slice %315 {offsets = [0, 0], sizes = [16, 128], strides = [1, 1]} : vector<16x192xf32> to vector<16x128xf32>
    %318 = arith.addf %316, %317 : vector<16x128xf32>
    %319 = arith.negf %318 : vector<16x128xf32>
    %320 = math.exp %319 : vector<16x128xf32>
    %cst_121 = arith.constant 1.000000e+00 : f32
    %321 = vector.broadcast %cst_121 : f32 to vector<16x128xf32>
    %322 = arith.addf %321, %320 : vector<16x128xf32>
    %323 = arith.divf %321, %322 : vector<16x128xf32>
    %324 = vector.extract_strided_slice %323 {offsets = [0, 0], sizes = [16, 64], strides = [1, 1]} : vector<16x128xf32> to vector<16x64xf32>
    %325 = vector.extract_strided_slice %323 {offsets = [0, 64], sizes = [16, 64], strides = [1, 1]} : vector<16x128xf32> to vector<16x64xf32>
    %326 = vector.extract_strided_slice %309 {offsets = [0, 128], sizes = [16, 64], strides = [1, 1]} : vector<16x192xf32> to vector<16x64xf32>
    %327 = vector.extract_strided_slice %315 {offsets = [0, 128], sizes = [16, 64], strides = [1, 1]} : vector<16x192xf32> to vector<16x64xf32>
    %328 = arith.mulf %324, %327 : vector<16x64xf32>
    %329 = arith.addf %326, %328 : vector<16x64xf32>
    %330 = math.tanh %329 : vector<16x64xf32>
    %cst_122 = arith.constant 1.000000e+00 : f32
    %331 = vector.broadcast %cst_122 : f32 to vector<16x64xf32>
    %332 = arith.subf %331, %325 : vector<16x64xf32>
    %333 = arith.mulf %332, %330 : vector<16x64xf32>
    %334 = arith.mulf %325, %298 : vector<16x64xf32>
    %335 = arith.addf %333, %334 : vector<16x64xf32>
    %c4_i32_123 = arith.constant 4 : i32
    %336 = arith.addi %c4_i32_123, %c3_i32_113 : i32
    %337 = vector.broadcast %336 : i32 to vector<16x1xi32>
    %338 = arith.cmpi eq, %13, %337 : vector<16x1xi32>
    %339 = vector.shape_cast %338 : vector<16x1xi1> to vector<16x1xi1>
    %340 = vector.broadcast %339 : vector<16x1xi1> to vector<16x64xi1>
    %341 = arith.select %340, %335, %304 : vector<16x64xi1>, vector<16x64xf32>
    %c4_i32_124 = arith.constant 4 : i32
    %342 = vector.extract_strided_slice %341 {offsets = [0, 0], sizes = [16, 32], strides = [1, 1]} : vector<16x64xf32> to vector<16x32xf32>
    %343 = vector.extract_strided_slice %341 {offsets = [0, 32], sizes = [16, 32], strides = [1, 1]} : vector<16x64xf32> to vector<16x32xf32>
    %344 = arith.truncf %343 : vector<16x32xf32> to vector<16x32xbf16>
    %c0_125 = arith.constant 0 : index
    %c0_126 = arith.constant 0 : index
    %345 = vector.load %arg15[%c0_125, %c0_126] : memref<32x64xbf16, #tpu.memory_space<vmem>>, vector<32x64xbf16>
    %cst_127 = arith.constant dense<0.000000e+00> : vector<16x64xf32>
    %346 = tpu.matmul %344, %345, %cst_127 {dimension_numbers = #tpu.dot_dimension_numbers<[1], [0], [0], [1], [0, 0, 1, 1], [], []>} : vector<16x32xbf16>, vector<32x64xbf16>, vector<16x64xf32> -> vector<16x64xf32>
    %c0_128 = arith.constant 0 : index
    %c0_129 = arith.constant 0 : index
    %347 = vector.load %arg16[%c0_128, %c0_129] : memref<1x64xf32, #tpu.memory_space<vmem>>, vector<1x64xf32>
    %348 = vector.broadcast %347 : vector<1x64xf32> to vector<16x64xf32>
    %349 = arith.addf %346, %348 : vector<16x64xf32>
    %350 = vector.shape_cast %343 : vector<16x32xf32> to vector<16x32x1xf32>
    %351 = vector.shape_cast %342 : vector<16x32xf32> to vector<16x1x32xf32>
    %352 = vector.broadcast %350 : vector<16x32x1xf32> to vector<16x32x32xf32>
    %353 = vector.broadcast %351 : vector<16x1x32xf32> to vector<16x32x32xf32>
    %354 = arith.mulf %352, %353 : vector<16x32x32xf32>
    %355 = vector.shape_cast %354 : vector<16x32x32xf32> to vector<16x1024xf32>
    %356 = arith.truncf %355 : vector<16x1024xf32> to vector<16x1024xbf16>
    %c0_130 = arith.constant 0 : index
    %c0_131 = arith.constant 0 : index
    %c0_132 = arith.constant 0 : index
    %357 = vector.load %arg13[%c0_130, %c0_131, %c0_132] : memref<2x1024x32xbf16, #tpu.memory_space<vmem>>, vector<1x1024x32xbf16>
    %358 = vector.shape_cast %357 : vector<1x1024x32xbf16> to vector<1024x32xbf16>
    %cst_133 = arith.constant dense<0.000000e+00> : vector<16x32xf32>
    %359 = tpu.matmul %356, %358, %cst_133 {dimension_numbers = #tpu.dot_dimension_numbers<[1], [0], [0], [1], [0, 0, 1, 1], [], []>} : vector<16x1024xbf16>, vector<1024x32xbf16>, vector<16x32xf32> -> vector<16x32xf32>
    %360 = arith.truncf %342 : vector<16x32xf32> to vector<16x32xbf16>
    %c0_134 = arith.constant 0 : index
    %c0_135 = arith.constant 0 : index
    %c0_136 = arith.constant 0 : index
    %361 = vector.load %arg14[%c0_134, %c0_135, %c0_136] : memref<2x32x32xbf16, #tpu.memory_space<vmem>>, vector<1x32x32xbf16>
    %362 = vector.shape_cast %361 : vector<1x32x32xbf16> to vector<32x32xbf16>
    %cst_137 = arith.constant dense<0.000000e+00> : vector<16x32xf32>
    %363 = tpu.matmul %360, %362, %cst_137 {dimension_numbers = #tpu.dot_dimension_numbers<[1], [0], [0], [1], [0, 0, 1, 1], [], []>} : vector<16x32xbf16>, vector<32x32xbf16>, vector<16x32xf32> -> vector<16x32xf32>
    %364 = arith.addf %359, %363 : vector<16x32xf32>
    %365 = vector.extract_strided_slice %349 {offsets = [0, 0], sizes = [16, 32], strides = [1, 1]} : vector<16x64xf32> to vector<16x32xf32>
    %366 = arith.addf %364, %365 : vector<16x32xf32>
    %367 = math.tanh %366 : vector<16x32xf32>
    %368 = vector.shape_cast %343 : vector<16x32xf32> to vector<16x32x1xf32>
    %369 = vector.shape_cast %367 : vector<16x32xf32> to vector<16x1x32xf32>
    %370 = vector.broadcast %368 : vector<16x32x1xf32> to vector<16x32x32xf32>
    %371 = vector.broadcast %369 : vector<16x1x32xf32> to vector<16x32x32xf32>
    %372 = arith.mulf %370, %371 : vector<16x32x32xf32>
    %373 = vector.shape_cast %372 : vector<16x32x32xf32> to vector<16x1024xf32>
    %374 = arith.truncf %373 : vector<16x1024xf32> to vector<16x1024xbf16>
    %c1 = arith.constant 1 : index
    %c0_138 = arith.constant 0 : index
    %c0_139 = arith.constant 0 : index
    %375 = vector.load %arg13[%c1, %c0_138, %c0_139] : memref<2x1024x32xbf16, #tpu.memory_space<vmem>>, vector<1x1024x32xbf16>
    %376 = vector.shape_cast %375 : vector<1x1024x32xbf16> to vector<1024x32xbf16>
    %cst_140 = arith.constant dense<0.000000e+00> : vector<16x32xf32>
    %377 = tpu.matmul %374, %376, %cst_140 {dimension_numbers = #tpu.dot_dimension_numbers<[1], [0], [0], [1], [0, 0, 1, 1], [], []>} : vector<16x1024xbf16>, vector<1024x32xbf16>, vector<16x32xf32> -> vector<16x32xf32>
    %378 = arith.truncf %367 : vector<16x32xf32> to vector<16x32xbf16>
    %c1_141 = arith.constant 1 : index
    %c0_142 = arith.constant 0 : index
    %c0_143 = arith.constant 0 : index
    %379 = vector.load %arg14[%c1_141, %c0_142, %c0_143] : memref<2x32x32xbf16, #tpu.memory_space<vmem>>, vector<1x32x32xbf16>
    %380 = vector.shape_cast %379 : vector<1x32x32xbf16> to vector<32x32xbf16>
    %cst_144 = arith.constant dense<0.000000e+00> : vector<16x32xf32>
    %381 = tpu.matmul %378, %380, %cst_144 {dimension_numbers = #tpu.dot_dimension_numbers<[1], [0], [0], [1], [0, 0, 1, 1], [], []>} : vector<16x32xbf16>, vector<32x32xbf16>, vector<16x32xf32> -> vector<16x32xf32>
    %382 = arith.addf %377, %381 : vector<16x32xf32>
    %383 = vector.extract_strided_slice %349 {offsets = [0, 32], sizes = [16, 32], strides = [1, 1]} : vector<16x64xf32> to vector<16x32xf32>
    %384 = arith.addf %382, %383 : vector<16x32xf32>
    %385 = arith.mulf %384, %12 : vector<16x32xf32>
    %cst_145 = arith.constant dense<0.000000e+00> : vector<16xf32>
    %386 = vector.multi_reduction <add>, %385, %cst_145 [1] : vector<16x32xf32> to vector<16xf32>
    %387 = vector.shape_cast %386 : vector<16xf32> to vector<16x1xf32>
    %c0_146 = arith.constant 0 : index
    %c0_147 = arith.constant 0 : index
    %388 = vector.load %arg17[%c0_146, %c0_147] : memref<16x1xf32, #tpu.memory_space<vmem>>, vector<16x1xf32>
    tpu.vector_store %arg17[%c0_146, %c0_147], %387 {strides = array<i32>} : memref<16x1xf32, #tpu.memory_space<vmem>>, vector<16x1xf32>,
    return
  }
}

</mosaic_0001>

<llo_original>
// kernel: gru4rec_forward.1
$region0: #{gru4rec_forward.1}
  #allocation0 [shape = 'u32[]', space=smem, size = 0x4, offset = 0x4, fixed_abs, tag = 'smem constant byte address 0x4 - core index']
  #allocation1 [shape = 'u32[72,128]{1,0:T(1,128)}', space=vmem, size = 0x9000, scoped, tag = 'internal scratch']
  #allocation2 [shape = 'bf16[64,192]{1,0:T(8,128)(2,1)}', space=vmem, size = 0x8000, scoped, tag = 'scratch operand']
  #allocation3 [shape = 'bf16[64,192]{1,0:T(8,128)(2,1)}', space=vmem, size = 0x8000, scoped, tag = 'scratch operand']
  %s0 = inlined_call_operand.vmem [shape: bf16[128,32], index: 0, kind: input, shape index: {}]
  %s1 = inlined_call_operand.vmem [shape: bf16[16,32], index: 1, kind: input, shape index: {}]
  %s2 = inlined_call_operand.vmem [shape: s32[16,1], index: 2, kind: input, shape index: {}]
  %s3 = inlined_call_operand.vmem [shape: bf16[32,32], index: 3, kind: input, shape index: {}]
  %s4 = inlined_call_operand.vmem [shape: f32[1,32], index: 4, kind: input, shape index: {}]
  %s5 = inlined_call_operand.vmem [shape: bf16[32,32], index: 5, kind: input, shape index: {}]
  %s6 = inlined_call_operand.vmem [shape: f32[1,32], index: 6, kind: input, shape index: {}]
  %s7 = inlined_call_operand.vmem [shape: bf16[32,32], index: 7, kind: input, shape index: {}]
  %s8 = inlined_call_operand.vmem [shape: f32[1,32], index: 8, kind: input, shape index: {}]
  %s9 = inlined_call_operand.vmem [shape: bf16[32,192], index: 9, kind: input, shape index: {}]
  %s10 = inlined_call_operand.vmem [shape: f32[1,192], index: 10, kind: input, shape index: {}]
  %s11 = inlined_call_operand.vmem [shape: bf16[64,192], index: 11, kind: input, shape index: {}]
  %s12 = inlined_call_operand.vmem [shape: f32[1,192], index: 12, kind: input, shape index: {}]
  %s13 = inlined_call_operand.vmem [shape: bf16[2,1024,32], index: 13, kind: input, shape index: {}]
  %s14 = inlined_call_operand.vmem [shape: bf16[2,32,32], index: 14, kind: input, shape index: {}]
  %s15 = inlined_call_operand.vmem [shape: bf16[32,64], index: 15, kind: input, shape index: {}]
  %s16 = inlined_call_operand.vmem [shape: f32[1,64], index: 16, kind: input, shape index: {}]
  %s17 = inlined_call_operand.vmem [shape: f32[16,1], index: 17, kind: output, shape index: {}]
  %s18 = sld [smem:[#allocation0]]
  $region78: #{gru4rec_forward.1} parent=0
    _
  %s20 = ssub.s32 1, %s18
  %s21 = scalar_select 0, %s20, %s18
  // Predicated region
  $region2: #{gru4rec_forward.1} parent=0 // pred_check
    _
  $region3: #{gru4rec_forward.1} parent=0 // pred_check_branch
    %23 = sbr.rel (0) target = $region5
  $region4: #{gru4rec_forward.1} parent=0 // pred_region
    _
  $region5: #{gru4rec_forward.1} parent=0 // pred_fallthru
    _
  // Predicated region
  $region6: #{gru4rec_forward.1} parent=0 // pred_check
    _
  $region7: #{gru4rec_forward.1} parent=0 // pred_check_branch
    %25 = sbr.rel (0) target = $region9
  $region8: #{gru4rec_forward.1} parent=0 // pred_region
    _
  $region9: #{gru4rec_forward.1} parent=0 // pred_fallthru
    _
  // Predicated region
  $region10: #{gru4rec_forward.1} parent=0 // pred_check
    _
  $region11: #{gru4rec_forward.1} parent=0 // pred_check_branch
    %27 = sbr.rel (0) target = $region13
  $region12: #{gru4rec_forward.1} parent=0 // pred_region
    _
  $region13: #{gru4rec_forward.1} parent=0 // pred_fallthru
    _
  // Predicated region
  $region14: #{gru4rec_forward.1} parent=0 // pred_check
    _
  $region15: #{gru4rec_forward.1} parent=0 // pred_check_branch
    %29 = sbr.rel (0) target = $region17
  $region16: #{gru4rec_forward.1} parent=0 // pred_region
    _
  $region17: #{gru4rec_forward.1} parent=0 // pred_fallthru
    _
  // Predicated region
  $region18: #{gru4rec_forward.1} parent=0 // pred_check
    _
  $region19: #{gru4rec_forward.1} parent=0 // pred_check_branch
    %31 = sbr.rel (0) target = $region21
  $region20: #{gru4rec_forward.1} parent=0 // pred_region
    _
  $region21: #{gru4rec_forward.1} parent=0 // pred_fallthru
    _
  // Predicated region
  $region22: #{gru4rec_forward.1} parent=0 // pred_check
    _
  $region23: #{gru4rec_forward.1} parent=0 // pred_check_branch
    %33 = sbr.rel (0) target = $region25
  $region24: #{gru4rec_forward.1} parent=0 // pred_region
    _
  $region25: #{gru4rec_forward.1} parent=0 // pred_fallthru
    _
  // Predicated region
  $region26: #{gru4rec_forward.1} parent=0 // pred_check
    _
  $region27: #{gru4rec_forward.1} parent=0 // pred_check_branch
    %35 = sbr.rel (0) target = $region29
  $region28: #{gru4rec_forward.1} parent=0 // pred_region
    _
  $region29: #{gru4rec_forward.1} parent=0 // pred_fallthru
    _
  // Predicated region
  $region30: #{gru4rec_forward.1} parent=0 // pred_check
    _
  $region31: #{gru4rec_forward.1} parent=0 // pred_check_branch
    %37 = sbr.rel (0) target = $region33
  $region32: #{gru4rec_forward.1} parent=0 // pred_region
    _
  $region33: #{gru4rec_forward.1} parent=0 // pred_fallthru
    _
  // Predicated region
  $region34: #{gru4rec_forward.1} parent=0 // pred_check
    _
  $region35: #{gru4rec_forward.1} parent=0 // pred_check_branch
    %39 = sbr.rel (0) target = $region37
  $region36: #{gru4rec_forward.1} parent=0 // pred_region
    _
  $region37: #{gru4rec_forward.1} parent=0 // pred_fallthru
    _
  // Predicated region
  $region38: #{gru4rec_forward.1} parent=0 // pred_check
    _
  $region39: #{gru4rec_forward.1} parent=0 // pred_check_branch
    %41 = sbr.rel (0) target = $region41
  $region40: #{gru4rec_forward.1} parent=0 // pred_region
    _
  $region41: #{gru4rec_forward.1} parent=0 // pred_fallthru
    _
  // Predicated region
  $region42: #{gru4rec_forward.1} parent=0 // pred_check
    _
  $region43: #{gru4rec_forward.1} parent=0 // pred_check_branch
    %43 = sbr.rel (0) target = $region45
  $region44: #{gru4rec_forward.1} parent=0 // pred_region
    _
  $region45: #{gru4rec_forward.1} parent=0 // pred_fallthru
    _
  // Predicated region
  $region46: #{gru4rec_forward.1} parent=0 // pred_check
    _
  $region47: #{gru4rec_forward.1} parent=0 // pred_check_branch
    %45 = sbr.rel (0) target = $region49
  $region48: #{gru4rec_forward.1} parent=0 // pred_region
    _
  $region49: #{gru4rec_forward.1} parent=0 // pred_fallthru
    _
  // Predicated region
  $region50: #{gru4rec_forward.1} parent=0 // pred_check
    _
  $region51: #{gru4rec_forward.1} parent=0 // pred_check_branch
    %47 = sbr.rel (0) target = $region53
  $region52: #{gru4rec_forward.1} parent=0 // pred_region
    _
  $region53: #{gru4rec_forward.1} parent=0 // pred_fallthru
    _
  // Predicated region
  $region54: #{gru4rec_forward.1} parent=0 // pred_check
    _
  $region55: #{gru4rec_forward.1} parent=0 // pred_check_branch
    %49 = sbr.rel (0) target = $region57
  $region56: #{gru4rec_forward.1} parent=0 // pred_region
    _
  $region57: #{gru4rec_forward.1} parent=0 // pred_fallthru
    _
  // Predicated region
  $region58: #{gru4rec_forward.1} parent=0 // pred_check
    _
  $region59: #{gru4rec_forward.1} parent=0 // pred_check_branch
    %51 = sbr.rel (0) target = $region61
  $region60: #{gru4rec_forward.1} parent=0 // pred_region
    _
  $region61: #{gru4rec_forward.1} parent=0 // pred_fallthru
    _
  // Predicated region
  $region62: #{gru4rec_forward.1} parent=0 // pred_check
    _
  $region63: #{gru4rec_forward.1} parent=0 // pred_check_branch
    %53 = sbr.rel (0) target = $region65
  $region64: #{gru4rec_forward.1} parent=0 // pred_region
    _
  $region65: #{gru4rec_forward.1} parent=0 // pred_fallthru
    _
  // Predicated region
  $region66: #{gru4rec_forward.1} parent=0 // pred_check
    _
  $region67: #{gru4rec_forward.1} parent=0 // pred_check_branch
    %55 = sbr.rel (0) target = $region69
  $region68: #{gru4rec_forward.1} parent=0 // pred_region
    _
  $region69: #{gru4rec_forward.1} parent=0 // pred_fallthru
    _
  %v57 = vld [vmem:[%s1] sm:$0xf]
  %v58 = vld [vmem:[%s1 + $0x4] sm:$0xf]
  %v59 = vld [vmem:[%s5] sm:$0xf]
  %v60 = vld [vmem:[%s5 + $0x4] sm:$0xf]
  %v61 = vld [vmem:[%s5 + $0x8] sm:$0xf]
  %v62 = vld [vmem:[%s5 + $0xc] sm:$0xf]
  %v63 = vld [vmem:[%s6] sm:$0x1]
  %v65 = vperm.slane %v63, 0
  %v69 = vunpack.c.l.b16 %v57
  %v70 = vunpack.c.l.b16 %v58
  %v71 = vpack.c.b16 %v70, %v69
  %v76 = vunpack.c.l.b16 %v59
  %v77 = vunpack.c.l.b16 %v60
  %v78 = vunpack.c.l.b16 %v61
  %v79 = vunpack.c.l.b16 %v62
  %v80 = vpack.c.b16 %v77, %v76
  %v81 = vpack.c.b16 %v79, %v78
  %vm84 = vcmask 261120
  %v86 = vsel %vm84, %v71, 0
  %88 = vmatpush.bf16.msra.mxu0 0
  %89 = vmatpush.bf16.msra.mxu0 0
  %90 = vmatpush.bf16.msra.mxu0 0
  %91 = vmatpush.bf16.msra.mxu0 0
  %92 = vmatpush.bf16.msra.mxu0 0
  %93 = vmatpush.bf16.msra.mxu0 0
  %94 = vmatpush.bf16.msra.mxu0 %v81
  %95 = vmatpush.bf16.msra.mxu0 %v80
  %96 = vmatmul.bf16.gmra.mxu0 %v86
  %v97 = vpop.f32.mrf.mxu0
  %v98 = vadd.f32 %v65, %v97
  %v99 = vpop.f32.mrf.mxu0
  %v100 = vadd.f32 %v65, %v99
  %101 = vdwg.mxu0
  %v102 = vtanh.pop %v98
  %v103 = vtanh.pop %v100
  %v104 = vpack.c.bf16 %v103, %v102
  %v105 = vld [vmem:[%s7] sm:$0xf]
  %v106 = vld [vmem:[%s7 + $0x4] sm:$0xf]
  %v107 = vld [vmem:[%s7 + $0x8] sm:$0xf]
  %v108 = vld [vmem:[%s7 + $0xc] sm:$0xf]
  %v109 = vld [vmem:[%s8] sm:$0x1]
  %v111 = vperm.slane %v109, 0
  %v117 = vunpack.c.l.b16 %v105
  %v118 = vunpack.c.l.b16 %v106
  %v119 = vunpack.c.l.b16 %v107
  %v120 = vunpack.c.l.b16 %v108
  %v121 = vpack.c.b16 %v118, %v117
  %v122 = vpack.c.b16 %v120, %v119
  %v126 = vsel %vm84, %v104, 0
  %128 = vmatpush.bf16.msra.mxu0 0
  %129 = vmatpush.bf16.msra.mxu0 0
  %130 = vmatpush.bf16.msra.mxu0 0
  %131 = vmatpush.bf16.msra.mxu0 0
  %132 = vmatpush.bf16.msra.mxu0 0
  %133 = vmatpush.bf16.msra.mxu0 0
  %134 = vmatpush.bf16.msra.mxu0 %v122
  %135 = vmatpush.bf16.msra.mxu0 %v121
  %136 = vmatmul.bf16.gmra.mxu0 %v126
  %v137 = vpop.f32.mrf.mxu0
  %v138 = vadd.f32 %v111, %v137
  %v139 = vpop.f32.mrf.mxu0
  %v140 = vadd.f32 %v111, %v139
  %141 = vdwg.mxu0
  %v142 = vld [vmem:[%s2] sm:$0xff]
  %v143 = vld [vmem:[%s2 + $0x8] sm:$0xff]
  %v144 = vld [vmem:[%s0] sm:$0xf]
  %v145 = vld [vmem:[%s0 + $0x4] sm:$0xf]
  %v146 = vld [vmem:[%s0 + $0x8] sm:$0xf]
  %v147 = vld [vmem:[%s0 + $0xc] sm:$0xf]
  %v148 = vld [vmem:[%s0 + $0x10] sm:$0xf]
  %v149 = vld [vmem:[%s0 + $0x14] sm:$0xf]
  %v150 = vld [vmem:[%s0 + $0x18] sm:$0xf]
  %v151 = vld [vmem:[%s0 + $0x1c] sm:$0xf]
  %v152 = vld [vmem:[%s3] sm:$0xf]
  %v153 = vld [vmem:[%s3 + $0x4] sm:$0xf]
  %v154 = vld [vmem:[%s3 + $0x8] sm:$0xf]
  %v155 = vld [vmem:[%s3 + $0xc] sm:$0xf]
  %v156 = vld [vmem:[%s4] sm:$0x1]
  %v158 = vperm.slane %v156, 0
  %v168 = vunpack.c.l.b16 %v144
  %v169 = vunpack.c.l.b16 %v145
  %v170 = vunpack.c.l.b16 %v146
  %v171 = vunpack.c.l.b16 %v147
  %v172 = vunpack.c.l.b16 %v148
  %v173 = vunpack.c.l.b16 %v149
  %v174 = vunpack.c.l.b16 %v150
  %v175 = vunpack.c.l.b16 %v151
  %v176 = vpack.c.b16 %v169, %v168
  %v177 = vpack.c.b16 %v171, %v170
  %v178 = vpack.c.b16 %v173, %v172
  %v179 = vpack.c.b16 %v175, %v174
  %v184 = vunpack.c.l.b16 %v152
  %v185 = vunpack.c.l.b16 %v153
  %v186 = vunpack.c.l.b16 %v154
  %v187 = vunpack.c.l.b16 %v155
  %v188 = vpack.c.b16 %v185, %v184
  %v189 = vpack.c.b16 %v187, %v186
  %v193 = vsel %vm84, %v176, 0
  %v196 = vsel %vm84, %v177, 0
  %v199 = vsel %vm84, %v178, 0
  %v202 = vsel %vm84, %v179, 0
  %204 = vmatpush.bf16.msra.mxu0 0
  %205 = vmatpush.bf16.msra.mxu0 0
  %206 = vmatpush.bf16.msra.mxu0 0
  %207 = vmatpush.bf16.msra.mxu0 0
  %208 = vmatpush.bf16.msra.mxu0 0
  %209 = vmatpush.bf16.msra.mxu0 0
  %210 = vmatpush.bf16.msra.mxu0 %v189
  %211 = vmatpush.bf16.msra.mxu0 %v188
  %212 = vmatmul.bf16.gmra.mxu0 %v193
  %v213 = vpop.f32.mrf.mxu0
  %v214 = vadd.f32 %v158, %v213
  %v215 = vpop.f32.mrf.mxu0
  %v216 = vadd.f32 %v158, %v215
  %217 = vmatmul.bf16.gmra.mxu0 %v196
  %v218 = vpop.f32.mrf.mxu0
  %v219 = vadd.f32 %v158, %v218
  %v220 = vpop.f32.mrf.mxu0
  %v221 = vadd.f32 %v158, %v220
  %222 = vmatmul.bf16.gmra.mxu0 %v199
  %v223 = vpop.f32.mrf.mxu0
  %v224 = vadd.f32 %v158, %v223
  %v225 = vpop.f32.mrf.mxu0
  %v226 = vadd.f32 %v158, %v225
  %227 = vmatmul.bf16.gmra.mxu0 %v202
  %v228 = vpop.f32.mrf.mxu0
  %v229 = vadd.f32 %v158, %v228
  %v230 = vpop.f32.mrf.mxu0
  %v231 = vadd.f32 %v158, %v230
  %232 = vdwg.mxu0
  %v233 = vtanh.pop %v214
  %v234 = vtanh.pop %v216
  %v235 = vtanh.pop %v219
  %v236 = vtanh.pop %v221
  %v237 = vtanh.pop %v224
  %v238 = vtanh.pop %v226
  %v239 = vtanh.pop %v229
  %v240 = vtanh.pop %v231
  %v241 = vpack.c.bf16 %v234, %v233
  %v242 = vpack.c.bf16 %v236, %v235
  %v243 = vpack.c.bf16 %v238, %v237
  %v244 = vpack.c.bf16 %v240, %v239
  %v245 = vld [vmem:[%s9] sm:$0xff]
  %v246 = vld [vmem:[%s9 + $0x8] sm:$0xff]
  %v247 = vld [vmem:[%s9 + $0x10] sm:$0xff]
  %v248 = vld [vmem:[%s9 + $0x18] sm:$0xff]
  %v249 = vld [vmem:[%s10] sm:$0x3]
  %v251 = vperm.slane %v249, 0
  %v252 = vperm.slane %v249, 1
  %v259 = vunpack.c.l.b16 %v245
  %v260 = vunpack.c.h.b16 %v245
  %v261 = vunpack.c.l.b16 %v246
  %v262 = vunpack.c.h.b16 %v246
  %v263 = vunpack.c.l.b16 %v247
  %v264 = vunpack.c.h.b16 %v247
  %v265 = vunpack.c.l.b16 %v248
  %v266 = vunpack.c.h.b16 %v248
  %v267 = vpack.c.b16 %v261, %v259
  %v268 = vpack.c.b16 %v262, %v260
  %v269 = vpack.c.b16 %v265, %v263
  %v270 = vpack.c.b16 %v266, %v264
  %v276 = vsel %vm84, %v241, 0
  %v279 = vsel %vm84, %v242, 0
  %v282 = vsel %vm84, %v243, 0
  %v285 = vsel %vm84, %v244, 0
  %287 = vmatpush.bf16.msra.mxu0 0
  %288 = vmatpush.bf16.msra.mxu0 0
  %289 = vmatpush.bf16.msra.mxu0 0
  %290 = vmatpush.bf16.msra.mxu0 0
  %291 = vmatpush.bf16.msra.mxu0 0
  %292 = vmatpush.bf16.msra.mxu0 0
  %293 = vmatpush.bf16.msra.mxu0 %v269
  %294 = vmatpush.bf16.msra.mxu0 %v267
  %295 = vmatmul.bf16.gmra.mxu0 %v276
  %v296 = vpop.f32.mrf.mxu0
  %v297 = vadd.f32 %v251, %v296
  %v298 = vpop.f32.mrf.mxu0
  %v299 = vadd.f32 %v251, %v298
  %300 = vmatmul.bf16.gmra.mxu0 %v279
  %v301 = vpop.f32.mrf.mxu0
  %v302 = vadd.f32 %v251, %v301
  %v303 = vpop.f32.mrf.mxu0
  %v304 = vadd.f32 %v251, %v303
  %305 = vmatmul.bf16.gmra.mxu0 %v282
  %v306 = vpop.f32.mrf.mxu0
  %v307 = vadd.f32 %v251, %v306
  %v308 = vpop.f32.mrf.mxu0
  %v309 = vadd.f32 %v251, %v308
  %310 = vmatmul.bf16.gmra.mxu0 %v285
  %v311 = vpop.f32.mrf.mxu0
  %v312 = vadd.f32 %v251, %v311
  %v313 = vpop.f32.mrf.mxu0
  %v314 = vadd.f32 %v251, %v313
  %315 = vdwg.mxu0
  %316 = vmatpush.bf16.msra.mxu0 0
  %317 = vmatpush.bf16.msra.mxu0 0
  %318 = vmatpush.bf16.msra.mxu0 0
  %319 = vmatpush.bf16.msra.mxu0 0
  %320 = vmatpush.bf16.msra.mxu0 0
  %321 = vmatpush.bf16.msra.mxu0 0
  %322 = vmatpush.bf16.msra.mxu0 %v270
  %323 = vmatpush.bf16.msra.mxu0 %v268
  %324 = vmatmul.bf16.gmra.mxu0 %v276
  %v325 = vpop.f32.mrf.mxu0
  %v326 = vadd.f32 %v252, %v325
  %v327 = vpop.f32.mrf.mxu0
  %v328 = vadd.f32 %v252, %v327
  %329 = vmatmul.bf16.gmra.mxu0 %v279
  %v330 = vpop.f32.mrf.mxu0
  %v331 = vadd.f32 %v252, %v330
  %v332 = vpop.f32.mrf.mxu0
  %v333 = vadd.f32 %v252, %v332
  %334 = vmatmul.bf16.gmra.mxu0 %v282
  %v335 = vpop.f32.mrf.mxu0
  %v336 = vadd.f32 %v252, %v335
  %v337 = vpop.f32.mrf.mxu0
  %v338 = vadd.f32 %v252, %v337
  %339 = vmatmul.bf16.gmra.mxu0 %v285
  %v340 = vpop.f32.mrf.mxu0
  %v341 = vadd.f32 %v252, %v340
  %v342 = vpop.f32.mrf.mxu0
  %v343 = vadd.f32 %v252, %v342
  %344 = vdwg.mxu0
  %v345 = vpack.c.bf16 %v326, %v297
  %v346 = vpack.c.bf16 %v328, %v299
  %v347 = vpack.c.bf16 %v331, %v302
  %v348 = vpack.c.bf16 %v333, %v304
  %v349 = vpack.c.bf16 %v336, %v307
  %v350 = vpack.c.bf16 %v338, %v309
  %v351 = vpack.c.bf16 %v341, %v312
  %v352 = vpack.c.bf16 %v343, %v314
  %vm353 = vcmask 1043456
  %vm354 = vcmask 523268
  %vm355 = vmor %vm354, %vm353
  %356 = vst.msk [vmem:[#allocation2] sm:$0xff] %vm355, %v345
  %357 = vst.msk [vmem:[#allocation2 + $0x8] sm:$0xff] %vm355, %v346
  %358 = vst.msk [vmem:[#allocation2 + $0x10] sm:$0xff] %vm355, %v347
  %359 = vst.msk [vmem:[#allocation2 + $0x18] sm:$0xff] %vm355, %v348
  %360 = vst.msk [vmem:[#allocation2 + $0x20] sm:$0xff] %vm355, %v349
  %361 = vst.msk [vmem:[#allocation2 + $0x28] sm:$0xff] %vm355, %v350
  %362 = vst.msk [vmem:[#allocation2 + $0x30] sm:$0xff] %vm355, %v351
  %363 = vst.msk [vmem:[#allocation2 + $0x38] sm:$0xff] %vm355, %v352
  %v364 = vld [vmem:[%s0 + $0x20] sm:$0xf]
  %v365 = vld [vmem:[%s0 + $0x24] sm:$0xf]
  %v366 = vld [vmem:[%s0 + $0x28] sm:$0xf]
  %v367 = vld [vmem:[%s0 + $0x2c] sm:$0xf]
  %v368 = vld [vmem:[%s0 + $0x30] sm:$0xf]
  %v369 = vld [vmem:[%s0 + $0x34] sm:$0xf]
  %v370 = vld [vmem:[%s0 + $0x38] sm:$0xf]
  %v371 = vld [vmem:[%s0 + $0x3c] sm:$0xf]
  %v372 = vld [vmem:[%s3] sm:$0xf]
  %v373 = vld [vmem:[%s3 + $0x4] sm:$0xf]
  %v374 = vld [vmem:[%s3 + $0x8] sm:$0xf]
  %v375 = vld [vmem:[%s3 + $0xc] sm:$0xf]
  %v376 = vld [vmem:[%s4] sm:$0x1]
  %v378 = vperm.slane %v376, 0
  %v388 = vunpack.c.l.b16 %v364
  %v389 = vunpack.c.l.b16 %v365
  %v390 = vunpack.c.l.b16 %v366
  %v391 = vunpack.c.l.b16 %v367
  %v392 = vunpack.c.l.b16 %v368
  %v393 = vunpack.c.l.b16 %v369
  %v394 = vunpack.c.l.b16 %v370
  %v395 = vunpack.c.l.b16 %v371
  %v396 = vpack.c.b16 %v389, %v388
  %v397 = vpack.c.b16 %v391, %v390
  %v398 = vpack.c.b16 %v393, %v392
  %v399 = vpack.c.b16 %v395, %v394
  %v404 = vunpack.c.l.b16 %v372
  %v405 = vunpack.c.l.b16 %v373
  %v406 = vunpack.c.l.b16 %v374
  %v407 = vunpack.c.l.b16 %v375
  %v408 = vpack.c.b16 %v405, %v404
  %v409 = vpack.c.b16 %v407, %v406
  %v413 = vsel %vm84, %v396, 0
  %v416 = vsel %vm84, %v397, 0
  %v419 = vsel %vm84, %v398, 0
  %v422 = vsel %vm84, %v399, 0
  %424 = vmatpush.bf16.msra.mxu0 0
  %425 = vmatpush.bf16.msra.mxu0 0
  %426 = vmatpush.bf16.msra.mxu0 0
  %427 = vmatpush.bf16.msra.mxu0 0
  %428 = vmatpush.bf16.msra.mxu0 0
  %429 = vmatpush.bf16.msra.mxu0 0
  %430 = vmatpush.bf16.msra.mxu0 %v409
  %431 = vmatpush.bf16.msra.mxu0 %v408
  %432 = vmatmul.bf16.gmra.mxu0 %v413
  %v433 = vpop.f32.mrf.mxu0
  %v434 = vadd.f32 %v378, %v433
  %v435 = vpop.f32.mrf.mxu0
  %v436 = vadd.f32 %v378, %v435
  %437 = vmatmul.bf16.gmra.mxu0 %v416
  %v438 = vpop.f32.mrf.mxu0
  %v439 = vadd.f32 %v378, %v438
  %v440 = vpop.f32.mrf.mxu0
  %v441 = vadd.f32 %v378, %v440
  %442 = vmatmul.bf16.gmra.mxu0 %v419
  %v443 = vpop.f32.mrf.mxu0
  %v444 = vadd.f32 %v378, %v443
  %v445 = vpop.f32.mrf.mxu0
  %v446 = vadd.f32 %v378, %v445
  %447 = vmatmul.bf16.gmra.mxu0 %v422
  %v448 = vpop.f32.mrf.mxu0
  %v449 = vadd.f32 %v378, %v448
  %v450 = vpop.f32.mrf.mxu0
  %v451 = vadd.f32 %v378, %v450
  %452 = vdwg.mxu0
  %v453 = vtanh.pop %v434
  %v454 = vtanh.pop %v436
  %v455 = vtanh.pop %v439
  %v456 = vtanh.pop %v441
  %v457 = vtanh.pop %v444
  %v458 = vtanh.pop %v446
  %v459 = vtanh.pop %v449
  %v460 = vtanh.pop %v451
  %v461 = vpack.c.bf16 %v454, %v453
  %v462 = vpack.c.bf16 %v456, %v455
  %v463 = vpack.c.bf16 %v458, %v457
  %v464 = vpack.c.bf16 %v460, %v459
  %v465 = vld [vmem:[%s9] sm:$0xff]
  %v466 = vld [vmem:[%s9 + $0x8] sm:$0xff]
  %v467 = vld [vmem:[%s9 + $0x10] sm:$0xff]
  %v468 = vld [vmem:[%s9 + $0x18] sm:$0xff]
  %v469 = vld [vmem:[%s10] sm:$0x3]
  %v471 = vperm.slane %v469, 0
  %v472 = vperm.slane %v469, 1
  %v479 = vunpack.c.l.b16 %v465
  %v480 = vunpack.c.h.b16 %v465
  %v481 = vunpack.c.l.b16 %v466
  %v482 = vunpack.c.h.b16 %v466
  %v483 = vunpack.c.l.b16 %v467
  %v484 = vunpack.c.h.b16 %v467
  %v485 = vunpack.c.l.b16 %v468
  %v486 = vunpack.c.h.b16 %v468
  %v487 = vpack.c.b16 %v481, %v479
  %v488 = vpack.c.b16 %v482, %v480
  %v489 = vpack.c.b16 %v485, %v483
  %v490 = vpack.c.b16 %v486, %v484
  %v496 = vsel %vm84, %v461, 0
  %v499 = vsel %vm84, %v462, 0
  %v502 = vsel %vm84, %v463, 0
  %v505 = vsel %vm84, %v464, 0
  %507 = vmatpush.bf16.msra.mxu0 0
  %508 = vmatpush.bf16.msra.mxu0 0
  %509 = vmatpush.bf16.msra.mxu0 0
  %510 = vmatpush.bf16.msra.mxu0 0
  %511 = vmatpush.bf16.msra.mxu0 0
  %512 = vmatpush.bf16.msra.mxu0 0
  %513 = vmatpush.bf16.msra.mxu0 %v489
  %514 = vmatpush.bf16.msra.mxu0 %v487
  %515 = vmatmul.bf16.gmra.mxu0 %v496
  %v516 = vpop.f32.mrf.mxu0
  %v517 = vadd.f32 %v471, %v516
  %v518 = vpop.f32.mrf.mxu0
  %v519 = vadd.f32 %v471, %v518
  %520 = vmatmul.bf16.gmra.mxu0 %v499
  %v521 = vpop.f32.mrf.mxu0
  %v522 = vadd.f32 %v471, %v521
  %v523 = vpop.f32.mrf.mxu0
  %v524 = vadd.f32 %v471, %v523
  %525 = vmatmul.bf16.gmra.mxu0 %v502
  %v526 = vpop.f32.mrf.mxu0
  %v527 = vadd.f32 %v471, %v526
  %v528 = vpop.f32.mrf.mxu0
  %v529 = vadd.f32 %v471, %v528
  %530 = vmatmul.bf16.gmra.mxu0 %v505
  %v531 = vpop.f32.mrf.mxu0
  %v532 = vadd.f32 %v471, %v531
  %v533 = vpop.f32.mrf.mxu0
  %v534 = vadd.f32 %v471, %v533
  %535 = vdwg.mxu0
  %536 = vmatpush.bf16.msra.mxu0 0
  %537 = vmatpush.bf16.msra.mxu0 0
  %538 = vmatpush.bf16.msra.mxu0 0
  %539 = vmatpush.bf16.msra.mxu0 0
  %540 = vmatpush.bf16.msra.mxu0 0
  %541 = vmatpush.bf16.msra.mxu0 0
  %542 = vmatpush.bf16.msra.mxu0 %v490
  %543 = vmatpush.bf16.msra.mxu0 %v488
  %544 = vmatmul.bf16.gmra.mxu0 %v496
  %v545 = vpop.f32.mrf.mxu0
  %v546 = vadd.f32 %v472, %v545
  %v547 = vpop.f32.mrf.mxu0
  %v548 = vadd.f32 %v472, %v547
  %549 = vmatmul.bf16.gmra.mxu0 %v499
  %v550 = vpop.f32.mrf.mxu0
  %v551 = vadd.f32 %v472, %v550
  %v552 = vpop.f32.mrf.mxu0
  %v553 = vadd.f32 %v472, %v552
  %554 = vmatmul.bf16.gmra.mxu0 %v502
  %v555 = vpop.f32.mrf.mxu0
  %v556 = vadd.f32 %v472, %v555
  %v557 = vpop.f32.mrf.mxu0
  %v558 = vadd.f32 %v472, %v557
  %559 = vmatmul.bf16.gmra.mxu0 %v505
  %v560 = vpop.f32.mrf.mxu0
  %v561 = vadd.f32 %v472, %v560
  %v562 = vpop.f32.mrf.mxu0
  %v563 = vadd.f32 %v472, %v562
  %564 = vdwg.mxu0
  %v565 = vpack.c.bf16 %v546, %v517
  %v566 = vpack.c.bf16 %v548, %v519
  %v567 = vpack.c.bf16 %v551, %v522
  %v568 = vpack.c.bf16 %v553, %v524
  %v569 = vpack.c.bf16 %v556, %v527
  %v570 = vpack.c.bf16 %v558, %v529
  %v571 = vpack.c.bf16 %v561, %v532
  %v572 = vpack.c.bf16 %v563, %v534
  %573 = vst.msk [vmem:[#allocation3] sm:$0xff] %vm355, %v565
  %574 = vst.msk [vmem:[#allocation3 + $0x8] sm:$0xff] %vm355, %v566
  %575 = vst.msk [vmem:[#allocation3 + $0x10] sm:$0xff] %vm355, %v567
  %576 = vst.msk [vmem:[#allocation3 + $0x18] sm:$0xff] %vm355, %v568
  %577 = vst.msk [vmem:[#allocation3 + $0x20] sm:$0xff] %vm355, %v569
  %578 = vst.msk [vmem:[#allocation3 + $0x28] sm:$0xff] %vm355, %v570
  %579 = vst.msk [vmem:[#allocation3 + $0x30] sm:$0xff] %vm355, %v571
  %580 = vst.msk [vmem:[#allocation3 + $0x38] sm:$0xff] %vm355, %v572
  %s581 = smul.u32 0, 2
  %s582 = smul.addr %s581, 4
  %s583 = scalar_lea.vmem [#allocation2], %s582
  %v584 = vld [vmem:[%s583] sm:$0xff]
  %v585 = vld [vmem:[%s583 + $0x8] sm:$0xff]
  %v586 = vunpack.c.l.bf16 %v584
  %v587 = vunpack.c.h.bf16 %v584
  %v588 = vunpack.c.l.bf16 %v585
  %v589 = vunpack.c.h.bf16 %v585
  %v590 = vld [vmem:[%s11] sm:$0xff]
  %v591 = vld [vmem:[%s11 + $0x8] sm:$0xff]
  %v592 = vld [vmem:[%s11 + $0x10] sm:$0xff]
  %v593 = vld [vmem:[%s11 + $0x18] sm:$0xff]
  %v594 = vld [vmem:[%s11 + $0x20] sm:$0xff]
  %v595 = vld [vmem:[%s11 + $0x28] sm:$0xff]
  %v596 = vld [vmem:[%s11 + $0x30] sm:$0xff]
  %v597 = vld [vmem:[%s11 + $0x38] sm:$0xff]
  %v598 = vld [vmem:[%s12] sm:$0x3]
  %v600 = vperm.slane %v598, 0
  %v601 = vperm.slane %v598, 1
  %v612 = vunpack.c.l.b16 %v590
  %v613 = vunpack.c.h.b16 %v590
  %v614 = vunpack.c.l.b16 %v591
  %v615 = vunpack.c.h.b16 %v591
  %v616 = vunpack.c.l.b16 %v592
  %v617 = vunpack.c.h.b16 %v592
  %v618 = vunpack.c.l.b16 %v593
  %v619 = vunpack.c.h.b16 %v593
  %v620 = vunpack.c.l.b16 %v594
  %v621 = vunpack.c.h.b16 %v594
  %v622 = vunpack.c.l.b16 %v595
  %v623 = vunpack.c.h.b16 %v595
  %v624 = vunpack.c.l.b16 %v596
  %v625 = vunpack.c.h.b16 %v596
  %v626 = vunpack.c.l.b16 %v597
  %v627 = vunpack.c.h.b16 %v597
  %v628 = vpack.c.b16 %v614, %v612
  %v629 = vpack.c.b16 %v615, %v613
  %v630 = vpack.c.b16 %v618, %v616
  %v631 = vpack.c.b16 %v619, %v617
  %v632 = vpack.c.b16 %v622, %v620
  %v633 = vpack.c.b16 %v623, %v621
  %v634 = vpack.c.b16 %v626, %v624
  %v635 = vpack.c.b16 %v627, %v625
  %vm644 = vcmask 523264
  %v646 = vsel %vm644, 0, 0
  %648 = vmatpush.bf16.msra.mxu0 0
  %649 = vmatpush.bf16.msra.mxu0 0
  %650 = vmatpush.bf16.msra.mxu0 0
  %651 = vmatpush.bf16.msra.mxu0 0
  %652 = vmatpush.bf16.msra.mxu0 %v634
  %653 = vmatpush.bf16.msra.mxu0 %v632
  %654 = vmatpush.bf16.msra.mxu0 %v630
  %655 = vmatpush.bf16.msra.mxu0 %v628
  %656 = vmatmul.bf16.gmra.mxu0 %v646
  %v657 = vpop.f32.mrf.mxu0
  %v658 = vadd.f32 %v600, %v657
  %v659 = vpop.f32.mrf.mxu0
  %v660 = vadd.f32 %v600, %v659
  %661 = vdwg.mxu0
  %662 = vmatpush.bf16.msra.mxu0 0
  %663 = vmatpush.bf16.msra.mxu0 0
  %664 = vmatpush.bf16.msra.mxu0 0
  %665 = vmatpush.bf16.msra.mxu0 0
  %666 = vmatpush.bf16.msra.mxu0 %v635
  %667 = vmatpush.bf16.msra.mxu0 %v633
  %668 = vmatpush.bf16.msra.mxu0 %v631
  %669 = vmatpush.bf16.msra.mxu0 %v629
  %670 = vmatmul.bf16.gmra.mxu0 %v646
  %v671 = vpop.f32.mrf.mxu0
  %v672 = vadd.f32 %v601, %v671
  %v673 = vpop.f32.mrf.mxu0
  %v674 = vadd.f32 %v601, %v673
  %675 = vdwg.mxu0
  %v676 = vadd.f32 %v586, %v658
  %v677 = vadd.f32 %v588, %v660
  %v678 = vxor.u32 %v676, 2147483648
  %v679 = vxor.u32 %v677, 2147483648
  %v680 = vmul.f32 %v678, 1.442695
  %v681 = vpow.pop %v680
  %v682 = vmul.f32 %v679, 1.442695
  %v683 = vpow.pop %v682
  %v684 = vadd.f32 %v681, 1.0
  %v685 = vadd.f32 %v683, 1.0
  %v686 = vrcp.pop %v684
  %v687 = vmul.f32 %v684, %v686
  %v688 = vsub.f32 1.0, %v687
  %v689 = vmul.f32 %v686, %v688
  %v690 = vadd.f32 %v686, %v689
  %vm691 = vweird.f32 %v684
  %vm692 = vweird.f32 %v686
  %vm693 = vmor %vm691, %vm692
  %v694 = vsel %vm693, %v686, %v690
  %v695 = vand.u32 2147483647, %v684
  %vm696 = vcmp.eq.f32.partialorder %v695, 8.507059e+37
  %v697 = vand.u32 %v684, 2147483648
  %v698 = vor.u32 1.1754944e-38, %v697
  %v699 = vsel %vm696, %v698, %v694
  %v700 = vmul.f32 1.0, %v699
  %v701 = vrcp.pop %v685
  %v702 = vmul.f32 %v685, %v701
  %v703 = vsub.f32 1.0, %v702
  %v704 = vmul.f32 %v701, %v703
  %v705 = vadd.f32 %v701, %v704
  %vm706 = vweird.f32 %v685
  %vm707 = vweird.f32 %v701
  %vm708 = vmor %vm706, %vm707
  %v709 = vsel %vm708, %v701, %v705
  %v710 = vand.u32 2147483647, %v685
  %vm711 = vcmp.eq.f32.partialorder %v710, 8.507059e+37
  %v712 = vand.u32 %v685, 2147483648
  %v713 = vor.u32 1.1754944e-38, %v712
  %v714 = vsel %vm711, %v713, %v709
  %v715 = vmul.f32 1.0, %v714
  %v716 = vmul.f32 %v700, %v672
  %v717 = vmul.f32 %v715, %v674
  %v718 = vadd.f32 %v587, %v716
  %v719 = vadd.f32 %v589, %v717
  %v720 = vtanh.pop %v718
  %v721 = vtanh.pop %v719
  %v722 = vsub.f32 1.0, %v700
  %v723 = vsub.f32 1.0, %v715
  %726 = vrot.lane.b32.xlu0 %v720, 64
  %v727 = vpop.permute.xlu0 %726
  %728 = vrot.lane.b32.xlu0 %v721, 64
  %v729 = vpop.permute.xlu0 %728
  %v732 = vmul.f32 %v722, %v727
  %v733 = vmul.f32 %v723, %v729
  %v734 = vmul.f32 %v700, 0.0
  %v735 = vmul.f32 %v715, 0.0
  %v736 = vadd.f32 %v732, %v734
  %v737 = vadd.f32 %v733, %v735
  %vm738 = vcmp.eq.s32.totalorder %v142, 0
  %vm739 = vcmp.eq.s32.totalorder %v143, 0
  %v740 = vsel %vm738, 1, 0
  %v741 = vsel %vm739, 1, 0
  %742 = vset.pattern.permute.xlu0 0
  %743 = vperm.xlu0 %742, %v740
  %v744 = vpop.permute.xlu0 %743
  %745 = vset.pattern.permute.xlu0 0
  %746 = vperm.xlu0 %745, %v741
  %v747 = vpop.permute.xlu0 %746
  %vm748 = vcmp.eq.s32.totalorder %v744, 1
  %vm749 = vcmp.eq.s32.totalorder %v747, 1
  %v750 = vsel %vm748, %v736, 0.0
  %v751 = vsel %vm749, %v737, 0.0
  %s752 = smul.u32 2, 2
  %s753 = smul.addr %s752, 4
  %s754 = scalar_lea.vmem [#allocation2], %s753
  %v755 = vld [vmem:[%s754] sm:$0xff]
  %v756 = vld [vmem:[%s754 + $0x8] sm:$0xff]
  %v757 = vunpack.c.l.bf16 %v755
  %v758 = vunpack.c.h.bf16 %v755
  %v759 = vunpack.c.l.bf16 %v756
  %v760 = vunpack.c.h.bf16 %v756
  %v761 = vpack.c.bf16 %v737, %v736
  %763 = vrot.lane.b32.xlu0 %v761, 64
  %v764 = vpop.permute.xlu0 %763
  %v766 = vsel %vm644, %v764, 0
  %768 = vmatpush.bf16.msra.mxu0 0
  %769 = vmatpush.bf16.msra.mxu0 0
  %770 = vmatpush.bf16.msra.mxu0 0
  %771 = vmatpush.bf16.msra.mxu0 0
  %772 = vmatpush.bf16.msra.mxu0 %v634
  %773 = vmatpush.bf16.msra.mxu0 %v632
  %774 = vmatpush.bf16.msra.mxu0 %v630
  %775 = vmatpush.bf16.msra.mxu0 %v628
  %776 = vmatmul.bf16.gmra.mxu0 %v766
  %v777 = vpop.f32.mrf.mxu0
  %v778 = vadd.f32 %v600, %v777
  %v779 = vpop.f32.mrf.mxu0
  %v780 = vadd.f32 %v600, %v779
  %781 = vdwg.mxu0
  %782 = vmatpush.bf16.msra.mxu0 0
  %783 = vmatpush.bf16.msra.mxu0 0
  %784 = vmatpush.bf16.msra.mxu0 0
  %785 = vmatpush.bf16.msra.mxu0 0
  %786 = vmatpush.bf16.msra.mxu0 %v635
  %787 = vmatpush.bf16.msra.mxu0 %v633
  %788 = vmatpush.bf16.msra.mxu0 %v631
  %789 = vmatpush.bf16.msra.mxu0 %v629
  %790 = vmatmul.bf16.gmra.mxu0 %v766
  %v791 = vpop.f32.mrf.mxu0
  %v792 = vadd.f32 %v601, %v791
  %v793 = vpop.f32.mrf.mxu0
  %v794 = vadd.f32 %v601, %v793
  %795 = vdwg.mxu0
  %v796 = vadd.f32 %v757, %v778
  %v797 = vadd.f32 %v759, %v780
  %v798 = vxor.u32 %v796, 2147483648
  %v799 = vxor.u32 %v797, 2147483648
  %v800 = vmul.f32 %v798, 1.442695
  %v801 = vpow.pop %v800
  %v802 = vmul.f32 %v799, 1.442695
  %v803 = vpow.pop %v802
  %v804 = vadd.f32 %v801, 1.0
  %v805 = vadd.f32 %v803, 1.0
  %v806 = vrcp.pop %v804
  %v807 = vmul.f32 %v804, %v806
  %v808 = vsub.f32 1.0, %v807
  %v809 = vmul.f32 %v806, %v808
  %v810 = vadd.f32 %v806, %v809
  %vm811 = vweird.f32 %v804
  %vm812 = vweird.f32 %v806
  %vm813 = vmor %vm811, %vm812
  %v814 = vsel %vm813, %v806, %v810
  %v815 = vand.u32 2147483647, %v804
  %vm816 = vcmp.eq.f32.partialorder %v815, 8.507059e+37
  %v817 = vand.u32 %v804, 2147483648
  %v818 = vor.u32 1.1754944e-38, %v817
  %v819 = vsel %vm816, %v818, %v814
  %v820 = vmul.f32 1.0, %v819
  %v821 = vrcp.pop %v805
  %v822 = vmul.f32 %v805, %v821
  %v823 = vsub.f32 1.0, %v822
  %v824 = vmul.f32 %v821, %v823
  %v825 = vadd.f32 %v821, %v824
  %vm826 = vweird.f32 %v805
  %vm827 = vweird.f32 %v821
  %vm828 = vmor %vm826, %vm827
  %v829 = vsel %vm828, %v821, %v825
  %v830 = vand.u32 2147483647, %v805
  %vm831 = vcmp.eq.f32.partialorder %v830, 8.507059e+37
  %v832 = vand.u32 %v805, 2147483648
  %v833 = vor.u32 1.1754944e-38, %v832
  %v834 = vsel %vm831, %v833, %v829
  %v835 = vmul.f32 1.0, %v834
  %v836 = vmul.f32 %v820, %v792
  %v837 = vmul.f32 %v835, %v794
  %v838 = vadd.f32 %v758, %v836
  %v839 = vadd.f32 %v760, %v837
  %v840 = vtanh.pop %v838
  %v841 = vtanh.pop %v839
  %v842 = vsub.f32 1.0, %v820
  %v843 = vsub.f32 1.0, %v835
  %846 = vrot.lane.b32.xlu0 %v840, 64
  %v847 = vpop.permute.xlu0 %846
  %848 = vrot.lane.b32.xlu0 %v841, 64
  %v849 = vpop.permute.xlu0 %848
  %v852 = vmul.f32 %v842, %v847
  %v853 = vmul.f32 %v843, %v849
  %v854 = vmul.f32 %v820, %v736
  %v855 = vmul.f32 %v835, %v737
  %v856 = vadd.f32 %v852, %v854
  %v857 = vadd.f32 %v853, %v855
  %vm858 = vcmp.eq.s32.totalorder %v142, 1
  %vm859 = vcmp.eq.s32.totalorder %v143, 1
  %v860 = vsel %vm858, 1, 0
  %v861 = vsel %vm859, 1, 0
  %862 = vset.pattern.permute.xlu0 0
  %863 = vperm.xlu0 %862, %v860
  %v864 = vpop.permute.xlu0 %863
  %865 = vset.pattern.permute.xlu0 0
  %866 = vperm.xlu0 %865, %v861
  %v867 = vpop.permute.xlu0 %866
  %vm868 = vcmp.eq.s32.totalorder %v864, 1
  %vm869 = vcmp.eq.s32.totalorder %v867, 1
  %v870 = vsel %vm868, %v856, %v750
  %v871 = vsel %vm869, %v857, %v751
  %s872 = smul.u32 4, 2
  %s873 = smul.addr %s872, 4
  %s874 = scalar_lea.vmem [#allocation2], %s873
  %v875 = vld [vmem:[%s874] sm:$0xff]
  %v876 = vld [vmem:[%s874 + $0x8] sm:$0xff]
  %v877 = vunpack.c.l.bf16 %v875
  %v878 = vunpack.c.h.bf16 %v875
  %v879 = vunpack.c.l.bf16 %v876
  %v880 = vunpack.c.h.bf16 %v876
  %v881 = vpack.c.bf16 %v857, %v856
  %883 = vrot.lane.b32.xlu0 %v881, 64
  %v884 = vpop.permute.xlu0 %883
  %v886 = vsel %vm644, %v884, 0
  %888 = vmatpush.bf16.msra.mxu0 0
  %889 = vmatpush.bf16.msra.mxu0 0
  %890 = vmatpush.bf16.msra.mxu0 0
  %891 = vmatpush.bf16.msra.mxu0 0
  %892 = vmatpush.bf16.msra.mxu0 %v634
  %893 = vmatpush.bf16.msra.mxu0 %v632
  %894 = vmatpush.bf16.msra.mxu0 %v630
  %895 = vmatpush.bf16.msra.mxu0 %v628
  %896 = vmatmul.bf16.gmra.mxu0 %v886
  %v897 = vpop.f32.mrf.mxu0
  %v898 = vadd.f32 %v600, %v897
  %v899 = vpop.f32.mrf.mxu0
  %v900 = vadd.f32 %v600, %v899
  %901 = vdwg.mxu0
  %902 = vmatpush.bf16.msra.mxu0 0
  %903 = vmatpush.bf16.msra.mxu0 0
  %904 = vmatpush.bf16.msra.mxu0 0
  %905 = vmatpush.bf16.msra.mxu0 0
  %906 = vmatpush.bf16.msra.mxu0 %v635
  %907 = vmatpush.bf16.msra.mxu0 %v633
  %908 = vmatpush.bf16.msra.mxu0 %v631
  %909 = vmatpush.bf16.msra.mxu0 %v629
  %910 = vmatmul.bf16.gmra.mxu0 %v886
  %v911 = vpop.f32.mrf.mxu0
  %v912 = vadd.f32 %v601, %v911
  %v913 = vpop.f32.mrf.mxu0
  %v914 = vadd.f32 %v601, %v913
  %915 = vdwg.mxu0
  %v916 = vadd.f32 %v877, %v898
  %v917 = vadd.f32 %v879, %v900
  %v918 = vxor.u32 %v916, 2147483648
  %v919 = vxor.u32 %v917, 2147483648
  %v920 = vmul.f32 %v918, 1.442695
  %v921 = vpow.pop %v920
  %v922 = vmul.f32 %v919, 1.442695
  %v923 = vpow.pop %v922
  %v924 = vadd.f32 %v921, 1.0
  %v925 = vadd.f32 %v923, 1.0
  %v926 = vrcp.pop %v924
  %v927 = vmul.f32 %v924, %v926
  %v928 = vsub.f32 1.0, %v927
  %v929 = vmul.f32 %v926, %v928
  %v930 = vadd.f32 %v926, %v929
  %vm931 = vweird.f32 %v924
  %vm932 = vweird.f32 %v926
  %vm933 = vmor %vm931, %vm932
  %v934 = vsel %vm933, %v926, %v930
  %v935 = vand.u32 2147483647, %v924
  %vm936 = vcmp.eq.f32.partialorder %v935, 8.507059e+37
  %v937 = vand.u32 %v924, 2147483648
  %v938 = vor.u32 1.1754944e-38, %v937
  %v939 = vsel %vm936, %v938, %v934
  %v940 = vmul.f32 1.0, %v939
  %v941 = vrcp.pop %v925
  %v942 = vmul.f32 %v925, %v941
  %v943 = vsub.f32 1.0, %v942
  %v944 = vmul.f32 %v941, %v943
  %v945 = vadd.f32 %v941, %v944
  %vm946 = vweird.f32 %v925
  %vm947 = vweird.f32 %v941
  %vm948 = vmor %vm946, %vm947
  %v949 = vsel %vm948, %v941, %v945
  %v950 = vand.u32 2147483647, %v925
  %vm951 = vcmp.eq.f32.partialorder %v950, 8.507059e+37
  %v952 = vand.u32 %v925, 2147483648
  %v953 = vor.u32 1.1754944e-38, %v952
  %v954 = vsel %vm951, %v953, %v949
  %v955 = vmul.f32 1.0, %v954
  %v956 = vmul.f32 %v940, %v912
  %v957 = vmul.f32 %v955, %v914
  %v958 = vadd.f32 %v878, %v956
  %v959 = vadd.f32 %v880, %v957
  %v960 = vtanh.pop %v958
  %v961 = vtanh.pop %v959
  %v962 = vsub.f32 1.0, %v940
  %v963 = vsub.f32 1.0, %v955
  %966 = vrot.lane.b32.xlu0 %v960, 64
  %v967 = vpop.permute.xlu0 %966
  %968 = vrot.lane.b32.xlu0 %v961, 64
  %v969 = vpop.permute.xlu0 %968
  %v972 = vmul.f32 %v962, %v967
  %v973 = vmul.f32 %v963, %v969
  %v974 = vmul.f32 %v940, %v856
  %v975 = vmul.f32 %v955, %v857
  %v976 = vadd.f32 %v972, %v974
  %v977 = vadd.f32 %v973, %v975
  %vm978 = vcmp.eq.s32.totalorder %v142, 2
  %vm979 = vcmp.eq.s32.totalorder %v143, 2
  %v980 = vsel %vm978, 1, 0
  %v981 = vsel %vm979, 1, 0
  %982 = vset.pattern.permute.xlu0 0
  %983 = vperm.xlu0 %982, %v980
  %v984 = vpop.permute.xlu0 %983
  %985 = vset.pattern.permute.xlu0 0
  %986 = vperm.xlu0 %985, %v981
  %v987 = vpop.permute.xlu0 %986
  %vm988 = vcmp.eq.s32.totalorder %v984, 1
  %vm989 = vcmp.eq.s32.totalorder %v987, 1
  %v990 = vsel %vm988, %v976, %v870
  %v991 = vsel %vm989, %v977, %v871
  %s992 = smul.u32 6, 2
  %s993 = smul.addr %s992, 4
  %s994 = scalar_lea.vmem [#allocation2], %s993
  %v995 = vld [vmem:[%s994] sm:$0xff]
  %v996 = vld [vmem:[%s994 + $0x8] sm:$0xff]
  %v997 = vunpack.c.l.bf16 %v995
  %v998 = vunpack.c.h.bf16 %v995
  %v999 = vunpack.c.l.bf16 %v996
  %v1000 = vunpack.c.h.bf16 %v996
  %v1001 = vpack.c.bf16 %v977, %v976
  %1003 = vrot.lane.b32.xlu0 %v1001, 64
  %v1004 = vpop.permute.xlu0 %1003
  %v1006 = vsel %vm644, %v1004, 0
  %1008 = vmatpush.bf16.msra.mxu0 0
  %1009 = vmatpush.bf16.msra.mxu0 0
  %1010 = vmatpush.bf16.msra.mxu0 0
  %1011 = vmatpush.bf16.msra.mxu0 0
  %1012 = vmatpush.bf16.msra.mxu0 %v634
  %1013 = vmatpush.bf16.msra.mxu0 %v632
  %1014 = vmatpush.bf16.msra.mxu0 %v630
  %1015 = vmatpush.bf16.msra.mxu0 %v628
  %1016 = vmatmul.bf16.gmra.mxu0 %v1006
  %v1017 = vpop.f32.mrf.mxu0
  %v1018 = vadd.f32 %v600, %v1017
  %v1019 = vpop.f32.mrf.mxu0
  %v1020 = vadd.f32 %v600, %v1019
  %1021 = vdwg.mxu0
  %1022 = vmatpush.bf16.msra.mxu0 0
  %1023 = vmatpush.bf16.msra.mxu0 0
  %1024 = vmatpush.bf16.msra.mxu0 0
  %1025 = vmatpush.bf16.msra.mxu0 0
  %1026 = vmatpush.bf16.msra.mxu0 %v635
  %1027 = vmatpush.bf16.msra.mxu0 %v633
  %1028 = vmatpush.bf16.msra.mxu0 %v631
  %1029 = vmatpush.bf16.msra.mxu0 %v629
  %1030 = vmatmul.bf16.gmra.mxu0 %v1006
  %v1031 = vpop.f32.mrf.mxu0
  %v1032 = vadd.f32 %v601, %v1031
  %v1033 = vpop.f32.mrf.mxu0
  %v1034 = vadd.f32 %v601, %v1033
  %1035 = vdwg.mxu0
  %v1036 = vadd.f32 %v997, %v1018
  %v1037 = vadd.f32 %v999, %v1020
  %v1038 = vxor.u32 %v1036, 2147483648
  %v1039 = vxor.u32 %v1037, 2147483648
  %v1040 = vmul.f32 %v1038, 1.442695
  %v1041 = vpow.pop %v1040
  %v1042 = vmul.f32 %v1039, 1.442695
  %v1043 = vpow.pop %v1042
  %v1044 = vadd.f32 %v1041, 1.0
  %v1045 = vadd.f32 %v1043, 1.0
  %v1046 = vrcp.pop %v1044
  %v1047 = vmul.f32 %v1044, %v1046
  %v1048 = vsub.f32 1.0, %v1047
  %v1049 = vmul.f32 %v1046, %v1048
  %v1050 = vadd.f32 %v1046, %v1049
  %vm1051 = vweird.f32 %v1044
  %vm1052 = vweird.f32 %v1046
  %vm1053 = vmor %vm1051, %vm1052
  %v1054 = vsel %vm1053, %v1046, %v1050
  %v1055 = vand.u32 2147483647, %v1044
  %vm1056 = vcmp.eq.f32.partialorder %v1055, 8.507059e+37
  %v1057 = vand.u32 %v1044, 2147483648
  %v1058 = vor.u32 1.1754944e-38, %v1057
  %v1059 = vsel %vm1056, %v1058, %v1054
  %v1060 = vmul.f32 1.0, %v1059
  %v1061 = vrcp.pop %v1045
  %v1062 = vmul.f32 %v1045, %v1061
  %v1063 = vsub.f32 1.0, %v1062
  %v1064 = vmul.f32 %v1061, %v1063
  %v1065 = vadd.f32 %v1061, %v1064
  %vm1066 = vweird.f32 %v1045
  %vm1067 = vweird.f32 %v1061
  %vm1068 = vmor %vm1066, %vm1067
  %v1069 = vsel %vm1068, %v1061, %v1065
  %v1070 = vand.u32 2147483647, %v1045
  %vm1071 = vcmp.eq.f32.partialorder %v1070, 8.507059e+37
  %v1072 = vand.u32 %v1045, 2147483648
  %v1073 = vor.u32 1.1754944e-38, %v1072
  %v1074 = vsel %vm1071, %v1073, %v1069
  %v1075 = vmul.f32 1.0, %v1074
  %v1076 = vmul.f32 %v1060, %v1032
  %v1077 = vmul.f32 %v1075, %v1034
  %v1078 = vadd.f32 %v998, %v1076
  %v1079 = vadd.f32 %v1000, %v1077
  %v1080 = vtanh.pop %v1078
  %v1081 = vtanh.pop %v1079
  %v1082 = vsub.f32 1.0, %v1060
  %v1083 = vsub.f32 1.0, %v1075
  %1086 = vrot.lane.b32.xlu0 %v1080, 64
  %v1087 = vpop.permute.xlu0 %1086
  %1088 = vrot.lane.b32.xlu0 %v1081, 64
  %v1089 = vpop.permute.xlu0 %1088
  %v1092 = vmul.f32 %v1082, %v1087
  %v1093 = vmul.f32 %v1083, %v1089
  %v1094 = vmul.f32 %v1060, %v976
  %v1095 = vmul.f32 %v1075, %v977
  %v1096 = vadd.f32 %v1092, %v1094
  %v1097 = vadd.f32 %v1093, %v1095
  %vm1098 = vcmp.eq.s32.totalorder %v142, 3
  %vm1099 = vcmp.eq.s32.totalorder %v143, 3
  %v1100 = vsel %vm1098, 1, 0
  %v1101 = vsel %vm1099, 1, 0
  %1102 = vset.pattern.permute.xlu0 0
  %1103 = vperm.xlu0 %1102, %v1100
  %v1104 = vpop.permute.xlu0 %1103
  %1105 = vset.pattern.permute.xlu0 0
  %1106 = vperm.xlu0 %1105, %v1101
  %v1107 = vpop.permute.xlu0 %1106
  %vm1108 = vcmp.eq.s32.totalorder %v1104, 1
  %vm1109 = vcmp.eq.s32.totalorder %v1107, 1
  %v1110 = vsel %vm1108, %v1096, %v990
  %v1111 = vsel %vm1109, %v1097, %v991
  %s1112 = smul.addr %s581, 4
  %s1113 = scalar_lea.vmem [#allocation3], %s1112
  %v1114 = vld [vmem:[%s1113] sm:$0xff]
  %v1115 = vld [vmem:[%s1113 + $0x8] sm:$0xff]
  %v1116 = vunpack.c.l.bf16 %v1114
  %v1117 = vunpack.c.h.bf16 %v1114
  %v1118 = vunpack.c.l.bf16 %v1115
  %v1119 = vunpack.c.h.bf16 %v1115
  %v1120 = vpack.c.bf16 %v1097, %v1096
  %1122 = vrot.lane.b32.xlu0 %v1120, 64
  %v1123 = vpop.permute.xlu0 %1122
  %v1125 = vsel %vm644, %v1123, 0
  %1127 = vmatpush.bf16.msra.mxu0 0
  %1128 = vmatpush.bf16.msra.mxu0 0
  %1129 = vmatpush.bf16.msra.mxu0 0
  %1130 = vmatpush.bf16.msra.mxu0 0
  %1131 = vmatpush.bf16.msra.mxu0 %v634
  %1132 = vmatpush.bf16.msra.mxu0 %v632
  %1133 = vmatpush.bf16.msra.mxu0 %v630
  %1134 = vmatpush.bf16.msra.mxu0 %v628
  %1135 = vmatmul.bf16.gmra.mxu0 %v1125
  %v1136 = vpop.f32.mrf.mxu0
  %v1137 = vadd.f32 %v600, %v1136
  %v1138 = vpop.f32.mrf.mxu0
  %v1139 = vadd.f32 %v600, %v1138
  %1140 = vdwg.mxu0
  %1141 = vmatpush.bf16.msra.mxu0 0
  %1142 = vmatpush.bf16.msra.mxu0 0
  %1143 = vmatpush.bf16.msra.mxu0 0
  %1144 = vmatpush.bf16.msra.mxu0 0
  %1145 = vmatpush.bf16.msra.mxu0 %v635
  %1146 = vmatpush.bf16.msra.mxu0 %v633
  %1147 = vmatpush.bf16.msra.mxu0 %v631
  %1148 = vmatpush.bf16.msra.mxu0 %v629
  %1149 = vmatmul.bf16.gmra.mxu0 %v1125
  %v1150 = vpop.f32.mrf.mxu0
  %v1151 = vadd.f32 %v601, %v1150
  %v1152 = vpop.f32.mrf.mxu0
  %v1153 = vadd.f32 %v601, %v1152
  %1154 = vdwg.mxu0
  %v1155 = vadd.f32 %v1116, %v1137
  %v1156 = vadd.f32 %v1118, %v1139
  %v1157 = vxor.u32 %v1155, 2147483648
  %v1158 = vxor.u32 %v1156, 2147483648
  %v1159 = vmul.f32 %v1157, 1.442695
  %v1160 = vpow.pop %v1159
  %v1161 = vmul.f32 %v1158, 1.442695
  %v1162 = vpow.pop %v1161
  %v1163 = vadd.f32 %v1160, 1.0
  %v1164 = vadd.f32 %v1162, 1.0
  %v1165 = vrcp.pop %v1163
  %v1166 = vmul.f32 %v1163, %v1165
  %v1167 = vsub.f32 1.0, %v1166
  %v1168 = vmul.f32 %v1165, %v1167
  %v1169 = vadd.f32 %v1165, %v1168
  %vm1170 = vweird.f32 %v1163
  %vm1171 = vweird.f32 %v1165
  %vm1172 = vmor %vm1170, %vm1171
  %v1173 = vsel %vm1172, %v1165, %v1169
  %v1174 = vand.u32 2147483647, %v1163
  %vm1175 = vcmp.eq.f32.partialorder %v1174, 8.507059e+37
  %v1176 = vand.u32 %v1163, 2147483648
  %v1177 = vor.u32 1.1754944e-38, %v1176
  %v1178 = vsel %vm1175, %v1177, %v1173
  %v1179 = vmul.f32 1.0, %v1178
  %v1180 = vrcp.pop %v1164
  %v1181 = vmul.f32 %v1164, %v1180
  %v1182 = vsub.f32 1.0, %v1181
  %v1183 = vmul.f32 %v1180, %v1182
  %v1184 = vadd.f32 %v1180, %v1183
  %vm1185 = vweird.f32 %v1164
  %vm1186 = vweird.f32 %v1180
  %vm1187 = vmor %vm1185, %vm1186
  %v1188 = vsel %vm1187, %v1180, %v1184
  %v1189 = vand.u32 2147483647, %v1164
  %vm1190 = vcmp.eq.f32.partialorder %v1189, 8.507059e+37
  %v1191 = vand.u32 %v1164, 2147483648
  %v1192 = vor.u32 1.1754944e-38, %v1191
  %v1193 = vsel %vm1190, %v1192, %v1188
  %v1194 = vmul.f32 1.0, %v1193
  %v1195 = vmul.f32 %v1179, %v1151
  %v1196 = vmul.f32 %v1194, %v1153
  %v1197 = vadd.f32 %v1117, %v1195
  %v1198 = vadd.f32 %v1119, %v1196
  %v1199 = vtanh.pop %v1197
  %v1200 = vtanh.pop %v1198
  %v1201 = vsub.f32 1.0, %v1179
  %v1202 = vsub.f32 1.0, %v1194
  %1205 = vrot.lane.b32.xlu0 %v1199, 64
  %v1206 = vpop.permute.xlu0 %1205
  %1207 = vrot.lane.b32.xlu0 %v1200, 64
  %v1208 = vpop.permute.xlu0 %1207
  %v1211 = vmul.f32 %v1201, %v1206
  %v1212 = vmul.f32 %v1202, %v1208
  %v1213 = vmul.f32 %v1179, %v1096
  %v1214 = vmul.f32 %v1194, %v1097
  %v1215 = vadd.f32 %v1211, %v1213
  %v1216 = vadd.f32 %v1212, %v1214
  %vm1217 = vcmp.eq.s32.totalorder %v142, 4
  %vm1218 = vcmp.eq.s32.totalorder %v143, 4
  %v1219 = vsel %vm1217, 1, 0
  %v1220 = vsel %vm1218, 1, 0
  %1221 = vset.pattern.permute.xlu0 0
  %1222 = vperm.xlu0 %1221, %v1219
  %v1223 = vpop.permute.xlu0 %1222
  %1224 = vset.pattern.permute.xlu0 0
  %1225 = vperm.xlu0 %1224, %v1220
  %v1226 = vpop.permute.xlu0 %1225
  %vm1227 = vcmp.eq.s32.totalorder %v1223, 1
  %vm1228 = vcmp.eq.s32.totalorder %v1226, 1
  %v1229 = vsel %vm1227, %v1215, %v1110
  %v1230 = vsel %vm1228, %v1216, %v1111
  %s1231 = smul.addr %s752, 4
  %s1232 = scalar_lea.vmem [#allocation3], %s1231
  %v1233 = vld [vmem:[%s1232] sm:$0xff]
  %v1234 = vld [vmem:[%s1232 + $0x8] sm:$0xff]
  %v1235 = vunpack.c.l.bf16 %v1233
  %v1236 = vunpack.c.h.bf16 %v1233
  %v1237 = vunpack.c.l.bf16 %v1234
  %v1238 = vunpack.c.h.bf16 %v1234
  %v1239 = vpack.c.bf16 %v1216, %v1215
  %1241 = vrot.lane.b32.xlu0 %v1239, 64
  %v1242 = vpop.permute.xlu0 %1241
  %v1244 = vsel %vm644, %v1242, 0
  %1246 = vmatpush.bf16.msra.mxu0 0
  %1247 = vmatpush.bf16.msra.mxu0 0
  %1248 = vmatpush.bf16.msra.mxu0 0
  %1249 = vmatpush.bf16.msra.mxu0 0
  %1250 = vmatpush.bf16.msra.mxu0 %v634
  %1251 = vmatpush.bf16.msra.mxu0 %v632
  %1252 = vmatpush.bf16.msra.mxu0 %v630
  %1253 = vmatpush.bf16.msra.mxu0 %v628
  %1254 = vmatmul.bf16.gmra.mxu0 %v1244
  %v1255 = vpop.f32.mrf.mxu0
  %v1256 = vadd.f32 %v600, %v1255
  %v1257 = vpop.f32.mrf.mxu0
  %v1258 = vadd.f32 %v600, %v1257
  %1259 = vdwg.mxu0
  %1260 = vmatpush.bf16.msra.mxu0 0
  %1261 = vmatpush.bf16.msra.mxu0 0
  %1262 = vmatpush.bf16.msra.mxu0 0
  %1263 = vmatpush.bf16.msra.mxu0 0
  %1264 = vmatpush.bf16.msra.mxu0 %v635
  %1265 = vmatpush.bf16.msra.mxu0 %v633
  %1266 = vmatpush.bf16.msra.mxu0 %v631
  %1267 = vmatpush.bf16.msra.mxu0 %v629
  %1268 = vmatmul.bf16.gmra.mxu0 %v1244
  %v1269 = vpop.f32.mrf.mxu0
  %v1270 = vadd.f32 %v601, %v1269
  %v1271 = vpop.f32.mrf.mxu0
  %v1272 = vadd.f32 %v601, %v1271
  %1273 = vdwg.mxu0
  %v1274 = vadd.f32 %v1235, %v1256
  %v1275 = vadd.f32 %v1237, %v1258
  %v1276 = vxor.u32 %v1274, 2147483648
  %v1277 = vxor.u32 %v1275, 2147483648
  %v1278 = vmul.f32 %v1276, 1.442695
  %v1279 = vpow.pop %v1278
  %v1280 = vmul.f32 %v1277, 1.442695
  %v1281 = vpow.pop %v1280
  %v1282 = vadd.f32 %v1279, 1.0
  %v1283 = vadd.f32 %v1281, 1.0
  %v1284 = vrcp.pop %v1282
  %v1285 = vmul.f32 %v1282, %v1284
  %v1286 = vsub.f32 1.0, %v1285
  %v1287 = vmul.f32 %v1284, %v1286
  %v1288 = vadd.f32 %v1284, %v1287
  %vm1289 = vweird.f32 %v1282
  %vm1290 = vweird.f32 %v1284
  %vm1291 = vmor %vm1289, %vm1290
  %v1292 = vsel %vm1291, %v1284, %v1288
  %v1293 = vand.u32 2147483647, %v1282
  %vm1294 = vcmp.eq.f32.partialorder %v1293, 8.507059e+37
  %v1295 = vand.u32 %v1282, 2147483648
  %v1296 = vor.u32 1.1754944e-38, %v1295
  %v1297 = vsel %vm1294, %v1296, %v1292
  %v1298 = vmul.f32 1.0, %v1297
  %v1299 = vrcp.pop %v1283
  %v1300 = vmul.f32 %v1283, %v1299
  %v1301 = vsub.f32 1.0, %v1300
  %v1302 = vmul.f32 %v1299, %v1301
  %v1303 = vadd.f32 %v1299, %v1302
  %vm1304 = vweird.f32 %v1283
  %vm1305 = vweird.f32 %v1299
  %vm1306 = vmor %vm1304, %vm1305
  %v1307 = vsel %vm1306, %v1299, %v1303
  %v1308 = vand.u32 2147483647, %v1283
  %vm1309 = vcmp.eq.f32.partialorder %v1308, 8.507059e+37
  %v1310 = vand.u32 %v1283, 2147483648
  %v1311 = vor.u32 1.1754944e-38, %v1310
  %v1312 = vsel %vm1309, %v1311, %v1307
  %v1313 = vmul.f32 1.0, %v1312
  %v1314 = vmul.f32 %v1298, %v1270
  %v1315 = vmul.f32 %v1313, %v1272
  %v1316 = vadd.f32 %v1236, %v1314
  %v1317 = vadd.f32 %v1238, %v1315
  %v1318 = vtanh.pop %v1316
  %v1319 = vtanh.pop %v1317
  %v1320 = vsub.f32 1.0, %v1298
  %v1321 = vsub.f32 1.0, %v1313
  %1324 = vrot.lane.b32.xlu0 %v1318, 64
  %v1325 = vpop.permute.xlu0 %1324
  %1326 = vrot.lane.b32.xlu0 %v1319, 64
  %v1327 = vpop.permute.xlu0 %1326
  %v1330 = vmul.f32 %v1320, %v1325
  %v1331 = vmul.f32 %v1321, %v1327
  %v1332 = vmul.f32 %v1298, %v1215
  %v1333 = vmul.f32 %v1313, %v1216
  %v1334 = vadd.f32 %v1330, %v1332
  %v1335 = vadd.f32 %v1331, %v1333
  %vm1336 = vcmp.eq.s32.totalorder %v142, 5
  %vm1337 = vcmp.eq.s32.totalorder %v143, 5
  %v1338 = vsel %vm1336, 1, 0
  %v1339 = vsel %vm1337, 1, 0
  %1340 = vset.pattern.permute.xlu0 0
  %1341 = vperm.xlu0 %1340, %v1338
  %v1342 = vpop.permute.xlu0 %1341
  %1343 = vset.pattern.permute.xlu0 0
  %1344 = vperm.xlu0 %1343, %v1339
  %v1345 = vpop.permute.xlu0 %1344
  %vm1346 = vcmp.eq.s32.totalorder %v1342, 1
  %vm1347 = vcmp.eq.s32.totalorder %v1345, 1
  %v1348 = vsel %vm1346, %v1334, %v1229
  %v1349 = vsel %vm1347, %v1335, %v1230
  %s1350 = smul.addr %s872, 4
  %s1351 = scalar_lea.vmem [#allocation3], %s1350
  %v1352 = vld [vmem:[%s1351] sm:$0xff]
  %v1353 = vld [vmem:[%s1351 + $0x8] sm:$0xff]
  %v1354 = vunpack.c.l.bf16 %v1352
  %v1355 = vunpack.c.h.bf16 %v1352
  %v1356 = vunpack.c.l.bf16 %v1353
  %v1357 = vunpack.c.h.bf16 %v1353
  %v1358 = vpack.c.bf16 %v1335, %v1334
  %1360 = vrot.lane.b32.xlu0 %v1358, 64
  %v1361 = vpop.permute.xlu0 %1360
  %v1363 = vsel %vm644, %v1361, 0
  %1365 = vmatpush.bf16.msra.mxu0 0
  %1366 = vmatpush.bf16.msra.mxu0 0
  %1367 = vmatpush.bf16.msra.mxu0 0
  %1368 = vmatpush.bf16.msra.mxu0 0
  %1369 = vmatpush.bf16.msra.mxu0 %v634
  %1370 = vmatpush.bf16.msra.mxu0 %v632
  %1371 = vmatpush.bf16.msra.mxu0 %v630
  %1372 = vmatpush.bf16.msra.mxu0 %v628
  %1373 = vmatmul.bf16.gmra.mxu0 %v1363
  %v1374 = vpop.f32.mrf.mxu0
  %v1375 = vadd.f32 %v600, %v1374
  %v1376 = vpop.f32.mrf.mxu0
  %v1377 = vadd.f32 %v600, %v1376
  %1378 = vdwg.mxu0
  %1379 = vmatpush.bf16.msra.mxu0 0
  %1380 = vmatpush.bf16.msra.mxu0 0
  %1381 = vmatpush.bf16.msra.mxu0 0
  %1382 = vmatpush.bf16.msra.mxu0 0
  %1383 = vmatpush.bf16.msra.mxu0 %v635
  %1384 = vmatpush.bf16.msra.mxu0 %v633
  %1385 = vmatpush.bf16.msra.mxu0 %v631
  %1386 = vmatpush.bf16.msra.mxu0 %v629
  %1387 = vmatmul.bf16.gmra.mxu0 %v1363
  %v1388 = vpop.f32.mrf.mxu0
  %v1389 = vadd.f32 %v601, %v1388
  %v1390 = vpop.f32.mrf.mxu0
  %v1391 = vadd.f32 %v601, %v1390
  %1392 = vdwg.mxu0
  %v1393 = vadd.f32 %v1354, %v1375
  %v1394 = vadd.f32 %v1356, %v1377
  %v1395 = vxor.u32 %v1393, 2147483648
  %v1396 = vxor.u32 %v1394, 2147483648
  %v1397 = vmul.f32 %v1395, 1.442695
  %v1398 = vpow.pop %v1397
  %v1399 = vmul.f32 %v1396, 1.442695
  %v1400 = vpow.pop %v1399
  %v1401 = vadd.f32 %v1398, 1.0
  %v1402 = vadd.f32 %v1400, 1.0
  %v1403 = vrcp.pop %v1401
  %v1404 = vmul.f32 %v1401, %v1403
  %v1405 = vsub.f32 1.0, %v1404
  %v1406 = vmul.f32 %v1403, %v1405
  %v1407 = vadd.f32 %v1403, %v1406
  %vm1408 = vweird.f32 %v1401
  %vm1409 = vweird.f32 %v1403
  %vm1410 = vmor %vm1408, %vm1409
  %v1411 = vsel %vm1410, %v1403, %v1407
  %v1412 = vand.u32 2147483647, %v1401
  %vm1413 = vcmp.eq.f32.partialorder %v1412, 8.507059e+37
  %v1414 = vand.u32 %v1401, 2147483648
  %v1415 = vor.u32 1.1754944e-38, %v1414
  %v1416 = vsel %vm1413, %v1415, %v1411
  %v1417 = vmul.f32 1.0, %v1416
  %v1418 = vrcp.pop %v1402
  %v1419 = vmul.f32 %v1402, %v1418
  %v1420 = vsub.f32 1.0, %v1419
  %v1421 = vmul.f32 %v1418, %v1420
  %v1422 = vadd.f32 %v1418, %v1421
  %vm1423 = vweird.f32 %v1402
  %vm1424 = vweird.f32 %v1418
  %vm1425 = vmor %vm1423, %vm1424
  %v1426 = vsel %vm1425, %v1418, %v1422
  %v1427 = vand.u32 2147483647, %v1402
  %vm1428 = vcmp.eq.f32.partialorder %v1427, 8.507059e+37
  %v1429 = vand.u32 %v1402, 2147483648
  %v1430 = vor.u32 1.1754944e-38, %v1429
  %v1431 = vsel %vm1428, %v1430, %v1426
  %v1432 = vmul.f32 1.0, %v1431
  %v1433 = vmul.f32 %v1417, %v1389
  %v1434 = vmul.f32 %v1432, %v1391
  %v1435 = vadd.f32 %v1355, %v1433
  %v1436 = vadd.f32 %v1357, %v1434
  %v1437 = vtanh.pop %v1435
  %v1438 = vtanh.pop %v1436
  %v1439 = vsub.f32 1.0, %v1417
  %v1440 = vsub.f32 1.0, %v1432
  %1443 = vrot.lane.b32.xlu0 %v1437, 64
  %v1444 = vpop.permute.xlu0 %1443
  %1445 = vrot.lane.b32.xlu0 %v1438, 64
  %v1446 = vpop.permute.xlu0 %1445
  %v1449 = vmul.f32 %v1439, %v1444
  %v1450 = vmul.f32 %v1440, %v1446
  %v1451 = vmul.f32 %v1417, %v1334
  %v1452 = vmul.f32 %v1432, %v1335
  %v1453 = vadd.f32 %v1449, %v1451
  %v1454 = vadd.f32 %v1450, %v1452
  %vm1455 = vcmp.eq.s32.totalorder %v142, 6
  %vm1456 = vcmp.eq.s32.totalorder %v143, 6
  %v1457 = vsel %vm1455, 1, 0
  %v1458 = vsel %vm1456, 1, 0
  %1459 = vset.pattern.permute.xlu0 0
  %1460 = vperm.xlu0 %1459, %v1457
  %v1461 = vpop.permute.xlu0 %1460
  %1462 = vset.pattern.permute.xlu0 0
  %1463 = vperm.xlu0 %1462, %v1458
  %v1464 = vpop.permute.xlu0 %1463
  %vm1465 = vcmp.eq.s32.totalorder %v1461, 1
  %vm1466 = vcmp.eq.s32.totalorder %v1464, 1
  %v1467 = vsel %vm1465, %v1453, %v1348
  %v1468 = vsel %vm1466, %v1454, %v1349
  %s1469 = smul.addr %s992, 4
  %s1470 = scalar_lea.vmem [#allocation3], %s1469
  %v1471 = vld [vmem:[%s1470] sm:$0xff]
  %v1472 = vld [vmem:[%s1470 + $0x8] sm:$0xff]
  %v1473 = vunpack.c.l.bf16 %v1471
  %v1474 = vunpack.c.h.bf16 %v1471
  %v1475 = vunpack.c.l.bf16 %v1472
  %v1476 = vunpack.c.h.bf16 %v1472
  %v1477 = vpack.c.bf16 %v1454, %v1453
  %1479 = vrot.lane.b32.xlu0 %v1477, 64
  %v1480 = vpop.permute.xlu0 %1479
  %v1482 = vsel %vm644, %v1480, 0
  %1484 = vmatpush.bf16.msra.mxu0 0
  %1485 = vmatpush.bf16.msra.mxu0 0
  %1486 = vmatpush.bf16.msra.mxu0 0
  %1487 = vmatpush.bf16.msra.mxu0 0
  %1488 = vmatpush.bf16.msra.mxu0 %v634
  %1489 = vmatpush.bf16.msra.mxu0 %v632
  %1490 = vmatpush.bf16.msra.mxu0 %v630
  %1491 = vmatpush.bf16.msra.mxu0 %v628
  %1492 = vmatmul.bf16.gmra.mxu0 %v1482
  %v1493 = vpop.f32.mrf.mxu0
  %v1494 = vadd.f32 %v600, %v1493
  %v1495 = vpop.f32.mrf.mxu0
  %v1496 = vadd.f32 %v600, %v1495
  %1497 = vdwg.mxu0
  %1498 = vmatpush.bf16.msra.mxu0 0
  %1499 = vmatpush.bf16.msra.mxu0 0
  %1500 = vmatpush.bf16.msra.mxu0 0
  %1501 = vmatpush.bf16.msra.mxu0 0
  %1502 = vmatpush.bf16.msra.mxu0 %v635
  %1503 = vmatpush.bf16.msra.mxu0 %v633
  %1504 = vmatpush.bf16.msra.mxu0 %v631
  %1505 = vmatpush.bf16.msra.mxu0 %v629
  %1506 = vmatmul.bf16.gmra.mxu0 %v1482
  %v1507 = vpop.f32.mrf.mxu0
  %v1508 = vadd.f32 %v601, %v1507
  %v1509 = vpop.f32.mrf.mxu0
  %v1510 = vadd.f32 %v601, %v1509
  %1511 = vdwg.mxu0
  %v1512 = vadd.f32 %v1473, %v1494
  %v1513 = vadd.f32 %v1475, %v1496
  %v1514 = vxor.u32 %v1512, 2147483648
  %v1515 = vxor.u32 %v1513, 2147483648
  %v1516 = vmul.f32 %v1514, 1.442695
  %v1517 = vpow.pop %v1516
  %v1518 = vmul.f32 %v1515, 1.442695
  %v1519 = vpow.pop %v1518
  %v1520 = vadd.f32 %v1517, 1.0
  %v1521 = vadd.f32 %v1519, 1.0
  %v1522 = vrcp.pop %v1520
  %v1523 = vmul.f32 %v1520, %v1522
  %v1524 = vsub.f32 1.0, %v1523
  %v1525 = vmul.f32 %v1522, %v1524
  %v1526 = vadd.f32 %v1522, %v1525
  %vm1527 = vweird.f32 %v1520
  %vm1528 = vweird.f32 %v1522
  %vm1529 = vmor %vm1527, %vm1528
  %v1530 = vsel %vm1529, %v1522, %v1526
  %v1531 = vand.u32 2147483647, %v1520
  %vm1532 = vcmp.eq.f32.partialorder %v1531, 8.507059e+37
  %v1533 = vand.u32 %v1520, 2147483648
  %v1534 = vor.u32 1.1754944e-38, %v1533
  %v1535 = vsel %vm1532, %v1534, %v1530
  %v1536 = vmul.f32 1.0, %v1535
  %v1537 = vrcp.pop %v1521
  %v1538 = vmul.f32 %v1521, %v1537
  %v1539 = vsub.f32 1.0, %v1538
  %v1540 = vmul.f32 %v1537, %v1539
  %v1541 = vadd.f32 %v1537, %v1540
  %vm1542 = vweird.f32 %v1521
  %vm1543 = vweird.f32 %v1537
  %vm1544 = vmor %vm1542, %vm1543
  %v1545 = vsel %vm1544, %v1537, %v1541
  %v1546 = vand.u32 2147483647, %v1521
  %vm1547 = vcmp.eq.f32.partialorder %v1546, 8.507059e+37
  %v1548 = vand.u32 %v1521, 2147483648
  %v1549 = vor.u32 1.1754944e-38, %v1548
  %v1550 = vsel %vm1547, %v1549, %v1545
  %v1551 = vmul.f32 1.0, %v1550
  %v1552 = vmul.f32 %v1536, %v1508
  %v1553 = vmul.f32 %v1551, %v1510
  %v1554 = vadd.f32 %v1474, %v1552
  %v1555 = vadd.f32 %v1476, %v1553
  %v1556 = vtanh.pop %v1554
  %v1557 = vtanh.pop %v1555
  %v1558 = vsub.f32 1.0, %v1536
  %v1559 = vsub.f32 1.0, %v1551
  %1562 = vrot.lane.b32.xlu0 %v1556, 64
  %v1563 = vpop.permute.xlu0 %1562
  %1564 = vrot.lane.b32.xlu0 %v1557, 64
  %v1565 = vpop.permute.xlu0 %1564
  %v1568 = vmul.f32 %v1558, %v1563
  %v1569 = vmul.f32 %v1559, %v1565
  %v1570 = vmul.f32 %v1536, %v1453
  %v1571 = vmul.f32 %v1551, %v1454
  %v1572 = vadd.f32 %v1568, %v1570
  %v1573 = vadd.f32 %v1569, %v1571
  %vm1574 = vcmp.eq.s32.totalorder %v142, 7
  %vm1575 = vcmp.eq.s32.totalorder %v143, 7
  %v1576 = vsel %vm1574, 1, 0
  %v1577 = vsel %vm1575, 1, 0
  %1578 = vset.pattern.permute.xlu0 0
  %1579 = vperm.xlu0 %1578, %v1576
  %v1580 = vpop.permute.xlu0 %1579
  %1581 = vset.pattern.permute.xlu0 0
  %1582 = vperm.xlu0 %1581, %v1577
  %v1583 = vpop.permute.xlu0 %1582
  %vm1584 = vcmp.eq.s32.totalorder %v1580, 1
  %vm1585 = vcmp.eq.s32.totalorder %v1583, 1
  %v1586 = vsel %vm1584, %v1572, %v1467
  %v1587 = vsel %vm1585, %v1573, %v1468
  %v1588 = vpack.c.bf16 %v1587, %v1586
  %v1589 = vld [vmem:[%s15] sm:$0xf]
  %v1590 = vld [vmem:[%s15 + $0x4] sm:$0xf]
  %v1591 = vld [vmem:[%s15 + $0x8] sm:$0xf]
  %v1592 = vld [vmem:[%s15 + $0xc] sm:$0xf]
  %v1593 = vld [vmem:[%s16] sm:$0x1]
  %v1595 = vperm.slane %v1593, 0
  %1598 = vrot.lane.b32.xlu0 %v1588, 32
  %v1599 = vpop.permute.xlu0 %1598
  %v1604 = vunpack.c.l.b16 %v1589
  %v1605 = vunpack.c.l.b16 %v1590
  %v1606 = vunpack.c.l.b16 %v1591
  %v1607 = vunpack.c.l.b16 %v1592
  %v1608 = vpack.c.b16 %v1605, %v1604
  %v1609 = vpack.c.b16 %v1607, %v1606
  %v1613 = vsel %vm84, %v1599, 0
  %1615 = vmatpush.bf16.msra.mxu0 0
  %1616 = vmatpush.bf16.msra.mxu0 0
  %1617 = vmatpush.bf16.msra.mxu0 0
  %1618 = vmatpush.bf16.msra.mxu0 0
  %1619 = vmatpush.bf16.msra.mxu0 0
  %1620 = vmatpush.bf16.msra.mxu0 0
  %1621 = vmatpush.bf16.msra.mxu0 %v1609
  %1622 = vmatpush.bf16.msra.mxu0 %v1608
  %1623 = vmatmul.bf16.gmra.mxu0 %v1613
  %v1624 = vpop.f32.mrf.mxu0
  %v1625 = vadd.f32 %v1595, %v1624
  %v1626 = vpop.f32.mrf.mxu0
  %v1627 = vadd.f32 %v1595, %v1626
  %1628 = vdwg.mxu0
  %v1629 = vperm.slane %v1586, 0
  %v1630 = vlaneseq
  %v1631 = vshrl.u32 %v1630, 7
  %v1632 = vadd.s32 %v1631, 96
  %1633 = vset.pattern.permute.xlu0 %v1632
  %1634 = vperm.xlu0 %1633, %v1629
  %v1635 = vpop.permute.xlu0 %1634
  %v1636 = vlaneseq
  %v1637 = vshrl.u32 %v1636, 7
  %v1638 = vadd.s32 %v1637, 104
  %1639 = vset.pattern.permute.xlu0 %v1638
  %1640 = vperm.xlu0 %1639, %v1629
  %v1641 = vpop.permute.xlu0 %1640
  %v1642 = vlaneseq
  %v1643 = vshrl.u32 %v1642, 7
  %v1644 = vadd.s32 %v1643, 112
  %1645 = vset.pattern.permute.xlu0 %v1644
  %1646 = vperm.xlu0 %1645, %v1629
  %v1647 = vpop.permute.xlu0 %1646
  %v1648 = vlaneseq
  %v1649 = vshrl.u32 %v1648, 7
  %v1650 = vadd.s32 %v1649, 120
  %1651 = vset.pattern.permute.xlu0 %v1650
  %1652 = vperm.xlu0 %1651, %v1629
  %v1653 = vpop.permute.xlu0 %1652
  %v1654 = vperm.slane %v1586, 1
  %v1655 = vlaneseq
  %v1656 = vshrl.u32 %v1655, 7
  %v1657 = vadd.s32 %v1656, 96
  %1658 = vset.pattern.permute.xlu0 %v1657
  %1659 = vperm.xlu0 %1658, %v1654
  %v1660 = vpop.permute.xlu0 %1659
  %v1661 = vlaneseq
  %v1662 = vshrl.u32 %v1661, 7
  %v1663 = vadd.s32 %v1662, 104
  %1664 = vset.pattern.permute.xlu0 %v1663
  %1665 = vperm.xlu0 %1664, %v1654
  %v1666 = vpop.permute.xlu0 %1665
  %v1667 = vlaneseq
  %v1668 = vshrl.u32 %v1667, 7
  %v1669 = vadd.s32 %v1668, 112
  %1670 = vset.pattern.permute.xlu0 %v1669
  %1671 = vperm.xlu0 %1670, %v1654
  %v1672 = vpop.permute.xlu0 %1671
  %v1673 = vlaneseq
  %v1674 = vshrl.u32 %v1673, 7
  %v1675 = vadd.s32 %v1674, 120
  %1676 = vset.pattern.permute.xlu0 %v1675
  %1677 = vperm.xlu0 %1676, %v1654
  %v1678 = vpop.permute.xlu0 %1677
  %v1679 = vperm.slane %v1586, 2
  %v1680 = vlaneseq
  %v1681 = vshrl.u32 %v1680, 7
  %v1682 = vadd.s32 %v1681, 96
  %1683 = vset.pattern.permute.xlu0 %v1682
  %1684 = vperm.xlu0 %1683, %v1679
  %v1685 = vpop.permute.xlu0 %1684
  %v1686 = vlaneseq
  %v1687 = vshrl.u32 %v1686, 7
  %v1688 = vadd.s32 %v1687, 104
  %1689 = vset.pattern.permute.xlu0 %v1688
  %1690 = vperm.xlu0 %1689, %v1679
  %v1691 = vpop.permute.xlu0 %1690
  %v1692 = vlaneseq
  %v1693 = vshrl.u32 %v1692, 7
  %v1694 = vadd.s32 %v1693, 112
  %1695 = vset.pattern.permute.xlu0 %v1694
  %1696 = vperm.xlu0 %1695, %v1679
  %v1697 = vpop.permute.xlu0 %1696
  %v1698 = vlaneseq
  %v1699 = vshrl.u32 %v1698, 7
  %v1700 = vadd.s32 %v1699, 120
  %1701 = vset.pattern.permute.xlu0 %v1700
  %1702 = vperm.xlu0 %1701, %v1679
  %v1703 = vpop.permute.xlu0 %1702
  %v1704 = vperm.slane %v1586, 3
  %v1705 = vlaneseq
  %v1706 = vshrl.u32 %v1705, 7
  %v1707 = vadd.s32 %v1706, 96
  %1708 = vset.pattern.permute.xlu0 %v1707
  %1709 = vperm.xlu0 %1708, %v1704
  %v1710 = vpop.permute.xlu0 %1709
  %v1711 = vlaneseq
  %v1712 = vshrl.u32 %v1711, 7
  %v1713 = vadd.s32 %v1712, 104
  %1714 = vset.pattern.permute.xlu0 %v1713
  %1715 = vperm.xlu0 %1714, %v1704
  %v1716 = vpop.permute.xlu0 %1715
  %v1717 = vlaneseq
  %v1718 = vshrl.u32 %v1717, 7
  %v1719 = vadd.s32 %v1718, 112
  %1720 = vset.pattern.permute.xlu0 %v1719
  %1721 = vperm.xlu0 %1720, %v1704
  %v1722 = vpop.permute.xlu0 %1721
  %v1723 = vlaneseq
  %v1724 = vshrl.u32 %v1723, 7
  %v1725 = vadd.s32 %v1724, 120
  %1726 = vset.pattern.permute.xlu0 %v1725
  %1727 = vperm.xlu0 %1726, %v1704
  %v1728 = vpop.permute.xlu0 %1727
  %v1729 = vperm.slane %v1586, 4
  %v1730 = vlaneseq
  %v1731 = vshrl.u32 %v1730, 7
  %v1732 = vadd.s32 %v1731, 96
  %1733 = vset.pattern.permute.xlu0 %v1732
  %1734 = vperm.xlu0 %1733, %v1729
  %v1735 = vpop.permute.xlu0 %1734
  %v1736 = vlaneseq
  %v1737 = vshrl.u32 %v1736, 7
  %v1738 = vadd.s32 %v1737, 104
  %1739 = vset.pattern.permute.xlu0 %v1738
  %1740 = vperm.xlu0 %1739, %v1729
  %v1741 = vpop.permute.xlu0 %1740
  %v1742 = vlaneseq
  %v1743 = vshrl.u32 %v1742, 7
  %v1744 = vadd.s32 %v1743, 112
  %1745 = vset.pattern.permute.xlu0 %v1744
  %1746 = vperm.xlu0 %1745, %v1729
  %v1747 = vpop.permute.xlu0 %1746
  %v1748 = vlaneseq
  %v1749 = vshrl.u32 %v1748, 7
  %v1750 = vadd.s32 %v1749, 120
  %1751 = vset.pattern.permute.xlu0 %v1750
  %1752 = vperm.xlu0 %1751, %v1729
  %v1753 = vpop.permute.xlu0 %1752
  %v1754 = vperm.slane %v1586, 5
  %v1755 = vlaneseq
  %v1756 = vshrl.u32 %v1755, 7
  %v1757 = vadd.s32 %v1756, 96
  %1758 = vset.pattern.permute.xlu0 %v1757
  %1759 = vperm.xlu0 %1758, %v1754
  %v1760 = vpop.permute.xlu0 %1759
  %v1761 = vlaneseq
  %v1762 = vshrl.u32 %v1761, 7
  %v1763 = vadd.s32 %v1762, 104
  %1764 = vset.pattern.permute.xlu0 %v1763
  %1765 = vperm.xlu0 %1764, %v1754
  %v1766 = vpop.permute.xlu0 %1765
  %v1767 = vlaneseq
  %v1768 = vshrl.u32 %v1767, 7
  %v1769 = vadd.s32 %v1768, 112
  %1770 = vset.pattern.permute.xlu0 %v1769
  %1771 = vperm.xlu0 %1770, %v1754
  %v1772 = vpop.permute.xlu0 %1771
  %v1773 = vlaneseq
  %v1774 = vshrl.u32 %v1773, 7
  %v1775 = vadd.s32 %v1774, 120
  %1776 = vset.pattern.permute.xlu0 %v1775
  %1777 = vperm.xlu0 %1776, %v1754
  %v1778 = vpop.permute.xlu0 %1777
  %v1779 = vperm.slane %v1586, 6
  %v1780 = vlaneseq
  %v1781 = vshrl.u32 %v1780, 7
  %v1782 = vadd.s32 %v1781, 96
  %1783 = vset.pattern.permute.xlu0 %v1782
  %1784 = vperm.xlu0 %1783, %v1779
  %v1785 = vpop.permute.xlu0 %1784
  %v1786 = vlaneseq
  %v1787 = vshrl.u32 %v1786, 7
  %v1788 = vadd.s32 %v1787, 104
  %1789 = vset.pattern.permute.xlu0 %v1788
  %1790 = vperm.xlu0 %1789, %v1779
  %v1791 = vpop.permute.xlu0 %1790
  %v1792 = vlaneseq
  %v1793 = vshrl.u32 %v1792, 7
  %v1794 = vadd.s32 %v1793, 112
  %1795 = vset.pattern.permute.xlu0 %v1794
  %1796 = vperm.xlu0 %1795, %v1779
  %v1797 = vpop.permute.xlu0 %1796
  %v1798 = vlaneseq
  %v1799 = vshrl.u32 %v1798, 7
  %v1800 = vadd.s32 %v1799, 120
  %1801 = vset.pattern.permute.xlu0 %v1800
  %1802 = vperm.xlu0 %1801, %v1779
  %v1803 = vpop.permute.xlu0 %1802
  %v1804 = vperm.slane %v1586, 7
  %v1805 = vlaneseq
  %v1806 = vshrl.u32 %v1805, 7
  %v1807 = vadd.s32 %v1806, 96
  %1808 = vset.pattern.permute.xlu0 %v1807
  %1809 = vperm.xlu0 %1808, %v1804
  %v1810 = vpop.permute.xlu0 %1809
  %v1811 = vlaneseq
  %v1812 = vshrl.u32 %v1811, 7
  %v1813 = vadd.s32 %v1812, 104
  %1814 = vset.pattern.permute.xlu0 %v1813
  %1815 = vperm.xlu0 %1814, %v1804
  %v1816 = vpop.permute.xlu0 %1815
  %v1817 = vlaneseq
  %v1818 = vshrl.u32 %v1817, 7
  %v1819 = vadd.s32 %v1818, 112
  %1820 = vset.pattern.permute.xlu0 %v1819
  %1821 = vperm.xlu0 %1820, %v1804
  %v1822 = vpop.permute.xlu0 %1821
  %v1823 = vlaneseq
  %v1824 = vshrl.u32 %v1823, 7
  %v1825 = vadd.s32 %v1824, 120
  %1826 = vset.pattern.permute.xlu0 %v1825
  %1827 = vperm.xlu0 %1826, %v1804
  %v1828 = vpop.permute.xlu0 %1827
  %v1829 = vperm.slane %v1587, 0
  %v1830 = vlaneseq
  %v1831 = vshrl.u32 %v1830, 7
  %v1832 = vadd.s32 %v1831, 96
  %1833 = vset.pattern.permute.xlu0 %v1832
  %1834 = vperm.xlu0 %1833, %v1829
  %v1835 = vpop.permute.xlu0 %1834
  %v1836 = vlaneseq
  %v1837 = vshrl.u32 %v1836, 7
  %v1838 = vadd.s32 %v1837, 104
  %1839 = vset.pattern.permute.xlu0 %v1838
  %1840 = vperm.xlu0 %1839, %v1829
  %v1841 = vpop.permute.xlu0 %1840
  %v1842 = vlaneseq
  %v1843 = vshrl.u32 %v1842, 7
  %v1844 = vadd.s32 %v1843, 112
  %1845 = vset.pattern.permute.xlu0 %v1844
  %1846 = vperm.xlu0 %1845, %v1829
  %v1847 = vpop.permute.xlu0 %1846
  %v1848 = vlaneseq
  %v1849 = vshrl.u32 %v1848, 7
  %v1850 = vadd.s32 %v1849, 120
  %1851 = vset.pattern.permute.xlu0 %v1850
  %1852 = vperm.xlu0 %1851, %v1829
  %v1853 = vpop.permute.xlu0 %1852
  %v1854 = vperm.slane %v1587, 1
  %v1855 = vlaneseq
  %v1856 = vshrl.u32 %v1855, 7
  %v1857 = vadd.s32 %v1856, 96
  %1858 = vset.pattern.permute.xlu0 %v1857
  %1859 = vperm.xlu0 %1858, %v1854
  %v1860 = vpop.permute.xlu0 %1859
  %v1861 = vlaneseq
  %v1862 = vshrl.u32 %v1861, 7
  %v1863 = vadd.s32 %v1862, 104
  %1864 = vset.pattern.permute.xlu0 %v1863
  %1865 = vperm.xlu0 %1864, %v1854
  %v1866 = vpop.permute.xlu0 %1865
  %v1867 = vlaneseq
  %v1868 = vshrl.u32 %v1867, 7
  %v1869 = vadd.s32 %v1868, 112
  %1870 = vset.pattern.permute.xlu0 %v1869
  %1871 = vperm.xlu0 %1870, %v1854
  %v1872 = vpop.permute.xlu0 %1871
  %v1873 = vlaneseq
  %v1874 = vshrl.u32 %v1873, 7
  %v1875 = vadd.s32 %v1874, 120
  %1876 = vset.pattern.permute.xlu0 %v1875
  %1877 = vperm.xlu0 %1876, %v1854
  %v1878 = vpop.permute.xlu0 %1877
  %v1879 = vperm.slane %v1587, 2
  %v1880 = vlaneseq
  %v1881 = vshrl.u32 %v1880, 7
  %v1882 = vadd.s32 %v1881, 96
  %1883 = vset.pattern.permute.xlu0 %v1882
  %1884 = vperm.xlu0 %1883, %v1879
  %v1885 = vpop.permute.xlu0 %1884
  %v1886 = vlaneseq
  %v1887 = vshrl.u32 %v1886, 7
  %v1888 = vadd.s32 %v1887, 104
  %1889 = vset.pattern.permute.xlu0 %v1888
  %1890 = vperm.xlu0 %1889, %v1879
  %v1891 = vpop.permute.xlu0 %1890
  %v1892 = vlaneseq
  %v1893 = vshrl.u32 %v1892, 7
  %v1894 = vadd.s32 %v1893, 112
  %1895 = vset.pattern.permute.xlu0 %v1894
  %1896 = vperm.xlu0 %1895, %v1879
  %v1897 = vpop.permute.xlu0 %1896
  %v1898 = vlaneseq
  %v1899 = vshrl.u32 %v1898, 7
  %v1900 = vadd.s32 %v1899, 120
  %1901 = vset.pattern.permute.xlu0 %v1900
  %1902 = vperm.xlu0 %1901, %v1879
  %v1903 = vpop.permute.xlu0 %1902
  %v1904 = vperm.slane %v1587, 3
  %v1905 = vlaneseq
  %v1906 = vshrl.u32 %v1905, 7
  %v1907 = vadd.s32 %v1906, 96
  %1908 = vset.pattern.permute.xlu0 %v1907
  %1909 = vperm.xlu0 %1908, %v1904
  %v1910 = vpop.permute.xlu0 %1909
  %v1911 = vlaneseq
  %v1912 = vshrl.u32 %v1911, 7
  %v1913 = vadd.s32 %v1912, 104
  %1914 = vset.pattern.permute.xlu0 %v1913
  %1915 = vperm.xlu0 %1914, %v1904
  %v1916 = vpop.permute.xlu0 %1915
  %v1917 = vlaneseq
  %v1918 = vshrl.u32 %v1917, 7
  %v1919 = vadd.s32 %v1918, 112
  %1920 = vset.pattern.permute.xlu0 %v1919
  %1921 = vperm.xlu0 %1920, %v1904
  %v1922 = vpop.permute.xlu0 %1921
  %v1923 = vlaneseq
  %v1924 = vshrl.u32 %v1923, 7
  %v1925 = vadd.s32 %v1924, 120
  %1926 = vset.pattern.permute.xlu0 %v1925
  %1927 = vperm.xlu0 %1926, %v1904
  %v1928 = vpop.permute.xlu0 %1927
  %v1929 = vperm.slane %v1587, 4
  %v1930 = vlaneseq
  %v1931 = vshrl.u32 %v1930, 7
  %v1932 = vadd.s32 %v1931, 96
  %1933 = vset.pattern.permute.xlu0 %v1932
  %1934 = vperm.xlu0 %1933, %v1929
  %v1935 = vpop.permute.xlu0 %1934
  %v1936 = vlaneseq
  %v1937 = vshrl.u32 %v1936, 7
  %v1938 = vadd.s32 %v1937, 104
  %1939 = vset.pattern.permute.xlu0 %v1938
  %1940 = vperm.xlu0 %1939, %v1929
  %v1941 = vpop.permute.xlu0 %1940
  %v1942 = vlaneseq
  %v1943 = vshrl.u32 %v1942, 7
  %v1944 = vadd.s32 %v1943, 112
  %1945 = vset.pattern.permute.xlu0 %v1944
  %1946 = vperm.xlu0 %1945, %v1929
  %v1947 = vpop.permute.xlu0 %1946
  %v1948 = vlaneseq
  %v1949 = vshrl.u32 %v1948, 7
  %v1950 = vadd.s32 %v1949, 120
  %1951 = vset.pattern.permute.xlu0 %v1950
  %1952 = vperm.xlu0 %1951, %v1929
  %v1953 = vpop.permute.xlu0 %1952
  %v1954 = vperm.slane %v1587, 5
  %v1955 = vlaneseq
  %v1956 = vshrl.u32 %v1955, 7
  %v1957 = vadd.s32 %v1956, 96
  %1958 = vset.pattern.permute.xlu0 %v1957
  %1959 = vperm.xlu0 %1958, %v1954
  %v1960 = vpop.permute.xlu0 %1959
  %v1961 = vlaneseq
  %v1962 = vshrl.u32 %v1961, 7
  %v1963 = vadd.s32 %v1962, 104
  %1964 = vset.pattern.permute.xlu0 %v1963
  %1965 = vperm.xlu0 %1964, %v1954
  %v1966 = vpop.permute.xlu0 %1965
  %v1967 = vlaneseq
  %v1968 = vshrl.u32 %v1967, 7
  %v1969 = vadd.s32 %v1968, 112
  %1970 = vset.pattern.permute.xlu0 %v1969
  %1971 = vperm.xlu0 %1970, %v1954
  %v1972 = vpop.permute.xlu0 %1971
  %v1973 = vlaneseq
  %v1974 = vshrl.u32 %v1973, 7
  %v1975 = vadd.s32 %v1974, 120
  %1976 = vset.pattern.permute.xlu0 %v1975
  %1977 = vperm.xlu0 %1976, %v1954
  %v1978 = vpop.permute.xlu0 %1977
  %v1979 = vperm.slane %v1587, 6
  %v1980 = vlaneseq
  %v1981 = vshrl.u32 %v1980, 7
  %v1982 = vadd.s32 %v1981, 96
  %1983 = vset.pattern.permute.xlu0 %v1982
  %1984 = vperm.xlu0 %1983, %v1979
  %v1985 = vpop.permute.xlu0 %1984
  %v1986 = vlaneseq
  %v1987 = vshrl.u32 %v1986, 7
  %v1988 = vadd.s32 %v1987, 104
  %1989 = vset.pattern.permute.xlu0 %v1988
  %1990 = vperm.xlu0 %1989, %v1979
  %v1991 = vpop.permute.xlu0 %1990
  %v1992 = vlaneseq
  %v1993 = vshrl.u32 %v1992, 7
  %v1994 = vadd.s32 %v1993, 112
  %1995 = vset.pattern.permute.xlu0 %v1994
  %1996 = vperm.xlu0 %1995, %v1979
  %v1997 = vpop.permute.xlu0 %1996
  %v1998 = vlaneseq
  %v1999 = vshrl.u32 %v1998, 7
  %v2000 = vadd.s32 %v1999, 120
  %2001 = vset.pattern.permute.xlu0 %v2000
  %2002 = vperm.xlu0 %2001, %v1979
  %v2003 = vpop.permute.xlu0 %2002
  %v2004 = vperm.slane %v1587, 7
  %v2005 = vlaneseq
  %v2006 = vshrl.u32 %v2005, 7
  %v2007 = vadd.s32 %v2006, 96
  %2008 = vset.pattern.permute.xlu0 %v2007
  %2009 = vperm.xlu0 %2008, %v2004
  %v2010 = vpop.permute.xlu0 %2009
  %v2011 = vlaneseq
  %v2012 = vshrl.u32 %v2011, 7
  %v2013 = vadd.s32 %v2012, 104
  %2014 = vset.pattern.permute.xlu0 %v2013
  %2015 = vperm.xlu0 %2014, %v2004
  %v2016 = vpop.permute.xlu0 %2015
  %v2017 = vlaneseq
  %v2018 = vshrl.u32 %v2017, 7
  %v2019 = vadd.s32 %v2018, 112
  %2020 = vset.pattern.permute.xlu0 %v2019
  %2021 = vperm.xlu0 %2020, %v2004
  %v2022 = vpop.permute.xlu0 %2021
  %v2023 = vlaneseq
  %v2024 = vshrl.u32 %v2023, 7
  %v2025 = vadd.s32 %v2024, 120
  %2026 = vset.pattern.permute.xlu0 %v2025
  %2027 = vperm.xlu0 %2026, %v2004
  %v2028 = vpop.permute.xlu0 %2027
  %v2031 = vrot.slane %v1586, 1
  %v2032 = vrot.slane %v1586, 2
  %v2033 = vrot.slane %v1586, 3
  %v2034 = vrot.slane %v1586, 4
  %v2035 = vrot.slane %v1586, 5
  %v2036 = vrot.slane %v1586, 6
  %v2037 = vrot.slane %v1586, 7
  %v2038 = vrot.slane %v1587, 1
  %v2039 = vrot.slane %v1587, 2
  %v2040 = vrot.slane %v1587, 3
  %v2041 = vrot.slane %v1587, 4
  %v2042 = vrot.slane %v1587, 5
  %v2043 = vrot.slane %v1587, 6
  %v2044 = vrot.slane %v1587, 7
  %v2045 = vperm.slane %v1586, 0
  %v2046 = vperm.slane %v2031, 0
  %v2047 = vperm.slane %v2032, 0
  %v2048 = vperm.slane %v2033, 0
  %v2049 = vperm.slane %v2034, 0
  %v2050 = vperm.slane %v2035, 0
  %v2051 = vperm.slane %v2036, 0
  %v2052 = vperm.slane %v2037, 0
  %v2053 = vperm.slane %v1587, 0
  %v2054 = vperm.slane %v2038, 0
  %v2055 = vperm.slane %v2039, 0
  %v2056 = vperm.slane %v2040, 0
  %v2057 = vperm.slane %v2041, 0
  %v2058 = vperm.slane %v2042, 0
  %v2059 = vperm.slane %v2043, 0
  %v2060 = vperm.slane %v2044, 0
  %v2077 = vmul.f32 %v1635, %v2045
  %v2078 = vmul.f32 %v1641, %v2045
  %v2079 = vmul.f32 %v1647, %v2045
  %v2080 = vmul.f32 %v1653, %v2045
  %v2081 = vmul.f32 %v1660, %v2046
  %v2082 = vmul.f32 %v1666, %v2046
  %v2083 = vmul.f32 %v1672, %v2046
  %v2084 = vmul.f32 %v1678, %v2046
  %v2085 = vmul.f32 %v1685, %v2047
  %v2086 = vmul.f32 %v1691, %v2047
  %v2087 = vmul.f32 %v1697, %v2047
  %v2088 = vmul.f32 %v1703, %v2047
  %v2089 = vmul.f32 %v1710, %v2048
  %v2090 = vmul.f32 %v1716, %v2048
  %v2091 = vmul.f32 %v1722, %v2048
  %v2092 = vmul.f32 %v1728, %v2048
  %v2093 = vmul.f32 %v1735, %v2049
  %v2094 = vmul.f32 %v1741, %v2049
  %v2095 = vmul.f32 %v1747, %v2049
  %v2096 = vmul.f32 %v1753, %v2049
  %v2097 = vmul.f32 %v1760, %v2050
  %v2098 = vmul.f32 %v1766, %v2050
  %v2099 = vmul.f32 %v1772, %v2050
  %v2100 = vmul.f32 %v1778, %v2050
  %v2101 = vmul.f32 %v1785, %v2051
  %v2102 = vmul.f32 %v1791, %v2051
  %v2103 = vmul.f32 %v1797, %v2051
  %v2104 = vmul.f32 %v1803, %v2051
  %v2105 = vmul.f32 %v1810, %v2052
  %v2106 = vmul.f32 %v1816, %v2052
  %v2107 = vmul.f32 %v1822, %v2052
  %v2108 = vmul.f32 %v1828, %v2052
  %v2109 = vmul.f32 %v1835, %v2053
  %v2110 = vmul.f32 %v1841, %v2053
  %v2111 = vmul.f32 %v1847, %v2053
  %v2112 = vmul.f32 %v1853, %v2053
  %v2113 = vmul.f32 %v1860, %v2054
  %v2114 = vmul.f32 %v1866, %v2054
  %v2115 = vmul.f32 %v1872, %v2054
  %v2116 = vmul.f32 %v1878, %v2054
  %v2117 = vmul.f32 %v1885, %v2055
  %v2118 = vmul.f32 %v1891, %v2055
  %v2119 = vmul.f32 %v1897, %v2055
  %v2120 = vmul.f32 %v1903, %v2055
  %v2121 = vmul.f32 %v1910, %v2056
  %v2122 = vmul.f32 %v1916, %v2056
  %v2123 = vmul.f32 %v1922, %v2056
  %v2124 = vmul.f32 %v1928, %v2056
  %v2125 = vmul.f32 %v1935, %v2057
  %v2126 = vmul.f32 %v1941, %v2057
  %v2127 = vmul.f32 %v1947, %v2057
  %v2128 = vmul.f32 %v1953, %v2057
  %v2129 = vmul.f32 %v1960, %v2058
  %v2130 = vmul.f32 %v1966, %v2058
  %v2131 = vmul.f32 %v1972, %v2058
  %v2132 = vmul.f32 %v1978, %v2058
  %v2133 = vmul.f32 %v1985, %v2059
  %v2134 = vmul.f32 %v1991, %v2059
  %v2135 = vmul.f32 %v1997, %v2059
  %v2136 = vmul.f32 %v2003, %v2059
  %v2137 = vmul.f32 %v2010, %v2060
  %v2138 = vmul.f32 %v2016, %v2060
  %v2139 = vmul.f32 %v2022, %v2060
  %v2140 = vmul.f32 %v2028, %v2060
  %2205 = vrot.lane.b32.xlu0 %v2077, 64
  %v2206 = vpop.permute.xlu0 %2205
  %2207 = vrot.lane.b32.xlu0 %v2078, 64
  %v2208 = vpop.permute.xlu0 %2207
  %2209 = vrot.lane.b32.xlu0 %v2079, 64
  %v2210 = vpop.permute.xlu0 %2209
  %2211 = vrot.lane.b32.xlu0 %v2080, 64
  %v2212 = vpop.permute.xlu0 %2211
  %2213 = vrot.lane.b32.xlu0 %v2081, 64
  %v2214 = vpop.permute.xlu0 %2213
  %2215 = vrot.lane.b32.xlu0 %v2082, 64
  %v2216 = vpop.permute.xlu0 %2215
  %2217 = vrot.lane.b32.xlu0 %v2083, 64
  %v2218 = vpop.permute.xlu0 %2217
  %2219 = vrot.lane.b32.xlu0 %v2084, 64
  %v2220 = vpop.permute.xlu0 %2219
  %2221 = vrot.lane.b32.xlu0 %v2085, 64
  %v2222 = vpop.permute.xlu0 %2221
  %2223 = vrot.lane.b32.xlu0 %v2086, 64
  %v2224 = vpop.permute.xlu0 %2223
  %2225 = vrot.lane.b32.xlu0 %v2087, 64
  %v2226 = vpop.permute.xlu0 %2225
  %2227 = vrot.lane.b32.xlu0 %v2088, 64
  %v2228 = vpop.permute.xlu0 %2227
  %2229 = vrot.lane.b32.xlu0 %v2089, 64
  %v2230 = vpop.permute.xlu0 %2229
  %2231 = vrot.lane.b32.xlu0 %v2090, 64
  %v2232 = vpop.permute.xlu0 %2231
  %2233 = vrot.lane.b32.xlu0 %v2091, 64
  %v2234 = vpop.permute.xlu0 %2233
  %2235 = vrot.lane.b32.xlu0 %v2092, 64
  %v2236 = vpop.permute.xlu0 %2235
  %2237 = vrot.lane.b32.xlu0 %v2093, 64
  %v2238 = vpop.permute.xlu0 %2237
  %2239 = vrot.lane.b32.xlu0 %v2094, 64
  %v2240 = vpop.permute.xlu0 %2239
  %2241 = vrot.lane.b32.xlu0 %v2095, 64
  %v2242 = vpop.permute.xlu0 %2241
  %2243 = vrot.lane.b32.xlu0 %v2096, 64
  %v2244 = vpop.permute.xlu0 %2243
  %2245 = vrot.lane.b32.xlu0 %v2097, 64
  %v2246 = vpop.permute.xlu0 %2245
  %2247 = vrot.lane.b32.xlu0 %v2098, 64
  %v2248 = vpop.permute.xlu0 %2247
  %2249 = vrot.lane.b32.xlu0 %v2099, 64
  %v2250 = vpop.permute.xlu0 %2249
  %2251 = vrot.lane.b32.xlu0 %v2100, 64
  %v2252 = vpop.permute.xlu0 %2251
  %2253 = vrot.lane.b32.xlu0 %v2101, 64
  %v2254 = vpop.permute.xlu0 %2253
  %2255 = vrot.lane.b32.xlu0 %v2102, 64
  %v2256 = vpop.permute.xlu0 %2255
  %2257 = vrot.lane.b32.xlu0 %v2103, 64
  %v2258 = vpop.permute.xlu0 %2257
  %2259 = vrot.lane.b32.xlu0 %v2104, 64
  %v2260 = vpop.permute.xlu0 %2259
  %2261 = vrot.lane.b32.xlu0 %v2105, 64
  %v2262 = vpop.permute.xlu0 %2261
  %2263 = vrot.lane.b32.xlu0 %v2106, 64
  %v2264 = vpop.permute.xlu0 %2263
  %2265 = vrot.lane.b32.xlu0 %v2107, 64
  %v2266 = vpop.permute.xlu0 %2265
  %2267 = vrot.lane.b32.xlu0 %v2108, 64
  %v2268 = vpop.permute.xlu0 %2267
  %2269 = vrot.lane.b32.xlu0 %v2109, 64
  %v2270 = vpop.permute.xlu0 %2269
  %2271 = vrot.lane.b32.xlu0 %v2110, 64
  %v2272 = vpop.permute.xlu0 %2271
  %2273 = vrot.lane.b32.xlu0 %v2111, 64
  %v2274 = vpop.permute.xlu0 %2273
  %2275 = vrot.lane.b32.xlu0 %v2112, 64
  %v2276 = vpop.permute.xlu0 %2275
  %2277 = vrot.lane.b32.xlu0 %v2113, 64
  %v2278 = vpop.permute.xlu0 %2277
  %2279 = vrot.lane.b32.xlu0 %v2114, 64
  %v2280 = vpop.permute.xlu0 %2279
  %2281 = vrot.lane.b32.xlu0 %v2115, 64
  %v2282 = vpop.permute.xlu0 %2281
  %2283 = vrot.lane.b32.xlu0 %v2116, 64
  %v2284 = vpop.permute.xlu0 %2283
  %2285 = vrot.lane.b32.xlu0 %v2117, 64
  %v2286 = vpop.permute.xlu0 %2285
  %2287 = vrot.lane.b32.xlu0 %v2118, 64
  %v2288 = vpop.permute.xlu0 %2287
  %2289 = vrot.lane.b32.xlu0 %v2119, 64
  %v2290 = vpop.permute.xlu0 %2289
  %2291 = vrot.lane.b32.xlu0 %v2120, 64
  %v2292 = vpop.permute.xlu0 %2291
  %2293 = vrot.lane.b32.xlu0 %v2121, 64
  %v2294 = vpop.permute.xlu0 %2293
  %2295 = vrot.lane.b32.xlu0 %v2122, 64
  %v2296 = vpop.permute.xlu0 %2295
  %2297 = vrot.lane.b32.xlu0 %v2123, 64
  %v2298 = vpop.permute.xlu0 %2297
  %2299 = vrot.lane.b32.xlu0 %v2124, 64
  %v2300 = vpop.permute.xlu0 %2299
  %2301 = vrot.lane.b32.xlu0 %v2125, 64
  %v2302 = vpop.permute.xlu0 %2301
  %2303 = vrot.lane.b32.xlu0 %v2126, 64
  %v2304 = vpop.permute.xlu0 %2303
  %2305 = vrot.lane.b32.xlu0 %v2127, 64
  %v2306 = vpop.permute.xlu0 %2305
  %2307 = vrot.lane.b32.xlu0 %v2128, 64
  %v2308 = vpop.permute.xlu0 %2307
  %2309 = vrot.lane.b32.xlu0 %v2129, 64
  %v2310 = vpop.permute.xlu0 %2309
  %2311 = vrot.lane.b32.xlu0 %v2130, 64
  %v2312 = vpop.permute.xlu0 %2311
  %2313 = vrot.lane.b32.xlu0 %v2131, 64
  %v2314 = vpop.permute.xlu0 %2313
  %2315 = vrot.lane.b32.xlu0 %v2132, 64
  %v2316 = vpop.permute.xlu0 %2315
  %2317 = vrot.lane.b32.xlu0 %v2133, 64
  %v2318 = vpop.permute.xlu0 %2317
  %2319 = vrot.lane.b32.xlu0 %v2134, 64
  %v2320 = vpop.permute.xlu0 %2319
  %2321 = vrot.lane.b32.xlu0 %v2135, 64
  %v2322 = vpop.permute.xlu0 %2321
  %2323 = vrot.lane.b32.xlu0 %v2136, 64
  %v2324 = vpop.permute.xlu0 %2323
  %2325 = vrot.lane.b32.xlu0 %v2137, 64
  %v2326 = vpop.permute.xlu0 %2325
  %2327 = vrot.lane.b32.xlu0 %v2138, 64
  %v2328 = vpop.permute.xlu0 %2327
  %2329 = vrot.lane.b32.xlu0 %v2139, 64
  %v2330 = vpop.permute.xlu0 %2329
  %2331 = vrot.lane.b32.xlu0 %v2140, 64
  %v2332 = vpop.permute.xlu0 %2331
  %v2397 = vrot.slane %v2222, 4
  %vm2398 = vcmask 1047556
  %v2399 = vsel %vm2398, %v2397, %v2206
  %v2400 = vrot.slane %v2206, 4
  %v2401 = vsel %vm2398, %v2222, %v2400
  %v2403 = vunpack.c.l.s4 1983009808
  %v2404 = vunpack.c.0.s8 %v2403
  %v2405 = vperm.slane %v2399, %v2404
  %v2407 = vunpack.c.l.s4 1983009808
  %v2408 = vunpack.c.0.s8 %v2407
  %v2409 = vperm.slane %v2401, %v2408
  %v2410 = vrot.slane %v2230, 4
  %v2411 = vsel %vm2398, %v2410, %v2214
  %v2412 = vrot.slane %v2214, 4
  %v2413 = vsel %vm2398, %v2230, %v2412
  %v2415 = vunpack.c.l.s4 1983009808
  %v2416 = vunpack.c.0.s8 %v2415
  %v2417 = vperm.slane %v2411, %v2416
  %v2419 = vunpack.c.l.s4 1983009808
  %v2420 = vunpack.c.0.s8 %v2419
  %v2421 = vperm.slane %v2413, %v2420
  %v2422 = vrot.slane %v2254, 4
  %v2423 = vsel %vm2398, %v2422, %v2238
  %v2424 = vrot.slane %v2238, 4
  %v2425 = vsel %vm2398, %v2254, %v2424
  %v2427 = vunpack.c.l.s4 1983009808
  %v2428 = vunpack.c.0.s8 %v2427
  %v2429 = vperm.slane %v2423, %v2428
  %v2431 = vunpack.c.l.s4 1983009808
  %v2432 = vunpack.c.0.s8 %v2431
  %v2433 = vperm.slane %v2425, %v2432
  %v2434 = vrot.slane %v2262, 4
  %v2435 = vsel %vm2398, %v2434, %v2246
  %v2436 = vrot.slane %v2246, 4
  %v2437 = vsel %vm2398, %v2262, %v2436
  %v2439 = vunpack.c.l.s4 1983009808
  %v2440 = vunpack.c.0.s8 %v2439
  %v2441 = vperm.slane %v2435, %v2440
  %v2443 = vunpack.c.l.s4 1983009808
  %v2444 = vunpack.c.0.s8 %v2443
  %v2445 = vperm.slane %v2437, %v2444
  %v2446 = vrot.slane %v2417, 4
  %v2447 = vsel %vm2398, %v2446, %v2405
  %v2448 = vrot.slane %v2405, 4
  %v2449 = vsel %vm2398, %v2417, %v2448
  %v2451 = vunpack.c.l.s4 1934713408
  %v2452 = vunpack.c.0.s8 %v2451
  %v2453 = vperm.slane %v2447, %v2452
  %v2455 = vunpack.c.l.s4 1934713408
  %v2456 = vunpack.c.0.s8 %v2455
  %v2457 = vperm.slane %v2449, %v2456
  %v2458 = vrot.slane %v2421, 4
  %v2459 = vsel %vm2398, %v2458, %v2409
  %v2460 = vrot.slane %v2409, 4
  %v2461 = vsel %vm2398, %v2421, %v2460
  %v2463 = vunpack.c.l.s4 1934713408
  %v2464 = vunpack.c.0.s8 %v2463
  %v2465 = vperm.slane %v2459, %v2464
  %v2467 = vunpack.c.l.s4 1934713408
  %v2468 = vunpack.c.0.s8 %v2467
  %v2469 = vperm.slane %v2461, %v2468
  %v2470 = vrot.slane %v2441, 4
  %v2471 = vsel %vm2398, %v2470, %v2429
  %v2472 = vrot.slane %v2429, 4
  %v2473 = vsel %vm2398, %v2441, %v2472
  %v2475 = vunpack.c.l.s4 1934713408
  %v2476 = vunpack.c.0.s8 %v2475
  %v2477 = vperm.slane %v2471, %v2476
  %v2479 = vunpack.c.l.s4 1934713408
  %v2480 = vunpack.c.0.s8 %v2479
  %v2481 = vperm.slane %v2473, %v2480
  %v2482 = vrot.slane %v2445, 4
  %v2483 = vsel %vm2398, %v2482, %v2433
  %v2484 = vrot.slane %v2433, 4
  %v2485 = vsel %vm2398, %v2445, %v2484
  %v2487 = vunpack.c.l.s4 1934713408
  %v2488 = vunpack.c.0.s8 %v2487
  %v2489 = vperm.slane %v2483, %v2488
  %v2491 = vunpack.c.l.s4 1934713408
  %v2492 = vunpack.c.0.s8 %v2491
  %v2493 = vperm.slane %v2485, %v2492
  %v2494 = vrot.slane %v2477, 4
  %v2495 = vsel %vm2398, %v2494, %v2453
  %v2496 = vrot.slane %v2453, 4
  %v2497 = vsel %vm2398, %v2477, %v2496
  %v2498 = vrot.slane %v2481, 4
  %v2499 = vsel %vm2398, %v2498, %v2457
  %v2500 = vrot.slane %v2457, 4
  %v2501 = vsel %vm2398, %v2481, %v2500
  %v2502 = vrot.slane %v2489, 4
  %v2503 = vsel %vm2398, %v2502, %v2465
  %v2504 = vrot.slane %v2465, 4
  %v2505 = vsel %vm2398, %v2489, %v2504
  %v2506 = vrot.slane %v2493, 4
  %v2507 = vsel %vm2398, %v2506, %v2469
  %v2508 = vrot.slane %v2469, 4
  %v2509 = vsel %vm2398, %v2493, %v2508
  %v2510 = vrot.slane %v2286, 4
  %v2511 = vsel %vm2398, %v2510, %v2270
  %v2512 = vrot.slane %v2270, 4
  %v2513 = vsel %vm2398, %v2286, %v2512
  %v2515 = vunpack.c.l.s4 1983009808
  %v2516 = vunpack.c.0.s8 %v2515
  %v2517 = vperm.slane %v2511, %v2516
  %v2519 = vunpack.c.l.s4 1983009808
  %v2520 = vunpack.c.0.s8 %v2519
  %v2521 = vperm.slane %v2513, %v2520
  %v2522 = vrot.slane %v2294, 4
  %v2523 = vsel %vm2398, %v2522, %v2278
  %v2524 = vrot.slane %v2278, 4
  %v2525 = vsel %vm2398, %v2294, %v2524
  %v2527 = vunpack.c.l.s4 1983009808
  %v2528 = vunpack.c.0.s8 %v2527
  %v2529 = vperm.slane %v2523, %v2528
  %v2531 = vunpack.c.l.s4 1983009808
  %v2532 = vunpack.c.0.s8 %v2531
  %v2533 = vperm.slane %v2525, %v2532
  %v2534 = vrot.slane %v2318, 4
  %v2535 = vsel %vm2398, %v2534, %v2302
  %v2536 = vrot.slane %v2302, 4
  %v2537 = vsel %vm2398, %v2318, %v2536
  %v2539 = vunpack.c.l.s4 1983009808
  %v2540 = vunpack.c.0.s8 %v2539
  %v2541 = vperm.slane %v2535, %v2540
  %v2543 = vunpack.c.l.s4 1983009808
  %v2544 = vunpack.c.0.s8 %v2543
  %v2545 = vperm.slane %v2537, %v2544
  %v2546 = vrot.slane %v2326, 4
  %v2547 = vsel %vm2398, %v2546, %v2310
  %v2548 = vrot.slane %v2310, 4
  %v2549 = vsel %vm2398, %v2326, %v2548
  %v2551 = vunpack.c.l.s4 1983009808
  %v2552 = vunpack.c.0.s8 %v2551
  %v2553 = vperm.slane %v2547, %v2552
  %v2555 = vunpack.c.l.s4 1983009808
  %v2556 = vunpack.c.0.s8 %v2555
  %v2557 = vperm.slane %v2549, %v2556
  %v2558 = vrot.slane %v2529, 4
  %v2559 = vsel %vm2398, %v2558, %v2517
  %v2560 = vrot.slane %v2517, 4
  %v2561 = vsel %vm2398, %v2529, %v2560
  %v2563 = vunpack.c.l.s4 1934713408
  %v2564 = vunpack.c.0.s8 %v2563
  %v2565 = vperm.slane %v2559, %v2564
  %v2567 = vunpack.c.l.s4 1934713408
  %v2568 = vunpack.c.0.s8 %v2567
  %v2569 = vperm.slane %v2561, %v2568
  %v2570 = vrot.slane %v2533, 4
  %v2571 = vsel %vm2398, %v2570, %v2521
  %v2572 = vrot.slane %v2521, 4
  %v2573 = vsel %vm2398, %v2533, %v2572
  %v2575 = vunpack.c.l.s4 1934713408
  %v2576 = vunpack.c.0.s8 %v2575
  %v2577 = vperm.slane %v2571, %v2576
  %v2579 = vunpack.c.l.s4 1934713408
  %v2580 = vunpack.c.0.s8 %v2579
  %v2581 = vperm.slane %v2573, %v2580
  %v2582 = vrot.slane %v2553, 4
  %v2583 = vsel %vm2398, %v2582, %v2541
  %v2584 = vrot.slane %v2541, 4
  %v2585 = vsel %vm2398, %v2553, %v2584
  %v2587 = vunpack.c.l.s4 1934713408
  %v2588 = vunpack.c.0.s8 %v2587
  %v2589 = vperm.slane %v2583, %v2588
  %v2591 = vunpack.c.l.s4 1934713408
  %v2592 = vunpack.c.0.s8 %v2591
  %v2593 = vperm.slane %v2585, %v2592
  %v2594 = vrot.slane %v2557, 4
  %v2595 = vsel %vm2398, %v2594, %v2545
  %v2596 = vrot.slane %v2545, 4
  %v2597 = vsel %vm2398, %v2557, %v2596
  %v2599 = vunpack.c.l.s4 1934713408
  %v2600 = vunpack.c.0.s8 %v2599
  %v2601 = vperm.slane %v2595, %v2600
  %v2603 = vunpack.c.l.s4 1934713408
  %v2604 = vunpack.c.0.s8 %v2603
  %v2605 = vperm.slane %v2597, %v2604
  %v2606 = vrot.slane %v2589, 4
  %v2607 = vsel %vm2398, %v2606, %v2565
  %v2608 = vrot.slane %v2565, 4
  %v2609 = vsel %vm2398, %v2589, %v2608
  %v2610 = vrot.slane %v2593, 4
  %v2611 = vsel %vm2398, %v2610, %v2569
  %v2612 = vrot.slane %v2569, 4
  %v2613 = vsel %vm2398, %v2593, %v2612
  %v2614 = vrot.slane %v2601, 4
  %v2615 = vsel %vm2398, %v2614, %v2577
  %v2616 = vrot.slane %v2577, 4
  %v2617 = vsel %vm2398, %v2601, %v2616
  %v2618 = vrot.slane %v2605, 4
  %v2619 = vsel %vm2398, %v2618, %v2581
  %v2620 = vrot.slane %v2581, 4
  %v2621 = vsel %vm2398, %v2605, %v2620
  %v2622 = vrot.slane %v2224, 4
  %v2623 = vsel %vm2398, %v2622, %v2208
  %v2624 = vrot.slane %v2208, 4
  %v2625 = vsel %vm2398, %v2224, %v2624
  %v2627 = vunpack.c.l.s4 1983009808
  %v2628 = vunpack.c.0.s8 %v2627
  %v2629 = vperm.slane %v2623, %v2628
  %v2631 = vunpack.c.l.s4 1983009808
  %v2632 = vunpack.c.0.s8 %v2631
  %v2633 = vperm.slane %v2625, %v2632
  %v2634 = vrot.slane %v2232, 4
  %v2635 = vsel %vm2398, %v2634, %v2216
  %v2636 = vrot.slane %v2216, 4
  %v2637 = vsel %vm2398, %v2232, %v2636
  %v2639 = vunpack.c.l.s4 1983009808
  %v2640 = vunpack.c.0.s8 %v2639
  %v2641 = vperm.slane %v2635, %v2640
  %v2643 = vunpack.c.l.s4 1983009808
  %v2644 = vunpack.c.0.s8 %v2643
  %v2645 = vperm.slane %v2637, %v2644
  %v2646 = vrot.slane %v2256, 4
  %v2647 = vsel %vm2398, %v2646, %v2240
  %v2648 = vrot.slane %v2240, 4
  %v2649 = vsel %vm2398, %v2256, %v2648
  %v2651 = vunpack.c.l.s4 1983009808
  %v2652 = vunpack.c.0.s8 %v2651
  %v2653 = vperm.slane %v2647, %v2652
  %v2655 = vunpack.c.l.s4 1983009808
  %v2656 = vunpack.c.0.s8 %v2655
  %v2657 = vperm.slane %v2649, %v2656
  %v2658 = vrot.slane %v2264, 4
  %v2659 = vsel %vm2398, %v2658, %v2248
  %v2660 = vrot.slane %v2248, 4
  %v2661 = vsel %vm2398, %v2264, %v2660
  %v2663 = vunpack.c.l.s4 1983009808
  %v2664 = vunpack.c.0.s8 %v2663
  %v2665 = vperm.slane %v2659, %v2664
  %v2667 = vunpack.c.l.s4 1983009808
  %v2668 = vunpack.c.0.s8 %v2667
  %v2669 = vperm.slane %v2661, %v2668
  %v2670 = vrot.slane %v2641, 4
  %v2671 = vsel %vm2398, %v2670, %v2629
  %v2672 = vrot.slane %v2629, 4
  %v2673 = vsel %vm2398, %v2641, %v2672
  %v2675 = vunpack.c.l.s4 1934713408
  %v2676 = vunpack.c.0.s8 %v2675
  %v2677 = vperm.slane %v2671, %v2676
  %v2679 = vunpack.c.l.s4 1934713408
  %v2680 = vunpack.c.0.s8 %v2679
  %v2681 = vperm.slane %v2673, %v2680
  %v2682 = vrot.slane %v2645, 4
  %v2683 = vsel %vm2398, %v2682, %v2633
  %v2684 = vrot.slane %v2633, 4
  %v2685 = vsel %vm2398, %v2645, %v2684
  %v2687 = vunpack.c.l.s4 1934713408
  %v2688 = vunpack.c.0.s8 %v2687
  %v2689 = vperm.slane %v2683, %v2688
  %v2691 = vunpack.c.l.s4 1934713408
  %v2692 = vunpack.c.0.s8 %v2691
  %v2693 = vperm.slane %v2685, %v2692
  %v2694 = vrot.slane %v2665, 4
  %v2695 = vsel %vm2398, %v2694, %v2653
  %v2696 = vrot.slane %v2653, 4
  %v2697 = vsel %vm2398, %v2665, %v2696
  %v2699 = vunpack.c.l.s4 1934713408
  %v2700 = vunpack.c.0.s8 %v2699
  %v2701 = vperm.slane %v2695, %v2700
  %v2703 = vunpack.c.l.s4 1934713408
  %v2704 = vunpack.c.0.s8 %v2703
  %v2705 = vperm.slane %v2697, %v2704
  %v2706 = vrot.slane %v2669, 4
  %v2707 = vsel %vm2398, %v2706, %v2657
  %v2708 = vrot.slane %v2657, 4
  %v2709 = vsel %vm2398, %v2669, %v2708
  %v2711 = vunpack.c.l.s4 1934713408
  %v2712 = vunpack.c.0.s8 %v2711
  %v2713 = vperm.slane %v2707, %v2712
  %v2715 = vunpack.c.l.s4 1934713408
  %v2716 = vunpack.c.0.s8 %v2715
  %v2717 = vperm.slane %v2709, %v2716
  %v2718 = vrot.slane %v2701, 4
  %v2719 = vsel %vm2398, %v2718, %v2677
  %v2720 = vrot.slane %v2677, 4
  %v2721 = vsel %vm2398, %v2701, %v2720
  %v2722 = vrot.slane %v2705, 4
  %v2723 = vsel %vm2398, %v2722, %v2681
  %v2724 = vrot.slane %v2681, 4
  %v2725 = vsel %vm2398, %v2705, %v2724
  %v2726 = vrot.slane %v2713, 4
  %v2727 = vsel %vm2398, %v2726, %v2689
  %v2728 = vrot.slane %v2689, 4
  %v2729 = vsel %vm2398, %v2713, %v2728
  %v2730 = vrot.slane %v2717, 4
  %v2731 = vsel %vm2398, %v2730, %v2693
  %v2732 = vrot.slane %v2693, 4
  %v2733 = vsel %vm2398, %v2717, %v2732
  %v2734 = vrot.slane %v2288, 4
  %v2735 = vsel %vm2398, %v2734, %v2272
  %v2736 = vrot.slane %v2272, 4
  %v2737 = vsel %vm2398, %v2288, %v2736
  %v2739 = vunpack.c.l.s4 1983009808
  %v2740 = vunpack.c.0.s8 %v2739
  %v2741 = vperm.slane %v2735, %v2740
  %v2743 = vunpack.c.l.s4 1983009808
  %v2744 = vunpack.c.0.s8 %v2743
  %v2745 = vperm.slane %v2737, %v2744
  %v2746 = vrot.slane %v2296, 4
  %v2747 = vsel %vm2398, %v2746, %v2280
  %v2748 = vrot.slane %v2280, 4
  %v2749 = vsel %vm2398, %v2296, %v2748
  %v2751 = vunpack.c.l.s4 1983009808
  %v2752 = vunpack.c.0.s8 %v2751
  %v2753 = vperm.slane %v2747, %v2752
  %v2755 = vunpack.c.l.s4 1983009808
  %v2756 = vunpack.c.0.s8 %v2755
  %v2757 = vperm.slane %v2749, %v2756
  %v2758 = vrot.slane %v2320, 4
  %v2759 = vsel %vm2398, %v2758, %v2304
  %v2760 = vrot.slane %v2304, 4
  %v2761 = vsel %vm2398, %v2320, %v2760
  %v2763 = vunpack.c.l.s4 1983009808
  %v2764 = vunpack.c.0.s8 %v2763
  %v2765 = vperm.slane %v2759, %v2764
  %v2767 = vunpack.c.l.s4 1983009808
  %v2768 = vunpack.c.0.s8 %v2767
  %v2769 = vperm.slane %v2761, %v2768
  %v2770 = vrot.slane %v2328, 4
  %v2771 = vsel %vm2398, %v2770, %v2312
  %v2772 = vrot.slane %v2312, 4
  %v2773 = vsel %vm2398, %v2328, %v2772
  %v2775 = vunpack.c.l.s4 1983009808
  %v2776 = vunpack.c.0.s8 %v2775
  %v2777 = vperm.slane %v2771, %v2776
  %v2779 = vunpack.c.l.s4 1983009808
  %v2780 = vunpack.c.0.s8 %v2779
  %v2781 = vperm.slane %v2773, %v2780
  %v2782 = vrot.slane %v2753, 4
  %v2783 = vsel %vm2398, %v2782, %v2741
  %v2784 = vrot.slane %v2741, 4
  %v2785 = vsel %vm2398, %v2753, %v2784
  %v2787 = vunpack.c.l.s4 1934713408
  %v2788 = vunpack.c.0.s8 %v2787
  %v2789 = vperm.slane %v2783, %v2788
  %v2791 = vunpack.c.l.s4 1934713408
  %v2792 = vunpack.c.0.s8 %v2791
  %v2793 = vperm.slane %v2785, %v2792
  %v2794 = vrot.slane %v2757, 4
  %v2795 = vsel %vm2398, %v2794, %v2745
  %v2796 = vrot.slane %v2745, 4
  %v2797 = vsel %vm2398, %v2757, %v2796
  %v2799 = vunpack.c.l.s4 1934713408
  %v2800 = vunpack.c.0.s8 %v2799
  %v2801 = vperm.slane %v2795, %v2800
  %v2803 = vunpack.c.l.s4 1934713408
  %v2804 = vunpack.c.0.s8 %v2803
  %v2805 = vperm.slane %v2797, %v2804
  %v2806 = vrot.slane %v2777, 4
  %v2807 = vsel %vm2398, %v2806, %v2765
  %v2808 = vrot.slane %v2765, 4
  %v2809 = vsel %vm2398, %v2777, %v2808
  %v2811 = vunpack.c.l.s4 1934713408
  %v2812 = vunpack.c.0.s8 %v2811
  %v2813 = vperm.slane %v2807, %v2812
  %v2815 = vunpack.c.l.s4 1934713408
  %v2816 = vunpack.c.0.s8 %v2815
  %v2817 = vperm.slane %v2809, %v2816
  %v2818 = vrot.slane %v2781, 4
  %v2819 = vsel %vm2398, %v2818, %v2769
  %v2820 = vrot.slane %v2769, 4
  %v2821 = vsel %vm2398, %v2781, %v2820
  %v2823 = vunpack.c.l.s4 1934713408
  %v2824 = vunpack.c.0.s8 %v2823
  %v2825 = vperm.slane %v2819, %v2824
  %v2827 = vunpack.c.l.s4 1934713408
  %v2828 = vunpack.c.0.s8 %v2827
  %v2829 = vperm.slane %v2821, %v2828
  %v2830 = vrot.slane %v2813, 4
  %v2831 = vsel %vm2398, %v2830, %v2789
  %v2832 = vrot.slane %v2789, 4
  %v2833 = vsel %vm2398, %v2813, %v2832
  %v2834 = vrot.slane %v2817, 4
  %v2835 = vsel %vm2398, %v2834, %v2793
  %v2836 = vrot.slane %v2793, 4
  %v2837 = vsel %vm2398, %v2817, %v2836
  %v2838 = vrot.slane %v2825, 4
  %v2839 = vsel %vm2398, %v2838, %v2801
  %v2840 = vrot.slane %v2801, 4
  %v2841 = vsel %vm2398, %v2825, %v2840
  %v2842 = vrot.slane %v2829, 4
  %v2843 = vsel %vm2398, %v2842, %v2805
  %v2844 = vrot.slane %v2805, 4
  %v2845 = vsel %vm2398, %v2829, %v2844
  %v2846 = vrot.slane %v2226, 4
  %v2847 = vsel %vm2398, %v2846, %v2210
  %v2848 = vrot.slane %v2210, 4
  %v2849 = vsel %vm2398, %v2226, %v2848
  %v2851 = vunpack.c.l.s4 1983009808
  %v2852 = vunpack.c.0.s8 %v2851
  %v2853 = vperm.slane %v2847, %v2852
  %v2855 = vunpack.c.l.s4 1983009808
  %v2856 = vunpack.c.0.s8 %v2855
  %v2857 = vperm.slane %v2849, %v2856
  %v2858 = vrot.slane %v2234, 4
  %v2859 = vsel %vm2398, %v2858, %v2218
  %v2860 = vrot.slane %v2218, 4
  %v2861 = vsel %vm2398, %v2234, %v2860
  %v2863 = vunpack.c.l.s4 1983009808
  %v2864 = vunpack.c.0.s8 %v2863
  %v2865 = vperm.slane %v2859, %v2864
  %v2867 = vunpack.c.l.s4 1983009808
  %v2868 = vunpack.c.0.s8 %v2867
  %v2869 = vperm.slane %v2861, %v2868
  %v2870 = vrot.slane %v2258, 4
  %v2871 = vsel %vm2398, %v2870, %v2242
  %v2872 = vrot.slane %v2242, 4
  %v2873 = vsel %vm2398, %v2258, %v2872
  %v2875 = vunpack.c.l.s4 1983009808
  %v2876 = vunpack.c.0.s8 %v2875
  %v2877 = vperm.slane %v2871, %v2876
  %v2879 = vunpack.c.l.s4 1983009808
  %v2880 = vunpack.c.0.s8 %v2879
  %v2881 = vperm.slane %v2873, %v2880
  %v2882 = vrot.slane %v2266, 4
  %v2883 = vsel %vm2398, %v2882, %v2250
  %v2884 = vrot.slane %v2250, 4
  %v2885 = vsel %vm2398, %v2266, %v2884
  %v2887 = vunpack.c.l.s4 1983009808
  %v2888 = vunpack.c.0.s8 %v2887
  %v2889 = vperm.slane %v2883, %v2888
  %v2891 = vunpack.c.l.s4 1983009808
  %v2892 = vunpack.c.0.s8 %v2891
  %v2893 = vperm.slane %v2885, %v2892
  %v2894 = vrot.slane %v2865, 4
  %v2895 = vsel %vm2398, %v2894, %v2853
  %v2896 = vrot.slane %v2853, 4
  %v2897 = vsel %vm2398, %v2865, %v2896
  %v2899 = vunpack.c.l.s4 1934713408
  %v2900 = vunpack.c.0.s8 %v2899
  %v2901 = vperm.slane %v2895, %v2900
  %v2903 = vunpack.c.l.s4 1934713408
  %v2904 = vunpack.c.0.s8 %v2903
  %v2905 = vperm.slane %v2897, %v2904
  %v2906 = vrot.slane %v2869, 4
  %v2907 = vsel %vm2398, %v2906, %v2857
  %v2908 = vrot.slane %v2857, 4
  %v2909 = vsel %vm2398, %v2869, %v2908
  %v2911 = vunpack.c.l.s4 1934713408
  %v2912 = vunpack.c.0.s8 %v2911
  %v2913 = vperm.slane %v2907, %v2912
  %v2915 = vunpack.c.l.s4 1934713408
  %v2916 = vunpack.c.0.s8 %v2915
  %v2917 = vperm.slane %v2909, %v2916
  %v2918 = vrot.slane %v2889, 4
  %v2919 = vsel %vm2398, %v2918, %v2877
  %v2920 = vrot.slane %v2877, 4
  %v2921 = vsel %vm2398, %v2889, %v2920
  %v2923 = vunpack.c.l.s4 1934713408
  %v2924 = vunpack.c.0.s8 %v2923
  %v2925 = vperm.slane %v2919, %v2924
  %v2927 = vunpack.c.l.s4 1934713408
  %v2928 = vunpack.c.0.s8 %v2927
  %v2929 = vperm.slane %v2921, %v2928
  %v2930 = vrot.slane %v2893, 4
  %v2931 = vsel %vm2398, %v2930, %v2881
  %v2932 = vrot.slane %v2881, 4
  %v2933 = vsel %vm2398, %v2893, %v2932
  %v2935 = vunpack.c.l.s4 1934713408
  %v2936 = vunpack.c.0.s8 %v2935
  %v2937 = vperm.slane %v2931, %v2936
  %v2939 = vunpack.c.l.s4 1934713408
  %v2940 = vunpack.c.0.s8 %v2939
  %v2941 = vperm.slane %v2933, %v2940
  %v2942 = vrot.slane %v2925, 4
  %v2943 = vsel %vm2398, %v2942, %v2901
  %v2944 = vrot.slane %v2901, 4
  %v2945 = vsel %vm2398, %v2925, %v2944
  %v2946 = vrot.slane %v2929, 4
  %v2947 = vsel %vm2398, %v2946, %v2905
  %v2948 = vrot.slane %v2905, 4
  %v2949 = vsel %vm2398, %v2929, %v2948
  %v2950 = vrot.slane %v2937, 4
  %v2951 = vsel %vm2398, %v2950, %v2913
  %v2952 = vrot.slane %v2913, 4
  %v2953 = vsel %vm2398, %v2937, %v2952
  %v2954 = vrot.slane %v2941, 4
  %v2955 = vsel %vm2398, %v2954, %v2917
  %v2956 = vrot.slane %v2917, 4
  %v2957 = vsel %vm2398, %v2941, %v2956
  %v2958 = vrot.slane %v2290, 4
  %v2959 = vsel %vm2398, %v2958, %v2274
  %v2960 = vrot.slane %v2274, 4
  %v2961 = vsel %vm2398, %v2290, %v2960
  %v2963 = vunpack.c.l.s4 1983009808
  %v2964 = vunpack.c.0.s8 %v2963
  %v2965 = vperm.slane %v2959, %v2964
  %v2967 = vunpack.c.l.s4 1983009808
  %v2968 = vunpack.c.0.s8 %v2967
  %v2969 = vperm.slane %v2961, %v2968
  %v2970 = vrot.slane %v2298, 4
  %v2971 = vsel %vm2398, %v2970, %v2282
  %v2972 = vrot.slane %v2282, 4
  %v2973 = vsel %vm2398, %v2298, %v2972
  %v2975 = vunpack.c.l.s4 1983009808
  %v2976 = vunpack.c.0.s8 %v2975
  %v2977 = vperm.slane %v2971, %v2976
  %v2979 = vunpack.c.l.s4 1983009808
  %v2980 = vunpack.c.0.s8 %v2979
  %v2981 = vperm.slane %v2973, %v2980
  %v2982 = vrot.slane %v2322, 4
  %v2983 = vsel %vm2398, %v2982, %v2306
  %v2984 = vrot.slane %v2306, 4
  %v2985 = vsel %vm2398, %v2322, %v2984
  %v2987 = vunpack.c.l.s4 1983009808
  %v2988 = vunpack.c.0.s8 %v2987
  %v2989 = vperm.slane %v2983, %v2988
  %v2991 = vunpack.c.l.s4 1983009808
  %v2992 = vunpack.c.0.s8 %v2991
  %v2993 = vperm.slane %v2985, %v2992
  %v2994 = vrot.slane %v2330, 4
  %v2995 = vsel %vm2398, %v2994, %v2314
  %v2996 = vrot.slane %v2314, 4
  %v2997 = vsel %vm2398, %v2330, %v2996
  %v2999 = vunpack.c.l.s4 1983009808
  %v3000 = vunpack.c.0.s8 %v2999
  %v3001 = vperm.slane %v2995, %v3000
  %v3003 = vunpack.c.l.s4 1983009808
  %v3004 = vunpack.c.0.s8 %v3003
  %v3005 = vperm.slane %v2997, %v3004
  %v3006 = vrot.slane %v2977, 4
  %v3007 = vsel %vm2398, %v3006, %v2965
  %v3008 = vrot.slane %v2965, 4
  %v3009 = vsel %vm2398, %v2977, %v3008
  %v3011 = vunpack.c.l.s4 1934713408
  %v3012 = vunpack.c.0.s8 %v3011
  %v3013 = vperm.slane %v3007, %v3012
  %v3015 = vunpack.c.l.s4 1934713408
  %v3016 = vunpack.c.0.s8 %v3015
  %v3017 = vperm.slane %v3009, %v3016
  %v3018 = vrot.slane %v2981, 4
  %v3019 = vsel %vm2398, %v3018, %v2969
  %v3020 = vrot.slane %v2969, 4
  %v3021 = vsel %vm2398, %v2981, %v3020
  %v3023 = vunpack.c.l.s4 1934713408
  %v3024 = vunpack.c.0.s8 %v3023
  %v3025 = vperm.slane %v3019, %v3024
  %v3027 = vunpack.c.l.s4 1934713408
  %v3028 = vunpack.c.0.s8 %v3027
  %v3029 = vperm.slane %v3021, %v3028
  %v3030 = vrot.slane %v3001, 4
  %v3031 = vsel %vm2398, %v3030, %v2989
  %v3032 = vrot.slane %v2989, 4
  %v3033 = vsel %vm2398, %v3001, %v3032
  %v3035 = vunpack.c.l.s4 1934713408
  %v3036 = vunpack.c.0.s8 %v3035
  %v3037 = vperm.slane %v3031, %v3036
  %v3039 = vunpack.c.l.s4 1934713408
  %v3040 = vunpack.c.0.s8 %v3039
  %v3041 = vperm.slane %v3033, %v3040
  %v3042 = vrot.slane %v3005, 4
  %v3043 = vsel %vm2398, %v3042, %v2993
  %v3044 = vrot.slane %v2993, 4
  %v3045 = vsel %vm2398, %v3005, %v3044
  %v3047 = vunpack.c.l.s4 1934713408
  %v3048 = vunpack.c.0.s8 %v3047
  %v3049 = vperm.slane %v3043, %v3048
  %v3051 = vunpack.c.l.s4 1934713408
  %v3052 = vunpack.c.0.s8 %v3051
  %v3053 = vperm.slane %v3045, %v3052
  %v3054 = vrot.slane %v3037, 4
  %v3055 = vsel %vm2398, %v3054, %v3013
  %v3056 = vrot.slane %v3013, 4
  %v3057 = vsel %vm2398, %v3037, %v3056
  %v3058 = vrot.slane %v3041, 4
  %v3059 = vsel %vm2398, %v3058, %v3017
  %v3060 = vrot.slane %v3017, 4
  %v3061 = vsel %vm2398, %v3041, %v3060
  %v3062 = vrot.slane %v3049, 4
  %v3063 = vsel %vm2398, %v3062, %v3025
  %v3064 = vrot.slane %v3025, 4
  %v3065 = vsel %vm2398, %v3049, %v3064
  %v3066 = vrot.slane %v3053, 4
  %v3067 = vsel %vm2398, %v3066, %v3029
  %v3068 = vrot.slane %v3029, 4
  %v3069 = vsel %vm2398, %v3053, %v3068
  %v3070 = vrot.slane %v2228, 4
  %v3071 = vsel %vm2398, %v3070, %v2212
  %v3072 = vrot.slane %v2212, 4
  %v3073 = vsel %vm2398, %v2228, %v3072
  %v3075 = vunpack.c.l.s4 1983009808
  %v3076 = vunpack.c.0.s8 %v3075
  %v3077 = vperm.slane %v3071, %v3076
  %v3079 = vunpack.c.l.s4 1983009808
  %v3080 = vunpack.c.0.s8 %v3079
  %v3081 = vperm.slane %v3073, %v3080
  %v3082 = vrot.slane %v2236, 4
  %v3083 = vsel %vm2398, %v3082, %v2220
  %v3084 = vrot.slane %v2220, 4
  %v3085 = vsel %vm2398, %v2236, %v3084
  %v3087 = vunpack.c.l.s4 1983009808
  %v3088 = vunpack.c.0.s8 %v3087
  %v3089 = vperm.slane %v3083, %v3088
  %v3091 = vunpack.c.l.s4 1983009808
  %v3092 = vunpack.c.0.s8 %v3091
  %v3093 = vperm.slane %v3085, %v3092
  %v3094 = vrot.slane %v2260, 4
  %v3095 = vsel %vm2398, %v3094, %v2244
  %v3096 = vrot.slane %v2244, 4
  %v3097 = vsel %vm2398, %v2260, %v3096
  %v3099 = vunpack.c.l.s4 1983009808
  %v3100 = vunpack.c.0.s8 %v3099
  %v3101 = vperm.slane %v3095, %v3100
  %v3103 = vunpack.c.l.s4 1983009808
  %v3104 = vunpack.c.0.s8 %v3103
  %v3105 = vperm.slane %v3097, %v3104
  %v3106 = vrot.slane %v2268, 4
  %v3107 = vsel %vm2398, %v3106, %v2252
  %v3108 = vrot.slane %v2252, 4
  %v3109 = vsel %vm2398, %v2268, %v3108
  %v3111 = vunpack.c.l.s4 1983009808
  %v3112 = vunpack.c.0.s8 %v3111
  %v3113 = vperm.slane %v3107, %v3112
  %v3115 = vunpack.c.l.s4 1983009808
  %v3116 = vunpack.c.0.s8 %v3115
  %v3117 = vperm.slane %v3109, %v3116
  %v3118 = vrot.slane %v3089, 4
  %v3119 = vsel %vm2398, %v3118, %v3077
  %v3120 = vrot.slane %v3077, 4
  %v3121 = vsel %vm2398, %v3089, %v3120
  %v3123 = vunpack.c.l.s4 1934713408
  %v3124 = vunpack.c.0.s8 %v3123
  %v3125 = vperm.slane %v3119, %v3124
  %v3127 = vunpack.c.l.s4 1934713408
  %v3128 = vunpack.c.0.s8 %v3127
  %v3129 = vperm.slane %v3121, %v3128
  %v3130 = vrot.slane %v3093, 4
  %v3131 = vsel %vm2398, %v3130, %v3081
  %v3132 = vrot.slane %v3081, 4
  %v3133 = vsel %vm2398, %v3093, %v3132
  %v3135 = vunpack.c.l.s4 1934713408
  %v3136 = vunpack.c.0.s8 %v3135
  %v3137 = vperm.slane %v3131, %v3136
  %v3139 = vunpack.c.l.s4 1934713408
  %v3140 = vunpack.c.0.s8 %v3139
  %v3141 = vperm.slane %v3133, %v3140
  %v3142 = vrot.slane %v3113, 4
  %v3143 = vsel %vm2398, %v3142, %v3101
  %v3144 = vrot.slane %v3101, 4
  %v3145 = vsel %vm2398, %v3113, %v3144
  %v3147 = vunpack.c.l.s4 1934713408
  %v3148 = vunpack.c.0.s8 %v3147
  %v3149 = vperm.slane %v3143, %v3148
  %v3151 = vunpack.c.l.s4 1934713408
  %v3152 = vunpack.c.0.s8 %v3151
  %v3153 = vperm.slane %v3145, %v3152
  %v3154 = vrot.slane %v3117, 4
  %v3155 = vsel %vm2398, %v3154, %v3105
  %v3156 = vrot.slane %v3105, 4
  %v3157 = vsel %vm2398, %v3117, %v3156
  %v3159 = vunpack.c.l.s4 1934713408
  %v3160 = vunpack.c.0.s8 %v3159
  %v3161 = vperm.slane %v3155, %v3160
  %v3163 = vunpack.c.l.s4 1934713408
  %v3164 = vunpack.c.0.s8 %v3163
  %v3165 = vperm.slane %v3157, %v3164
  %v3166 = vrot.slane %v3149, 4
  %v3167 = vsel %vm2398, %v3166, %v3125
  %v3168 = vrot.slane %v3125, 4
  %v3169 = vsel %vm2398, %v3149, %v3168
  %v3170 = vrot.slane %v3153, 4
  %v3171 = vsel %vm2398, %v3170, %v3129
  %v3172 = vrot.slane %v3129, 4
  %v3173 = vsel %vm2398, %v3153, %v3172
  %v3174 = vrot.slane %v3161, 4
  %v3175 = vsel %vm2398, %v3174, %v3137
  %v3176 = vrot.slane %v3137, 4
  %v3177 = vsel %vm2398, %v3161, %v3176
  %v3178 = vrot.slane %v3165, 4
  %v3179 = vsel %vm2398, %v3178, %v3141
  %v3180 = vrot.slane %v3141, 4
  %v3181 = vsel %vm2398, %v3165, %v3180
  %v3182 = vrot.slane %v2292, 4
  %v3183 = vsel %vm2398, %v3182, %v2276
  %v3184 = vrot.slane %v2276, 4
  %v3185 = vsel %vm2398, %v2292, %v3184
  %v3187 = vunpack.c.l.s4 1983009808
  %v3188 = vunpack.c.0.s8 %v3187
  %v3189 = vperm.slane %v3183, %v3188
  %v3191 = vunpack.c.l.s4 1983009808
  %v3192 = vunpack.c.0.s8 %v3191
  %v3193 = vperm.slane %v3185, %v3192
  %v3194 = vrot.slane %v2300, 4
  %v3195 = vsel %vm2398, %v3194, %v2284
  %v3196 = vrot.slane %v2284, 4
  %v3197 = vsel %vm2398, %v2300, %v3196
  %v3199 = vunpack.c.l.s4 1983009808
  %v3200 = vunpack.c.0.s8 %v3199
  %v3201 = vperm.slane %v3195, %v3200
  %v3203 = vunpack.c.l.s4 1983009808
  %v3204 = vunpack.c.0.s8 %v3203
  %v3205 = vperm.slane %v3197, %v3204
  %v3206 = vrot.slane %v2324, 4
  %v3207 = vsel %vm2398, %v3206, %v2308
  %v3208 = vrot.slane %v2308, 4
  %v3209 = vsel %vm2398, %v2324, %v3208
  %v3211 = vunpack.c.l.s4 1983009808
  %v3212 = vunpack.c.0.s8 %v3211
  %v3213 = vperm.slane %v3207, %v3212
  %v3215 = vunpack.c.l.s4 1983009808
  %v3216 = vunpack.c.0.s8 %v3215
  %v3217 = vperm.slane %v3209, %v3216
  %v3218 = vrot.slane %v2332, 4
  %v3219 = vsel %vm2398, %v3218, %v2316
  %v3220 = vrot.slane %v2316, 4
  %v3221 = vsel %vm2398, %v2332, %v3220
  %v3223 = vunpack.c.l.s4 1983009808
  %v3224 = vunpack.c.0.s8 %v3223
  %v3225 = vperm.slane %v3219, %v3224
  %v3227 = vunpack.c.l.s4 1983009808
  %v3228 = vunpack.c.0.s8 %v3227
  %v3229 = vperm.slane %v3221, %v3228
  %v3230 = vrot.slane %v3201, 4
  %v3231 = vsel %vm2398, %v3230, %v3189
  %v3232 = vrot.slane %v3189, 4
  %v3233 = vsel %vm2398, %v3201, %v3232
  %v3235 = vunpack.c.l.s4 1934713408
  %v3236 = vunpack.c.0.s8 %v3235
  %v3237 = vperm.slane %v3231, %v3236
  %v3239 = vunpack.c.l.s4 1934713408
  %v3240 = vunpack.c.0.s8 %v3239
  %v3241 = vperm.slane %v3233, %v3240
  %v3242 = vrot.slane %v3205, 4
  %v3243 = vsel %vm2398, %v3242, %v3193
  %v3244 = vrot.slane %v3193, 4
  %v3245 = vsel %vm2398, %v3205, %v3244
  %v3247 = vunpack.c.l.s4 1934713408
  %v3248 = vunpack.c.0.s8 %v3247
  %v3249 = vperm.slane %v3243, %v3248
  %v3251 = vunpack.c.l.s4 1934713408
  %v3252 = vunpack.c.0.s8 %v3251
  %v3253 = vperm.slane %v3245, %v3252
  %v3254 = vrot.slane %v3225, 4
  %v3255 = vsel %vm2398, %v3254, %v3213
  %v3256 = vrot.slane %v3213, 4
  %v3257 = vsel %vm2398, %v3225, %v3256
  %v3259 = vunpack.c.l.s4 1934713408
  %v3260 = vunpack.c.0.s8 %v3259
  %v3261 = vperm.slane %v3255, %v3260
  %v3263 = vunpack.c.l.s4 1934713408
  %v3264 = vunpack.c.0.s8 %v3263
  %v3265 = vperm.slane %v3257, %v3264
  %v3266 = vrot.slane %v3229, 4
  %v3267 = vsel %vm2398, %v3266, %v3217
  %v3268 = vrot.slane %v3217, 4
  %v3269 = vsel %vm2398, %v3229, %v3268
  %v3271 = vunpack.c.l.s4 1934713408
  %v3272 = vunpack.c.0.s8 %v3271
  %v3273 = vperm.slane %v3267, %v3272
  %v3275 = vunpack.c.l.s4 1934713408
  %v3276 = vunpack.c.0.s8 %v3275
  %v3277 = vperm.slane %v3269, %v3276
  %v3278 = vrot.slane %v3261, 4
  %v3279 = vsel %vm2398, %v3278, %v3237
  %v3280 = vrot.slane %v3237, 4
  %v3281 = vsel %vm2398, %v3261, %v3280
  %v3282 = vrot.slane %v3265, 4
  %v3283 = vsel %vm2398, %v3282, %v3241
  %v3284 = vrot.slane %v3241, 4
  %v3285 = vsel %vm2398, %v3265, %v3284
  %v3286 = vrot.slane %v3273, 4
  %v3287 = vsel %vm2398, %v3286, %v3249
  %v3288 = vrot.slane %v3249, 4
  %v3289 = vsel %vm2398, %v3273, %v3288
  %v3290 = vrot.slane %v3277, 4
  %v3291 = vsel %vm2398, %v3290, %v3253
  %v3292 = vrot.slane %v3253, 4
  %v3293 = vsel %vm2398, %v3277, %v3292
  %3296 = vrot.lane.b32.xlu0 %v2497, 32
  %v3297 = vpop.permute.xlu0 %3296
  %3298 = vrot.lane.b32.xlu0 %v2609, 32
  %v3299 = vpop.permute.xlu0 %3298
  %3304 = vrot.lane.b32.xlu0 %v2499, 64
  %v3305 = vpop.permute.xlu0 %3304
  %3306 = vrot.lane.b32.xlu0 %v2611, 64
  %v3307 = vpop.permute.xlu0 %3306
  %3312 = vrot.lane.b32.xlu0 %v2501, 96
  %v3313 = vpop.permute.xlu0 %3312
  %3314 = vrot.lane.b32.xlu0 %v2613, 96
  %v3315 = vpop.permute.xlu0 %3314
  %3320 = vrot.lane.b32.xlu0 %v2505, 32
  %v3321 = vpop.permute.xlu0 %3320
  %3322 = vrot.lane.b32.xlu0 %v2617, 32
  %v3323 = vpop.permute.xlu0 %3322
  %3328 = vrot.lane.b32.xlu0 %v2507, 64
  %v3329 = vpop.permute.xlu0 %3328
  %3330 = vrot.lane.b32.xlu0 %v2619, 64
  %v3331 = vpop.permute.xlu0 %3330
  %3336 = vrot.lane.b32.xlu0 %v2509, 96
  %v3337 = vpop.permute.xlu0 %3336
  %3338 = vrot.lane.b32.xlu0 %v2621, 96
  %v3339 = vpop.permute.xlu0 %3338
  %3344 = vrot.lane.b32.xlu0 %v2721, 32
  %v3345 = vpop.permute.xlu0 %3344
  %3346 = vrot.lane.b32.xlu0 %v2833, 32
  %v3347 = vpop.permute.xlu0 %3346
  %3352 = vrot.lane.b32.xlu0 %v2723, 64
  %v3353 = vpop.permute.xlu0 %3352
  %3354 = vrot.lane.b32.xlu0 %v2835, 64
  %v3355 = vpop.permute.xlu0 %3354
  %3360 = vrot.lane.b32.xlu0 %v2725, 96
  %v3361 = vpop.permute.xlu0 %3360
  %3362 = vrot.lane.b32.xlu0 %v2837, 96
  %v3363 = vpop.permute.xlu0 %3362
  %3368 = vrot.lane.b32.xlu0 %v2729, 32
  %v3369 = vpop.permute.xlu0 %3368
  %3370 = vrot.lane.b32.xlu0 %v2841, 32
  %v3371 = vpop.permute.xlu0 %3370
  %3376 = vrot.lane.b32.xlu0 %v2731, 64
  %v3377 = vpop.permute.xlu0 %3376
  %3378 = vrot.lane.b32.xlu0 %v2843, 64
  %v3379 = vpop.permute.xlu0 %3378
  %3384 = vrot.lane.b32.xlu0 %v2733, 96
  %v3385 = vpop.permute.xlu0 %3384
  %3386 = vrot.lane.b32.xlu0 %v2845, 96
  %v3387 = vpop.permute.xlu0 %3386
  %3392 = vrot.lane.b32.xlu0 %v2945, 32
  %v3393 = vpop.permute.xlu0 %3392
  %3394 = vrot.lane.b32.xlu0 %v3057, 32
  %v3395 = vpop.permute.xlu0 %3394
  %3400 = vrot.lane.b32.xlu0 %v2947, 64
  %v3401 = vpop.permute.xlu0 %3400
  %3402 = vrot.lane.b32.xlu0 %v3059, 64
  %v3403 = vpop.permute.xlu0 %3402
  %3408 = vrot.lane.b32.xlu0 %v2949, 96
  %v3409 = vpop.permute.xlu0 %3408
  %3410 = vrot.lane.b32.xlu0 %v3061, 96
  %v3411 = vpop.permute.xlu0 %3410
  %3416 = vrot.lane.b32.xlu0 %v2953, 32
  %v3417 = vpop.permute.xlu0 %3416
  %3418 = vrot.lane.b32.xlu0 %v3065, 32
  %v3419 = vpop.permute.xlu0 %3418
  %3424 = vrot.lane.b32.xlu0 %v2955, 64
  %v3425 = vpop.permute.xlu0 %3424
  %3426 = vrot.lane.b32.xlu0 %v3067, 64
  %v3427 = vpop.permute.xlu0 %3426
  %3432 = vrot.lane.b32.xlu0 %v2957, 96
  %v3433 = vpop.permute.xlu0 %3432
  %3434 = vrot.lane.b32.xlu0 %v3069, 96
  %v3435 = vpop.permute.xlu0 %3434
  %3440 = vrot.lane.b32.xlu0 %v3169, 32
  %v3441 = vpop.permute.xlu0 %3440
  %3442 = vrot.lane.b32.xlu0 %v3281, 32
  %v3443 = vpop.permute.xlu0 %3442
  %3448 = vrot.lane.b32.xlu0 %v3171, 64
  %v3449 = vpop.permute.xlu0 %3448
  %3450 = vrot.lane.b32.xlu0 %v3283, 64
  %v3451 = vpop.permute.xlu0 %3450
  %3456 = vrot.lane.b32.xlu0 %v3173, 96
  %v3457 = vpop.permute.xlu0 %3456
  %3458 = vrot.lane.b32.xlu0 %v3285, 96
  %v3459 = vpop.permute.xlu0 %3458
  %3464 = vrot.lane.b32.xlu0 %v3177, 32
  %v3465 = vpop.permute.xlu0 %3464
  %3466 = vrot.lane.b32.xlu0 %v3289, 32
  %v3467 = vpop.permute.xlu0 %3466
  %3472 = vrot.lane.b32.xlu0 %v3179, 64
  %v3473 = vpop.permute.xlu0 %3472
  %3474 = vrot.lane.b32.xlu0 %v3291, 64
  %v3475 = vpop.permute.xlu0 %3474
  %3480 = vrot.lane.b32.xlu0 %v3181, 96
  %v3481 = vpop.permute.xlu0 %3480
  %3482 = vrot.lane.b32.xlu0 %v3293, 96
  %v3483 = vpop.permute.xlu0 %3482
  %v3486 = vsel %vm84, %v2495, %v3297
  %v3487 = vsel %vm84, %v2607, %v3299
  %v3488 = vsel %vm644, %v3486, %v3305
  %v3489 = vsel %vm644, %v3487, %v3307
  %vm3490 = vcmask 785408
  %v3491 = vsel %vm3490, %v3488, %v3313
  %v3492 = vsel %vm3490, %v3489, %v3315
  %v3493 = vsel %vm84, %v2503, %v3321
  %v3494 = vsel %vm84, %v2615, %v3323
  %v3495 = vsel %vm644, %v3493, %v3329
  %v3496 = vsel %vm644, %v3494, %v3331
  %v3497 = vsel %vm3490, %v3495, %v3337
  %v3498 = vsel %vm3490, %v3496, %v3339
  %v3499 = vsel %vm84, %v2719, %v3345
  %v3500 = vsel %vm84, %v2831, %v3347
  %v3501 = vsel %vm644, %v3499, %v3353
  %v3502 = vsel %vm644, %v3500, %v3355
  %v3503 = vsel %vm3490, %v3501, %v3361
  %v3504 = vsel %vm3490, %v3502, %v3363
  %v3505 = vsel %vm84, %v2727, %v3369
  %v3506 = vsel %vm84, %v2839, %v3371
  %v3507 = vsel %vm644, %v3505, %v3377
  %v3508 = vsel %vm644, %v3506, %v3379
  %v3509 = vsel %vm3490, %v3507, %v3385
  %v3510 = vsel %vm3490, %v3508, %v3387
  %v3511 = vsel %vm84, %v2943, %v3393
  %v3512 = vsel %vm84, %v3055, %v3395
  %v3513 = vsel %vm644, %v3511, %v3401
  %v3514 = vsel %vm644, %v3512, %v3403
  %v3515 = vsel %vm3490, %v3513, %v3409
  %v3516 = vsel %vm3490, %v3514, %v3411
  %v3517 = vsel %vm84, %v2951, %v3417
  %v3518 = vsel %vm84, %v3063, %v3419
  %v3519 = vsel %vm644, %v3517, %v3425
  %v3520 = vsel %vm644, %v3518, %v3427
  %v3521 = vsel %vm3490, %v3519, %v3433
  %v3522 = vsel %vm3490, %v3520, %v3435
  %v3523 = vsel %vm84, %v3167, %v3441
  %v3524 = vsel %vm84, %v3279, %v3443
  %v3525 = vsel %vm644, %v3523, %v3449
  %v3526 = vsel %vm644, %v3524, %v3451
  %v3527 = vsel %vm3490, %v3525, %v3457
  %v3528 = vsel %vm3490, %v3526, %v3459
  %v3529 = vsel %vm84, %v3175, %v3465
  %v3530 = vsel %vm84, %v3287, %v3467
  %v3531 = vsel %vm644, %v3529, %v3473
  %v3532 = vsel %vm644, %v3530, %v3475
  %v3533 = vsel %vm3490, %v3531, %v3481
  %v3534 = vsel %vm3490, %v3532, %v3483
  %v3535 = vpack.c.bf16 %v3492, %v3491
  %v3536 = vpack.c.bf16 %v3498, %v3497
  %v3537 = vpack.c.bf16 %v3504, %v3503
  %v3538 = vpack.c.bf16 %v3510, %v3509
  %v3539 = vpack.c.bf16 %v3516, %v3515
  %v3540 = vpack.c.bf16 %v3522, %v3521
  %v3541 = vpack.c.bf16 %v3528, %v3527
  %v3542 = vpack.c.bf16 %v3534, %v3533
  %v3543 = vld [vmem:[%s13] sm:$0xf]
  %v3544 = vld [vmem:[%s13 + $0x4] sm:$0xf]
  %v3545 = vld [vmem:[%s13 + $0x8] sm:$0xf]
  %v3546 = vld [vmem:[%s13 + $0xc] sm:$0xf]
  %v3547 = vld [vmem:[%s13 + $0x10] sm:$0xf]
  %v3548 = vld [vmem:[%s13 + $0x14] sm:$0xf]
  %v3549 = vld [vmem:[%s13 + $0x18] sm:$0xf]
  %v3550 = vld [vmem:[%s13 + $0x1c] sm:$0xf]
  %v3551 = vld [vmem:[%s13 + $0x20] sm:$0xf]
  %v3552 = vld [vmem:[%s13 + $0x24] sm:$0xf]
  %v3553 = vld [vmem:[%s13 + $0x28] sm:$0xf]
  %v3554 = vld [vmem:[%s13 + $0x2c] sm:$0xf]
  %v3555 = vld [vmem:[%s13 + $0x30] sm:$0xf]
  %v3556 = vld [vmem:[%s13 + $0x34] sm:$0xf]
  %v3557 = vld [vmem:[%s13 + $0x38] sm:$0xf]
  %v3558 = vld [vmem:[%s13 + $0x3c] sm:$0xf]
  %v3559 = vld [vmem:[%s13 + $0x40] sm:$0xf]
  %v3560 = vld [vmem:[%s13 + $0x44] sm:$0xf]
  %v3561 = vld [vmem:[%s13 + $0x48] sm:$0xf]
  %v3562 = vld [vmem:[%s13 + $0x4c] sm:$0xf]
  %v3563 = vld [vmem:[%s13 + $0x50] sm:$0xf]
  %v3564 = vld [vmem:[%s13 + $0x54] sm:$0xf]
  %v3565 = vld [vmem:[%s13 + $0x58] sm:$0xf]
  %v3566 = vld [vmem:[%s13 + $0x5c] sm:$0xf]
  %v3567 = vld [vmem:[%s13 + $0x60] sm:$0xf]
  %v3568 = vld [vmem:[%s13 + $0x64] sm:$0xf]
  %v3569 = vld [vmem:[%s13 + $0x68] sm:$0xf]
  %v3570 = vld [vmem:[%s13 + $0x6c] sm:$0xf]
  %v3571 = vld [vmem:[%s13 + $0x70] sm:$0xf]
  %v3572 = vld [vmem:[%s13 + $0x74] sm:$0xf]
  %v3573 = vld [vmem:[%s13 + $0x78] sm:$0xf]
  %v3574 = vld [vmem:[%s13 + $0x7c] sm:$0xf]
  %v3575 = vld [vmem:[%s13 + $0x80] sm:$0xf]
  %v3576 = vld [vmem:[%s13 + $0x84] sm:$0xf]
  %v3577 = vld [vmem:[%s13 + $0x88] sm:$0xf]
  %v3578 = vld [vmem:[%s13 + $0x8c] sm:$0xf]
  %v3579 = vld [vmem:[%s13 + $0x90] sm:$0xf]
  %v3580 = vld [vmem:[%s13 + $0x94] sm:$0xf]
  %v3581 = vld [vmem:[%s13 + $0x98] sm:$0xf]
  %v3582 = vld [vmem:[%s13 + $0x9c] sm:$0xf]
  %v3583 = vld [vmem:[%s13 + $0xa0] sm:$0xf]
  %v3584 = vld [vmem:[%s13 + $0xa4] sm:$0xf]
  %v3585 = vld [vmem:[%s13 + $0xa8] sm:$0xf]
  %v3586 = vld [vmem:[%s13 + $0xac] sm:$0xf]
  %v3587 = vld [vmem:[%s13 + $0xb0] sm:$0xf]
  %v3588 = vld [vmem:[%s13 + $0xb4] sm:$0xf]
  %v3589 = vld [vmem:[%s13 + $0xb8] sm:$0xf]
  %v3590 = vld [vmem:[%s13 + $0xbc] sm:$0xf]
  %v3591 = vld [vmem:[%s13 + $0xc0] sm:$0xf]
  %v3592 = vld [vmem:[%s13 + $0xc4] sm:$0xf]
  %v3593 = vld [vmem:[%s13 + $0xc8] sm:$0xf]
  %v3594 = vld [vmem:[%s13 + $0xcc] sm:$0xf]
  %v3595 = vld [vmem:[%s13 + $0xd0] sm:$0xf]
  %v3596 = vld [vmem:[%s13 + $0xd4] sm:$0xf]
  %v3597 = vld [vmem:[%s13 + $0xd8] sm:$0xf]
  %v3598 = vld [vmem:[%s13 + $0xdc] sm:$0xf]
  %v3599 = vld [vmem:[%s13 + $0xe0] sm:$0xf]
  %v3600 = vld [vmem:[%s13 + $0xe4] sm:$0xf]
  %v3601 = vld [vmem:[%s13 + $0xe8] sm:$0xf]
  %v3602 = vld [vmem:[%s13 + $0xec] sm:$0xf]
  %v3603 = vld [vmem:[%s13 + $0xf0] sm:$0xf]
  %v3604 = vld [vmem:[%s13 + $0xf4] sm:$0xf]
  %v3605 = vld [vmem:[%s13 + $0xf8] sm:$0xf]
  %v3606 = vld [vmem:[%s13 + $0xfc] sm:$0xf]
  %v3607 = vld [vmem:[%s13 + $0x100] sm:$0xf]
  %v3608 = vld [vmem:[%s13 + $0x104] sm:$0xf]
  %v3609 = vld [vmem:[%s13 + $0x108] sm:$0xf]
  %v3610 = vld [vmem:[%s13 + $0x10c] sm:$0xf]
  %v3611 = vld [vmem:[%s13 + $0x110] sm:$0xf]
  %v3612 = vld [vmem:[%s13 + $0x114] sm:$0xf]
  %v3613 = vld [vmem:[%s13 + $0x118] sm:$0xf]
  %v3614 = vld [vmem:[%s13 + $0x11c] sm:$0xf]
  %v3615 = vld [vmem:[%s13 + $0x120] sm:$0xf]
  %v3616 = vld [vmem:[%s13 + $0x124] sm:$0xf]
  %v3617 = vld [vmem:[%s13 + $0x128] sm:$0xf]
  %v3618 = vld [vmem:[%s13 + $0x12c] sm:$0xf]
  %v3619 = vld [vmem:[%s13 + $0x130] sm:$0xf]
  %v3620 = vld [vmem:[%s13 + $0x134] sm:$0xf]
  %v3621 = vld [vmem:[%s13 + $0x138] sm:$0xf]
  %v3622 = vld [vmem:[%s13 + $0x13c] sm:$0xf]
  %v3623 = vld [vmem:[%s13 + $0x140] sm:$0xf]
  %v3624 = vld [vmem:[%s13 + $0x144] sm:$0xf]
  %v3625 = vld [vmem:[%s13 + $0x148] sm:$0xf]
  %v3626 = vld [vmem:[%s13 + $0x14c] sm:$0xf]
  %v3627 = vld [vmem:[%s13 + $0x150] sm:$0xf]
  %v3628 = vld [vmem:[%s13 + $0x154] sm:$0xf]
  %v3629 = vld [vmem:[%s13 + $0x158] sm:$0xf]
  %v3630 = vld [vmem:[%s13 + $0x15c] sm:$0xf]
  %v3631 = vld [vmem:[%s13 + $0x160] sm:$0xf]
  %v3632 = vld [vmem:[%s13 + $0x164] sm:$0xf]
  %v3633 = vld [vmem:[%s13 + $0x168] sm:$0xf]
  %v3634 = vld [vmem:[%s13 + $0x16c] sm:$0xf]
  %v3635 = vld [vmem:[%s13 + $0x170] sm:$0xf]
  %v3636 = vld [vmem:[%s13 + $0x174] sm:$0xf]
  %v3637 = vld [vmem:[%s13 + $0x178] sm:$0xf]
  %v3638 = vld [vmem:[%s13 + $0x17c] sm:$0xf]
  %v3639 = vld [vmem:[%s13 + $0x180] sm:$0xf]
  %v3640 = vld [vmem:[%s13 + $0x184] sm:$0xf]
  %v3641 = vld [vmem:[%s13 + $0x188] sm:$0xf]
  %v3642 = vld [vmem:[%s13 + $0x18c] sm:$0xf]
  %v3643 = vld [vmem:[%s13 + $0x190] sm:$0xf]
  %v3644 = vld [vmem:[%s13 + $0x194] sm:$0xf]
  %v3645 = vld [vmem:[%s13 + $0x198] sm:$0xf]
  %v3646 = vld [vmem:[%s13 + $0x19c] sm:$0xf]
  %v3647 = vld [vmem:[%s13 + $0x1a0] sm:$0xf]
  %v3648 = vld [vmem:[%s13 + $0x1a4] sm:$0xf]
  %v3649 = vld [vmem:[%s13 + $0x1a8] sm:$0xf]
  %v3650 = vld [vmem:[%s13 + $0x1ac] sm:$0xf]
  %v3651 = vld [vmem:[%s13 + $0x1b0] sm:$0xf]
  %v3652 = vld [vmem:[%s13 + $0x1b4] sm:$0xf]
  %v3653 = vld [vmem:[%s13 + $0x1b8] sm:$0xf]
  %v3654 = vld [vmem:[%s13 + $0x1bc] sm:$0xf]
  %v3655 = vld [vmem:[%s13 + $0x1c0] sm:$0xf]
  %v3656 = vld [vmem:[%s13 + $0x1c4] sm:$0xf]
  %v3657 = vld [vmem:[%s13 + $0x1c8] sm:$0xf]
  %v3658 = vld [vmem:[%s13 + $0x1cc] sm:$0xf]
  %v3659 = vld [vmem:[%s13 + $0x1d0] sm:$0xf]
  %v3660 = vld [vmem:[%s13 + $0x1d4] sm:$0xf]
  %v3661 = vld [vmem:[%s13 + $0x1d8] sm:$0xf]
  %v3662 = vld [vmem:[%s13 + $0x1dc] sm:$0xf]
  %v3663 = vld [vmem:[%s13 + $0x1e0] sm:$0xf]
  %v3664 = vld [vmem:[%s13 + $0x1e4] sm:$0xf]
  %v3665 = vld [vmem:[%s13 + $0x1e8] sm:$0xf]
  %v3666 = vld [vmem:[%s13 + $0x1ec] sm:$0xf]
  %v3667 = vld [vmem:[%s13 + $0x1f0] sm:$0xf]
  %v3668 = vld [vmem:[%s13 + $0x1f4] sm:$0xf]
  %v3669 = vld [vmem:[%s13 + $0x1f8] sm:$0xf]
  %v3670 = vld [vmem:[%s13 + $0x1fc] sm:$0xf]
  %v3671 = vld [vmem:[%s14] sm:$0xf]
  %v3672 = vld [vmem:[%s14 + $0x4] sm:$0xf]
  %v3673 = vld [vmem:[%s14 + $0x8] sm:$0xf]
  %v3674 = vld [vmem:[%s14 + $0xc] sm:$0xf]
  %3675 = vrot.lane.b32.xlu0 %v1588, 64
  %v3676 = vpop.permute.xlu0 %3675
  %v3681 = vunpack.c.l.b16 %v3671
  %v3682 = vunpack.c.l.b16 %v3672
  %v3683 = vunpack.c.l.b16 %v3673
  %v3684 = vunpack.c.l.b16 %v3674
  %v3685 = vpack.c.b16 %v3682, %v3681
  %v3686 = vpack.c.b16 %v3684, %v3683
  %v3690 = vsel %vm84, %v3676, 0
  %3692 = vmatpush.bf16.msra.mxu0 0
  %3693 = vmatpush.bf16.msra.mxu0 0
  %3694 = vmatpush.bf16.msra.mxu0 0
  %3695 = vmatpush.bf16.msra.mxu0 0
  %3696 = vmatpush.bf16.msra.mxu0 0
  %3697 = vmatpush.bf16.msra.mxu0 0
  %3698 = vmatpush.bf16.msra.mxu0 %v3686
  %3699 = vmatpush.bf16.msra.mxu0 %v3685
  %3700 = vmatmul.bf16.gmra.mxu0 %v3690
  %v3701 = vpop.f32.mrf.mxu0
  %v3702 = vadd.f32 0.0, %v3701
  %v3703 = vpop.f32.mrf.mxu0
  %v3704 = vadd.f32 0.0, %v3703
  %3705 = vdwg.mxu0
  %v3834 = vunpack.c.l.b16 %v3543
  %v3835 = vunpack.c.l.b16 %v3544
  %v3836 = vunpack.c.l.b16 %v3545
  %v3837 = vunpack.c.l.b16 %v3546
  %v3838 = vunpack.c.l.b16 %v3547
  %v3839 = vunpack.c.l.b16 %v3548
  %v3840 = vunpack.c.l.b16 %v3549
  %v3841 = vunpack.c.l.b16 %v3550
  %v3842 = vunpack.c.l.b16 %v3551
  %v3843 = vunpack.c.l.b16 %v3552
  %v3844 = vunpack.c.l.b16 %v3553
  %v3845 = vunpack.c.l.b16 %v3554
  %v3846 = vunpack.c.l.b16 %v3555
  %v3847 = vunpack.c.l.b16 %v3556
  %v3848 = vunpack.c.l.b16 %v3557
  %v3849 = vunpack.c.l.b16 %v3558
  %v3850 = vunpack.c.l.b16 %v3559
  %v3851 = vunpack.c.l.b16 %v3560
  %v3852 = vunpack.c.l.b16 %v3561
  %v3853 = vunpack.c.l.b16 %v3562
  %v3854 = vunpack.c.l.b16 %v3563
  %v3855 = vunpack.c.l.b16 %v3564
  %v3856 = vunpack.c.l.b16 %v3565
  %v3857 = vunpack.c.l.b16 %v3566
  %v3858 = vunpack.c.l.b16 %v3567
  %v3859 = vunpack.c.l.b16 %v3568
  %v3860 = vunpack.c.l.b16 %v3569
  %v3861 = vunpack.c.l.b16 %v3570
  %v3862 = vunpack.c.l.b16 %v3571
  %v3863 = vunpack.c.l.b16 %v3572
  %v3864 = vunpack.c.l.b16 %v3573
  %v3865 = vunpack.c.l.b16 %v3574
  %v3866 = vunpack.c.l.b16 %v3575
  %v3867 = vunpack.c.l.b16 %v3576
  %v3868 = vunpack.c.l.b16 %v3577
  %v3869 = vunpack.c.l.b16 %v3578
  %v3870 = vunpack.c.l.b16 %v3579
  %v3871 = vunpack.c.l.b16 %v3580
  %v3872 = vunpack.c.l.b16 %v3581
  %v3873 = vunpack.c.l.b16 %v3582
  %v3874 = vunpack.c.l.b16 %v3583
  %v3875 = vunpack.c.l.b16 %v3584
  %v3876 = vunpack.c.l.b16 %v3585
  %v3877 = vunpack.c.l.b16 %v3586
  %v3878 = vunpack.c.l.b16 %v3587
  %v3879 = vunpack.c.l.b16 %v3588
  %v3880 = vunpack.c.l.b16 %v3589
  %v3881 = vunpack.c.l.b16 %v3590
  %v3882 = vunpack.c.l.b16 %v3591
  %v3883 = vunpack.c.l.b16 %v3592
  %v3884 = vunpack.c.l.b16 %v3593
  %v3885 = vunpack.c.l.b16 %v3594
  %v3886 = vunpack.c.l.b16 %v3595
  %v3887 = vunpack.c.l.b16 %v3596
  %v3888 = vunpack.c.l.b16 %v3597
  %v3889 = vunpack.c.l.b16 %v3598
  %v3890 = vunpack.c.l.b16 %v3599
  %v3891 = vunpack.c.l.b16 %v3600
  %v3892 = vunpack.c.l.b16 %v3601
  %v3893 = vunpack.c.l.b16 %v3602
  %v3894 = vunpack.c.l.b16 %v3603
  %v3895 = vunpack.c.l.b16 %v3604
  %v3896 = vunpack.c.l.b16 %v3605
  %v3897 = vunpack.c.l.b16 %v3606
  %v3898 = vunpack.c.l.b16 %v3607
  %v3899 = vunpack.c.l.b16 %v3608
  %v3900 = vunpack.c.l.b16 %v3609
  %v3901 = vunpack.c.l.b16 %v3610
  %v3902 = vunpack.c.l.b16 %v3611
  %v3903 = vunpack.c.l.b16 %v3612
  %v3904 = vunpack.c.l.b16 %v3613
  %v3905 = vunpack.c.l.b16 %v3614
  %v3906 = vunpack.c.l.b16 %v3615
  %v3907 = vunpack.c.l.b16 %v3616
  %v3908 = vunpack.c.l.b16 %v3617
  %v3909 = vunpack.c.l.b16 %v3618
  %v3910 = vunpack.c.l.b16 %v3619
  %v3911 = vunpack.c.l.b16 %v3620
  %v3912 = vunpack.c.l.b16 %v3621
  %v3913 = vunpack.c.l.b16 %v3622
  %v3914 = vunpack.c.l.b16 %v3623
  %v3915 = vunpack.c.l.b16 %v3624
  %v3916 = vunpack.c.l.b16 %v3625
  %v3917 = vunpack.c.l.b16 %v3626
  %v3918 = vunpack.c.l.b16 %v3627
  %v3919 = vunpack.c.l.b16 %v3628
  %v3920 = vunpack.c.l.b16 %v3629
  %v3921 = vunpack.c.l.b16 %v3630
  %v3922 = vunpack.c.l.b16 %v3631
  %v3923 = vunpack.c.l.b16 %v3632
  %v3924 = vunpack.c.l.b16 %v3633
  %v3925 = vunpack.c.l.b16 %v3634
  %v3926 = vunpack.c.l.b16 %v3635
  %v3927 = vunpack.c.l.b16 %v3636
  %v3928 = vunpack.c.l.b16 %v3637
  %v3929 = vunpack.c.l.b16 %v3638
  %v3930 = vunpack.c.l.b16 %v3639
  %v3931 = vunpack.c.l.b16 %v3640
  %v3932 = vunpack.c.l.b16 %v3641
  %v3933 = vunpack.c.l.b16 %v3642
  %v3934 = vunpack.c.l.b16 %v3643
  %v3935 = vunpack.c.l.b16 %v3644
  %v3936 = vunpack.c.l.b16 %v3645
  %v3937 = vunpack.c.l.b16 %v3646
  %v3938 = vunpack.c.l.b16 %v3647
  %v3939 = vunpack.c.l.b16 %v3648
  %v3940 = vunpack.c.l.b16 %v3649
  %v3941 = vunpack.c.l.b16 %v3650
  %v3942 = vunpack.c.l.b16 %v3651
  %v3943 = vunpack.c.l.b16 %v3652
  %v3944 = vunpack.c.l.b16 %v3653
  %v3945 = vunpack.c.l.b16 %v3654
  %v3946 = vunpack.c.l.b16 %v3655
  %v3947 = vunpack.c.l.b16 %v3656
  %v3948 = vunpack.c.l.b16 %v3657
  %v3949 = vunpack.c.l.b16 %v3658
  %v3950 = vunpack.c.l.b16 %v3659
  %v3951 = vunpack.c.l.b16 %v3660
  %v3952 = vunpack.c.l.b16 %v3661
  %v3953 = vunpack.c.l.b16 %v3662
  %v3954 = vunpack.c.l.b16 %v3663
  %v3955 = vunpack.c.l.b16 %v3664
  %v3956 = vunpack.c.l.b16 %v3665
  %v3957 = vunpack.c.l.b16 %v3666
  %v3958 = vunpack.c.l.b16 %v3667
  %v3959 = vunpack.c.l.b16 %v3668
  %v3960 = vunpack.c.l.b16 %v3669
  %v3961 = vunpack.c.l.b16 %v3670
  %v3962 = vpack.c.b16 %v3835, %v3834
  %v3963 = vpack.c.b16 %v3837, %v3836
  %v3964 = vpack.c.b16 %v3839, %v3838
  %v3965 = vpack.c.b16 %v3841, %v3840
  %v3966 = vpack.c.b16 %v3843, %v3842
  %v3967 = vpack.c.b16 %v3845, %v3844
  %v3968 = vpack.c.b16 %v3847, %v3846
  %v3969 = vpack.c.b16 %v3849, %v3848
  %v3970 = vpack.c.b16 %v3851, %v3850
  %v3971 = vpack.c.b16 %v3853, %v3852
  %v3972 = vpack.c.b16 %v3855, %v3854
  %v3973 = vpack.c.b16 %v3857, %v3856
  %v3974 = vpack.c.b16 %v3859, %v3858
  %v3975 = vpack.c.b16 %v3861, %v3860
  %v3976 = vpack.c.b16 %v3863, %v3862
  %v3977 = vpack.c.b16 %v3865, %v3864
  %v3978 = vpack.c.b16 %v3867, %v3866
  %v3979 = vpack.c.b16 %v3869, %v3868
  %v3980 = vpack.c.b16 %v3871, %v3870
  %v3981 = vpack.c.b16 %v3873, %v3872
  %v3982 = vpack.c.b16 %v3875, %v3874
  %v3983 = vpack.c.b16 %v3877, %v3876
  %v3984 = vpack.c.b16 %v3879, %v3878
  %v3985 = vpack.c.b16 %v3881, %v3880
  %v3986 = vpack.c.b16 %v3883, %v3882
  %v3987 = vpack.c.b16 %v3885, %v3884
  %v3988 = vpack.c.b16 %v3887, %v3886
  %v3989 = vpack.c.b16 %v3889, %v3888
  %v3990 = vpack.c.b16 %v3891, %v3890
  %v3991 = vpack.c.b16 %v3893, %v3892
  %v3992 = vpack.c.b16 %v3895, %v3894
  %v3993 = vpack.c.b16 %v3897, %v3896
  %v3994 = vpack.c.b16 %v3899, %v3898
  %v3995 = vpack.c.b16 %v3901, %v3900
  %v3996 = vpack.c.b16 %v3903, %v3902
  %v3997 = vpack.c.b16 %v3905, %v3904
  %v3998 = vpack.c.b16 %v3907, %v3906
  %v3999 = vpack.c.b16 %v3909, %v3908
  %v4000 = vpack.c.b16 %v3911, %v3910
  %v4001 = vpack.c.b16 %v3913, %v3912
  %v4002 = vpack.c.b16 %v3915, %v3914
  %v4003 = vpack.c.b16 %v3917, %v3916
  %v4004 = vpack.c.b16 %v3919, %v3918
  %v4005 = vpack.c.b16 %v3921, %v3920
  %v4006 = vpack.c.b16 %v3923, %v3922
  %v4007 = vpack.c.b16 %v3925, %v3924
  %v4008 = vpack.c.b16 %v3927, %v3926
  %v4009 = vpack.c.b16 %v3929, %v3928
  %v4010 = vpack.c.b16 %v3931, %v3930
  %v4011 = vpack.c.b16 %v3933, %v3932
  %v4012 = vpack.c.b16 %v3935, %v3934
  %v4013 = vpack.c.b16 %v3937, %v3936
  %v4014 = vpack.c.b16 %v3939, %v3938
  %v4015 = vpack.c.b16 %v3941, %v3940
  %v4016 = vpack.c.b16 %v3943, %v3942
  %v4017 = vpack.c.b16 %v3945, %v3944
  %v4018 = vpack.c.b16 %v3947, %v3946
  %v4019 = vpack.c.b16 %v3949, %v3948
  %v4020 = vpack.c.b16 %v3951, %v3950
  %v4021 = vpack.c.b16 %v3953, %v3952
  %v4022 = vpack.c.b16 %v3955, %v3954
  %v4023 = vpack.c.b16 %v3957, %v3956
  %v4024 = vpack.c.b16 %v3959, %v3958
  %v4025 = vpack.c.b16 %v3961, %v3960
  %4090 = vmatpush.bf16.msra.mxu0 %v3969
  %4091 = vmatpush.bf16.msra.mxu0 %v3968
  %4092 = vmatpush.bf16.msra.mxu0 %v3967
  %4093 = vmatpush.bf16.msra.mxu0 %v3966
  %4094 = vmatpush.bf16.msra.mxu0 %v3965
  %4095 = vmatpush.bf16.msra.mxu0 %v3964
  %4096 = vmatpush.bf16.msra.mxu0 %v3963
  %4097 = vmatpush.bf16.msra.mxu0 %v3962
  %4098 = vmatmul.bf16.gmra.mxu0 %v3535
  %v4099 = vpop.f32.mrf.mxu0
  %v4100 = vadd.f32 %v3702, %v4099
  %v4101 = vpop.f32.mrf.mxu0
  %v4102 = vadd.f32 %v3704, %v4101
  %4103 = vdwg.mxu0
  %4104 = vmatpush.bf16.msra.mxu0 %v3977
  %4105 = vmatpush.bf16.msra.mxu0 %v3976
  %4106 = vmatpush.bf16.msra.mxu0 %v3975
  %4107 = vmatpush.bf16.msra.mxu0 %v3974
  %4108 = vmatpush.bf16.msra.mxu0 %v3973
  %4109 = vmatpush.bf16.msra.mxu0 %v3972
  %4110 = vmatpush.bf16.msra.mxu0 %v3971
  %4111 = vmatpush.bf16.msra.mxu0 %v3970
  %4112 = vmatmul.bf16.gmra.mxu0 %v3536
  %v4113 = vpop.f32.mrf.mxu0
  %v4114 = vadd.f32 %v4100, %v4113
  %v4115 = vpop.f32.mrf.mxu0
  %v4116 = vadd.f32 %v4102, %v4115
  %4117 = vdwg.mxu0
  %4118 = vmatpush.bf16.msra.mxu0 %v3985
  %4119 = vmatpush.bf16.msra.mxu0 %v3984
  %4120 = vmatpush.bf16.msra.mxu0 %v3983
  %4121 = vmatpush.bf16.msra.mxu0 %v3982
  %4122 = vmatpush.bf16.msra.mxu0 %v3981
  %4123 = vmatpush.bf16.msra.mxu0 %v3980
  %4124 = vmatpush.bf16.msra.mxu0 %v3979
  %4125 = vmatpush.bf16.msra.mxu0 %v3978
  %4126 = vmatmul.bf16.gmra.mxu0 %v3537
  %v4127 = vpop.f32.mrf.mxu0
  %v4128 = vadd.f32 %v4114, %v4127
  %v4129 = vpop.f32.mrf.mxu0
  %v4130 = vadd.f32 %v4116, %v4129
  %4131 = vdwg.mxu0
  %4132 = vmatpush.bf16.msra.mxu0 %v3993
  %4133 = vmatpush.bf16.msra.mxu0 %v3992
  %4134 = vmatpush.bf16.msra.mxu0 %v3991
  %4135 = vmatpush.bf16.msra.mxu0 %v3990
  %4136 = vmatpush.bf16.msra.mxu0 %v3989
  %4137 = vmatpush.bf16.msra.mxu0 %v3988
  %4138 = vmatpush.bf16.msra.mxu0 %v3987
  %4139 = vmatpush.bf16.msra.mxu0 %v3986
  %4140 = vmatmul.bf16.gmra.mxu0 %v3538
  %v4141 = vpop.f32.mrf.mxu0
  %v4142 = vadd.f32 %v4128, %v4141
  %v4143 = vpop.f32.mrf.mxu0
  %v4144 = vadd.f32 %v4130, %v4143
  %4145 = vdwg.mxu0
  %4146 = vmatpush.bf16.msra.mxu0 %v4001
  %4147 = vmatpush.bf16.msra.mxu0 %v4000
  %4148 = vmatpush.bf16.msra.mxu0 %v3999
  %4149 = vmatpush.bf16.msra.mxu0 %v3998
  %4150 = vmatpush.bf16.msra.mxu0 %v3997
  %4151 = vmatpush.bf16.msra.mxu0 %v3996
  %4152 = vmatpush.bf16.msra.mxu0 %v3995
  %4153 = vmatpush.bf16.msra.mxu0 %v3994
  %4154 = vmatmul.bf16.gmra.mxu0 %v3539
  %v4155 = vpop.f32.mrf.mxu0
  %v4156 = vadd.f32 %v4142, %v4155
  %v4157 = vpop.f32.mrf.mxu0
  %v4158 = vadd.f32 %v4144, %v4157
  %4159 = vdwg.mxu0
  %4160 = vmatpush.bf16.msra.mxu0 %v4009
  %4161 = vmatpush.bf16.msra.mxu0 %v4008
  %4162 = vmatpush.bf16.msra.mxu0 %v4007
  %4163 = vmatpush.bf16.msra.mxu0 %v4006
  %4164 = vmatpush.bf16.msra.mxu0 %v4005
  %4165 = vmatpush.bf16.msra.mxu0 %v4004
  %4166 = vmatpush.bf16.msra.mxu0 %v4003
  %4167 = vmatpush.bf16.msra.mxu0 %v4002
  %4168 = vmatmul.bf16.gmra.mxu0 %v3540
  %v4169 = vpop.f32.mrf.mxu0
  %v4170 = vadd.f32 %v4156, %v4169
  %v4171 = vpop.f32.mrf.mxu0
  %v4172 = vadd.f32 %v4158, %v4171
  %4173 = vdwg.mxu0
  %4174 = vmatpush.bf16.msra.mxu0 %v4017
  %4175 = vmatpush.bf16.msra.mxu0 %v4016
  %4176 = vmatpush.bf16.msra.mxu0 %v4015
  %4177 = vmatpush.bf16.msra.mxu0 %v4014
  %4178 = vmatpush.bf16.msra.mxu0 %v4013
  %4179 = vmatpush.bf16.msra.mxu0 %v4012
  %4180 = vmatpush.bf16.msra.mxu0 %v4011
  %4181 = vmatpush.bf16.msra.mxu0 %v4010
  %4182 = vmatmul.bf16.gmra.mxu0 %v3541
  %v4183 = vpop.f32.mrf.mxu0
  %v4184 = vadd.f32 %v4170, %v4183
  %v4185 = vpop.f32.mrf.mxu0
  %v4186 = vadd.f32 %v4172, %v4185
  %4187 = vdwg.mxu0
  %4188 = vmatpush.bf16.msra.mxu0 %v4025
  %4189 = vmatpush.bf16.msra.mxu0 %v4024
  %4190 = vmatpush.bf16.msra.mxu0 %v4023
  %4191 = vmatpush.bf16.msra.mxu0 %v4022
  %4192 = vmatpush.bf16.msra.mxu0 %v4021
  %4193 = vmatpush.bf16.msra.mxu0 %v4020
  %4194 = vmatpush.bf16.msra.mxu0 %v4019
  %4195 = vmatpush.bf16.msra.mxu0 %v4018
  %4196 = vmatmul.bf16.gmra.mxu0 %v3542
  %v4197 = vpop.f32.mrf.mxu0
  %v4198 = vadd.f32 %v4184, %v4197
  %v4199 = vpop.f32.mrf.mxu0
  %v4200 = vadd.f32 %v4186, %v4199
  %4201 = vdwg.mxu0
  %v4202 = vadd.f32 %v4198, %v1625
  %v4203 = vadd.f32 %v4200, %v1627
  %v4204 = vtanh.pop %v4202
  %v4205 = vtanh.pop %v4203
  %v4208 = vrot.slane %v4204, 1
  %v4209 = vrot.slane %v4204, 2
  %v4210 = vrot.slane %v4204, 3
  %v4211 = vrot.slane %v4204, 4
  %v4212 = vrot.slane %v4204, 5
  %v4213 = vrot.slane %v4204, 6
  %v4214 = vrot.slane %v4204, 7
  %v4215 = vrot.slane %v4205, 1
  %v4216 = vrot.slane %v4205, 2
  %v4217 = vrot.slane %v4205, 3
  %v4218 = vrot.slane %v4205, 4
  %v4219 = vrot.slane %v4205, 5
  %v4220 = vrot.slane %v4205, 6
  %v4221 = vrot.slane %v4205, 7
  %v4222 = vperm.slane %v4204, 0
  %v4223 = vperm.slane %v4208, 0
  %v4224 = vperm.slane %v4209, 0
  %v4225 = vperm.slane %v4210, 0
  %v4226 = vperm.slane %v4211, 0
  %v4227 = vperm.slane %v4212, 0
  %v4228 = vperm.slane %v4213, 0
  %v4229 = vperm.slane %v4214, 0
  %v4230 = vperm.slane %v4205, 0
  %v4231 = vperm.slane %v4215, 0
  %v4232 = vperm.slane %v4216, 0
  %v4233 = vperm.slane %v4217, 0
  %v4234 = vperm.slane %v4218, 0
  %v4235 = vperm.slane %v4219, 0
  %v4236 = vperm.slane %v4220, 0
  %v4237 = vperm.slane %v4221, 0
  %v4254 = vmul.f32 %v1635, %v4222
  %v4255 = vmul.f32 %v1641, %v4222
  %v4256 = vmul.f32 %v1647, %v4222
  %v4257 = vmul.f32 %v1653, %v4222
  %v4258 = vmul.f32 %v1660, %v4223
  %v4259 = vmul.f32 %v1666, %v4223
  %v4260 = vmul.f32 %v1672, %v4223
  %v4261 = vmul.f32 %v1678, %v4223
  %v4262 = vmul.f32 %v1685, %v4224
  %v4263 = vmul.f32 %v1691, %v4224
  %v4264 = vmul.f32 %v1697, %v4224
  %v4265 = vmul.f32 %v1703, %v4224
  %v4266 = vmul.f32 %v1710, %v4225
  %v4267 = vmul.f32 %v1716, %v4225
  %v4268 = vmul.f32 %v1722, %v4225
  %v4269 = vmul.f32 %v1728, %v4225
  %v4270 = vmul.f32 %v1735, %v4226
  %v4271 = vmul.f32 %v1741, %v4226
  %v4272 = vmul.f32 %v1747, %v4226
  %v4273 = vmul.f32 %v1753, %v4226
  %v4274 = vmul.f32 %v1760, %v4227
  %v4275 = vmul.f32 %v1766, %v4227
  %v4276 = vmul.f32 %v1772, %v4227
  %v4277 = vmul.f32 %v1778, %v4227
  %v4278 = vmul.f32 %v1785, %v4228
  %v4279 = vmul.f32 %v1791, %v4228
  %v4280 = vmul.f32 %v1797, %v4228
  %v4281 = vmul.f32 %v1803, %v4228
  %v4282 = vmul.f32 %v1810, %v4229
  %v4283 = vmul.f32 %v1816, %v4229
  %v4284 = vmul.f32 %v1822, %v4229
  %v4285 = vmul.f32 %v1828, %v4229
  %v4286 = vmul.f32 %v1835, %v4230
  %v4287 = vmul.f32 %v1841, %v4230
  %v4288 = vmul.f32 %v1847, %v4230
  %v4289 = vmul.f32 %v1853, %v4230
  %v4290 = vmul.f32 %v1860, %v4231
  %v4291 = vmul.f32 %v1866, %v4231
  %v4292 = vmul.f32 %v1872, %v4231
  %v4293 = vmul.f32 %v1878, %v4231
  %v4294 = vmul.f32 %v1885, %v4232
  %v4295 = vmul.f32 %v1891, %v4232
  %v4296 = vmul.f32 %v1897, %v4232
  %v4297 = vmul.f32 %v1903, %v4232
  %v4298 = vmul.f32 %v1910, %v4233
  %v4299 = vmul.f32 %v1916, %v4233
  %v4300 = vmul.f32 %v1922, %v4233
  %v4301 = vmul.f32 %v1928, %v4233
  %v4302 = vmul.f32 %v1935, %v4234
  %v4303 = vmul.f32 %v1941, %v4234
  %v4304 = vmul.f32 %v1947, %v4234
  %v4305 = vmul.f32 %v1953, %v4234
  %v4306 = vmul.f32 %v1960, %v4235
  %v4307 = vmul.f32 %v1966, %v4235
  %v4308 = vmul.f32 %v1972, %v4235
  %v4309 = vmul.f32 %v1978, %v4235
  %v4310 = vmul.f32 %v1985, %v4236
  %v4311 = vmul.f32 %v1991, %v4236
  %v4312 = vmul.f32 %v1997, %v4236
  %v4313 = vmul.f32 %v2003, %v4236
  %v4314 = vmul.f32 %v2010, %v4237
  %v4315 = vmul.f32 %v2016, %v4237
  %v4316 = vmul.f32 %v2022, %v4237
  %v4317 = vmul.f32 %v2028, %v4237
  %v4318 = vrot.slane %v4262, 4
  %v4319 = vsel %vm2398, %v4318, %v4254
  %v4320 = vrot.slane %v4254, 4
  %v4321 = vsel %vm2398, %v4262, %v4320
  %v4323 = vunpack.c.l.s4 1983009808
  %v4324 = vunpack.c.0.s8 %v4323
  %v4325 = vperm.slane %v4319, %v4324
  %v4327 = vunpack.c.l.s4 1983009808
  %v4328 = vunpack.c.0.s8 %v4327
  %v4329 = vperm.slane %v4321, %v4328
  %v4330 = vrot.slane %v4266, 4
  %v4331 = vsel %vm2398, %v4330, %v4258
  %v4332 = vrot.slane %v4258, 4
  %v4333 = vsel %vm2398, %v4266, %v4332
  %v4335 = vunpack.c.l.s4 1983009808
  %v4336 = vunpack.c.0.s8 %v4335
  %v4337 = vperm.slane %v4331, %v4336
  %v4339 = vunpack.c.l.s4 1983009808
  %v4340 = vunpack.c.0.s8 %v4339
  %v4341 = vperm.slane %v4333, %v4340
  %v4342 = vrot.slane %v4278, 4
  %v4343 = vsel %vm2398, %v4342, %v4270
  %v4344 = vrot.slane %v4270, 4
  %v4345 = vsel %vm2398, %v4278, %v4344
  %v4347 = vunpack.c.l.s4 1983009808
  %v4348 = vunpack.c.0.s8 %v4347
  %v4349 = vperm.slane %v4343, %v4348
  %v4351 = vunpack.c.l.s4 1983009808
  %v4352 = vunpack.c.0.s8 %v4351
  %v4353 = vperm.slane %v4345, %v4352
  %v4354 = vrot.slane %v4282, 4
  %v4355 = vsel %vm2398, %v4354, %v4274
  %v4356 = vrot.slane %v4274, 4
  %v4357 = vsel %vm2398, %v4282, %v4356
  %v4359 = vunpack.c.l.s4 1983009808
  %v4360 = vunpack.c.0.s8 %v4359
  %v4361 = vperm.slane %v4355, %v4360
  %v4363 = vunpack.c.l.s4 1983009808
  %v4364 = vunpack.c.0.s8 %v4363
  %v4365 = vperm.slane %v4357, %v4364
  %v4366 = vrot.slane %v4337, 4
  %v4367 = vsel %vm2398, %v4366, %v4325
  %v4368 = vrot.slane %v4325, 4
  %v4369 = vsel %vm2398, %v4337, %v4368
  %v4371 = vunpack.c.l.s4 1934713408
  %v4372 = vunpack.c.0.s8 %v4371
  %v4373 = vperm.slane %v4367, %v4372
  %v4375 = vunpack.c.l.s4 1934713408
  %v4376 = vunpack.c.0.s8 %v4375
  %v4377 = vperm.slane %v4369, %v4376
  %v4378 = vrot.slane %v4341, 4
  %v4379 = vsel %vm2398, %v4378, %v4329
  %v4380 = vrot.slane %v4329, 4
  %v4381 = vsel %vm2398, %v4341, %v4380
  %v4383 = vunpack.c.l.s4 1934713408
  %v4384 = vunpack.c.0.s8 %v4383
  %v4385 = vperm.slane %v4379, %v4384
  %v4387 = vunpack.c.l.s4 1934713408
  %v4388 = vunpack.c.0.s8 %v4387
  %v4389 = vperm.slane %v4381, %v4388
  %v4390 = vrot.slane %v4361, 4
  %v4391 = vsel %vm2398, %v4390, %v4349
  %v4392 = vrot.slane %v4349, 4
  %v4393 = vsel %vm2398, %v4361, %v4392
  %v4395 = vunpack.c.l.s4 1934713408
  %v4396 = vunpack.c.0.s8 %v4395
  %v4397 = vperm.slane %v4391, %v4396
  %v4399 = vunpack.c.l.s4 1934713408
  %v4400 = vunpack.c.0.s8 %v4399
  %v4401 = vperm.slane %v4393, %v4400
  %v4402 = vrot.slane %v4365, 4
  %v4403 = vsel %vm2398, %v4402, %v4353
  %v4404 = vrot.slane %v4353, 4
  %v4405 = vsel %vm2398, %v4365, %v4404
  %v4407 = vunpack.c.l.s4 1934713408
  %v4408 = vunpack.c.0.s8 %v4407
  %v4409 = vperm.slane %v4403, %v4408
  %v4411 = vunpack.c.l.s4 1934713408
  %v4412 = vunpack.c.0.s8 %v4411
  %v4413 = vperm.slane %v4405, %v4412
  %v4414 = vrot.slane %v4397, 4
  %v4415 = vsel %vm2398, %v4414, %v4373
  %v4416 = vrot.slane %v4373, 4
  %v4417 = vsel %vm2398, %v4397, %v4416
  %v4418 = vrot.slane %v4401, 4
  %v4419 = vsel %vm2398, %v4418, %v4377
  %v4420 = vrot.slane %v4377, 4
  %v4421 = vsel %vm2398, %v4401, %v4420
  %v4422 = vrot.slane %v4409, 4
  %v4423 = vsel %vm2398, %v4422, %v4385
  %v4424 = vrot.slane %v4385, 4
  %v4425 = vsel %vm2398, %v4409, %v4424
  %v4426 = vrot.slane %v4413, 4
  %v4427 = vsel %vm2398, %v4426, %v4389
  %v4428 = vrot.slane %v4389, 4
  %v4429 = vsel %vm2398, %v4413, %v4428
  %v4430 = vrot.slane %v4294, 4
  %v4431 = vsel %vm2398, %v4430, %v4286
  %v4432 = vrot.slane %v4286, 4
  %v4433 = vsel %vm2398, %v4294, %v4432
  %v4435 = vunpack.c.l.s4 1983009808
  %v4436 = vunpack.c.0.s8 %v4435
  %v4437 = vperm.slane %v4431, %v4436
  %v4439 = vunpack.c.l.s4 1983009808
  %v4440 = vunpack.c.0.s8 %v4439
  %v4441 = vperm.slane %v4433, %v4440
  %v4442 = vrot.slane %v4298, 4
  %v4443 = vsel %vm2398, %v4442, %v4290
  %v4444 = vrot.slane %v4290, 4
  %v4445 = vsel %vm2398, %v4298, %v4444
  %v4447 = vunpack.c.l.s4 1983009808
  %v4448 = vunpack.c.0.s8 %v4447
  %v4449 = vperm.slane %v4443, %v4448
  %v4451 = vunpack.c.l.s4 1983009808
  %v4452 = vunpack.c.0.s8 %v4451
  %v4453 = vperm.slane %v4445, %v4452
  %v4454 = vrot.slane %v4310, 4
  %v4455 = vsel %vm2398, %v4454, %v4302
  %v4456 = vrot.slane %v4302, 4
  %v4457 = vsel %vm2398, %v4310, %v4456
  %v4459 = vunpack.c.l.s4 1983009808
  %v4460 = vunpack.c.0.s8 %v4459
  %v4461 = vperm.slane %v4455, %v4460
  %v4463 = vunpack.c.l.s4 1983009808
  %v4464 = vunpack.c.0.s8 %v4463
  %v4465 = vperm.slane %v4457, %v4464
  %v4466 = vrot.slane %v4314, 4
  %v4467 = vsel %vm2398, %v4466, %v4306
  %v4468 = vrot.slane %v4306, 4
  %v4469 = vsel %vm2398, %v4314, %v4468
  %v4471 = vunpack.c.l.s4 1983009808
  %v4472 = vunpack.c.0.s8 %v4471
  %v4473 = vperm.slane %v4467, %v4472
  %v4475 = vunpack.c.l.s4 1983009808
  %v4476 = vunpack.c.0.s8 %v4475
  %v4477 = vperm.slane %v4469, %v4476
  %v4478 = vrot.slane %v4449, 4
  %v4479 = vsel %vm2398, %v4478, %v4437
  %v4480 = vrot.slane %v4437, 4
  %v4481 = vsel %vm2398, %v4449, %v4480
  %v4483 = vunpack.c.l.s4 1934713408
  %v4484 = vunpack.c.0.s8 %v4483
  %v4485 = vperm.slane %v4479, %v4484
  %v4487 = vunpack.c.l.s4 1934713408
  %v4488 = vunpack.c.0.s8 %v4487
  %v4489 = vperm.slane %v4481, %v4488
  %v4490 = vrot.slane %v4453, 4
  %v4491 = vsel %vm2398, %v4490, %v4441
  %v4492 = vrot.slane %v4441, 4
  %v4493 = vsel %vm2398, %v4453, %v4492
  %v4495 = vunpack.c.l.s4 1934713408
  %v4496 = vunpack.c.0.s8 %v4495
  %v4497 = vperm.slane %v4491, %v4496
  %v4499 = vunpack.c.l.s4 1934713408
  %v4500 = vunpack.c.0.s8 %v4499
  %v4501 = vperm.slane %v4493, %v4500
  %v4502 = vrot.slane %v4473, 4
  %v4503 = vsel %vm2398, %v4502, %v4461
  %v4504 = vrot.slane %v4461, 4
  %v4505 = vsel %vm2398, %v4473, %v4504
  %v4507 = vunpack.c.l.s4 1934713408
  %v4508 = vunpack.c.0.s8 %v4507
  %v4509 = vperm.slane %v4503, %v4508
  %v4511 = vunpack.c.l.s4 1934713408
  %v4512 = vunpack.c.0.s8 %v4511
  %v4513 = vperm.slane %v4505, %v4512
  %v4514 = vrot.slane %v4477, 4
  %v4515 = vsel %vm2398, %v4514, %v4465
  %v4516 = vrot.slane %v4465, 4
  %v4517 = vsel %vm2398, %v4477, %v4516
  %v4519 = vunpack.c.l.s4 1934713408
  %v4520 = vunpack.c.0.s8 %v4519
  %v4521 = vperm.slane %v4515, %v4520
  %v4523 = vunpack.c.l.s4 1934713408
  %v4524 = vunpack.c.0.s8 %v4523
  %v4525 = vperm.slane %v4517, %v4524
  %v4526 = vrot.slane %v4509, 4
  %v4527 = vsel %vm2398, %v4526, %v4485
  %v4528 = vrot.slane %v4485, 4
  %v4529 = vsel %vm2398, %v4509, %v4528
  %v4530 = vrot.slane %v4513, 4
  %v4531 = vsel %vm2398, %v4530, %v4489
  %v4532 = vrot.slane %v4489, 4
  %v4533 = vsel %vm2398, %v4513, %v4532
  %v4534 = vrot.slane %v4521, 4
  %v4535 = vsel %vm2398, %v4534, %v4497
  %v4536 = vrot.slane %v4497, 4
  %v4537 = vsel %vm2398, %v4521, %v4536
  %v4538 = vrot.slane %v4525, 4
  %v4539 = vsel %vm2398, %v4538, %v4501
  %v4540 = vrot.slane %v4501, 4
  %v4541 = vsel %vm2398, %v4525, %v4540
  %v4542 = vrot.slane %v4263, 4
  %v4543 = vsel %vm2398, %v4542, %v4255
  %v4544 = vrot.slane %v4255, 4
  %v4545 = vsel %vm2398, %v4263, %v4544
  %v4547 = vunpack.c.l.s4 1983009808
  %v4548 = vunpack.c.0.s8 %v4547
  %v4549 = vperm.slane %v4543, %v4548
  %v4551 = vunpack.c.l.s4 1983009808
  %v4552 = vunpack.c.0.s8 %v4551
  %v4553 = vperm.slane %v4545, %v4552
  %v4554 = vrot.slane %v4267, 4
  %v4555 = vsel %vm2398, %v4554, %v4259
  %v4556 = vrot.slane %v4259, 4
  %v4557 = vsel %vm2398, %v4267, %v4556
  %v4559 = vunpack.c.l.s4 1983009808
  %v4560 = vunpack.c.0.s8 %v4559
  %v4561 = vperm.slane %v4555, %v4560
  %v4563 = vunpack.c.l.s4 1983009808
  %v4564 = vunpack.c.0.s8 %v4563
  %v4565 = vperm.slane %v4557, %v4564
  %v4566 = vrot.slane %v4279, 4
  %v4567 = vsel %vm2398, %v4566, %v4271
  %v4568 = vrot.slane %v4271, 4
  %v4569 = vsel %vm2398, %v4279, %v4568
  %v4571 = vunpack.c.l.s4 1983009808
  %v4572 = vunpack.c.0.s8 %v4571
  %v4573 = vperm.slane %v4567, %v4572
  %v4575 = vunpack.c.l.s4 1983009808
  %v4576 = vunpack.c.0.s8 %v4575
  %v4577 = vperm.slane %v4569, %v4576
  %v4578 = vrot.slane %v4283, 4
  %v4579 = vsel %vm2398, %v4578, %v4275
  %v4580 = vrot.slane %v4275, 4
  %v4581 = vsel %vm2398, %v4283, %v4580
  %v4583 = vunpack.c.l.s4 1983009808
  %v4584 = vunpack.c.0.s8 %v4583
  %v4585 = vperm.slane %v4579, %v4584
  %v4587 = vunpack.c.l.s4 1983009808
  %v4588 = vunpack.c.0.s8 %v4587
  %v4589 = vperm.slane %v4581, %v4588
  %v4590 = vrot.slane %v4561, 4
  %v4591 = vsel %vm2398, %v4590, %v4549
  %v4592 = vrot.slane %v4549, 4
  %v4593 = vsel %vm2398, %v4561, %v4592
  %v4595 = vunpack.c.l.s4 1934713408
  %v4596 = vunpack.c.0.s8 %v4595
  %v4597 = vperm.slane %v4591, %v4596
  %v4599 = vunpack.c.l.s4 1934713408
  %v4600 = vunpack.c.0.s8 %v4599
  %v4601 = vperm.slane %v4593, %v4600
  %v4602 = vrot.slane %v4565, 4
  %v4603 = vsel %vm2398, %v4602, %v4553
  %v4604 = vrot.slane %v4553, 4
  %v4605 = vsel %vm2398, %v4565, %v4604
  %v4607 = vunpack.c.l.s4 1934713408
  %v4608 = vunpack.c.0.s8 %v4607
  %v4609 = vperm.slane %v4603, %v4608
  %v4611 = vunpack.c.l.s4 1934713408
  %v4612 = vunpack.c.0.s8 %v4611
  %v4613 = vperm.slane %v4605, %v4612
  %v4614 = vrot.slane %v4585, 4
  %v4615 = vsel %vm2398, %v4614, %v4573
  %v4616 = vrot.slane %v4573, 4
  %v4617 = vsel %vm2398, %v4585, %v4616
  %v4619 = vunpack.c.l.s4 1934713408
  %v4620 = vunpack.c.0.s8 %v4619
  %v4621 = vperm.slane %v4615, %v4620
  %v4623 = vunpack.c.l.s4 1934713408
  %v4624 = vunpack.c.0.s8 %v4623
  %v4625 = vperm.slane %v4617, %v4624
  %v4626 = vrot.slane %v4589, 4
  %v4627 = vsel %vm2398, %v4626, %v4577
  %v4628 = vrot.slane %v4577, 4
  %v4629 = vsel %vm2398, %v4589, %v4628
  %v4631 = vunpack.c.l.s4 1934713408
  %v4632 = vunpack.c.0.s8 %v4631
  %v4633 = vperm.slane %v4627, %v4632
  %v4635 = vunpack.c.l.s4 1934713408
  %v4636 = vunpack.c.0.s8 %v4635
  %v4637 = vperm.slane %v4629, %v4636
  %v4638 = vrot.slane %v4621, 4
  %v4639 = vsel %vm2398, %v4638, %v4597
  %v4640 = vrot.slane %v4597, 4
  %v4641 = vsel %vm2398, %v4621, %v4640
  %v4642 = vrot.slane %v4625, 4
  %v4643 = vsel %vm2398, %v4642, %v4601
  %v4644 = vrot.slane %v4601, 4
  %v4645 = vsel %vm2398, %v4625, %v4644
  %v4646 = vrot.slane %v4633, 4
  %v4647 = vsel %vm2398, %v4646, %v4609
  %v4648 = vrot.slane %v4609, 4
  %v4649 = vsel %vm2398, %v4633, %v4648
  %v4650 = vrot.slane %v4637, 4
  %v4651 = vsel %vm2398, %v4650, %v4613
  %v4652 = vrot.slane %v4613, 4
  %v4653 = vsel %vm2398, %v4637, %v4652
  %v4654 = vrot.slane %v4295, 4
  %v4655 = vsel %vm2398, %v4654, %v4287
  %v4656 = vrot.slane %v4287, 4
  %v4657 = vsel %vm2398, %v4295, %v4656
  %v4659 = vunpack.c.l.s4 1983009808
  %v4660 = vunpack.c.0.s8 %v4659
  %v4661 = vperm.slane %v4655, %v4660
  %v4663 = vunpack.c.l.s4 1983009808
  %v4664 = vunpack.c.0.s8 %v4663
  %v4665 = vperm.slane %v4657, %v4664
  %v4666 = vrot.slane %v4299, 4
  %v4667 = vsel %vm2398, %v4666, %v4291
  %v4668 = vrot.slane %v4291, 4
  %v4669 = vsel %vm2398, %v4299, %v4668
  %v4671 = vunpack.c.l.s4 1983009808
  %v4672 = vunpack.c.0.s8 %v4671
  %v4673 = vperm.slane %v4667, %v4672
  %v4675 = vunpack.c.l.s4 1983009808
  %v4676 = vunpack.c.0.s8 %v4675
  %v4677 = vperm.slane %v4669, %v4676
  %v4678 = vrot.slane %v4311, 4
  %v4679 = vsel %vm2398, %v4678, %v4303
  %v4680 = vrot.slane %v4303, 4
  %v4681 = vsel %vm2398, %v4311, %v4680
  %v4683 = vunpack.c.l.s4 1983009808
  %v4684 = vunpack.c.0.s8 %v4683
  %v4685 = vperm.slane %v4679, %v4684
  %v4687 = vunpack.c.l.s4 1983009808
  %v4688 = vunpack.c.0.s8 %v4687
  %v4689 = vperm.slane %v4681, %v4688
  %v4690 = vrot.slane %v4315, 4
  %v4691 = vsel %vm2398, %v4690, %v4307
  %v4692 = vrot.slane %v4307, 4
  %v4693 = vsel %vm2398, %v4315, %v4692
  %v4695 = vunpack.c.l.s4 1983009808
  %v4696 = vunpack.c.0.s8 %v4695
  %v4697 = vperm.slane %v4691, %v4696
  %v4699 = vunpack.c.l.s4 1983009808
  %v4700 = vunpack.c.0.s8 %v4699
  %v4701 = vperm.slane %v4693, %v4700
  %v4702 = vrot.slane %v4673, 4
  %v4703 = vsel %vm2398, %v4702, %v4661
  %v4704 = vrot.slane %v4661, 4
  %v4705 = vsel %vm2398, %v4673, %v4704
  %v4707 = vunpack.c.l.s4 1934713408
  %v4708 = vunpack.c.0.s8 %v4707
  %v4709 = vperm.slane %v4703, %v4708
  %v4711 = vunpack.c.l.s4 1934713408
  %v4712 = vunpack.c.0.s8 %v4711
  %v4713 = vperm.slane %v4705, %v4712
  %v4714 = vrot.slane %v4677, 4
  %v4715 = vsel %vm2398, %v4714, %v4665
  %v4716 = vrot.slane %v4665, 4
  %v4717 = vsel %vm2398, %v4677, %v4716
  %v4719 = vunpack.c.l.s4 1934713408
  %v4720 = vunpack.c.0.s8 %v4719
  %v4721 = vperm.slane %v4715, %v4720
  %v4723 = vunpack.c.l.s4 1934713408
  %v4724 = vunpack.c.0.s8 %v4723
  %v4725 = vperm.slane %v4717, %v4724
  %v4726 = vrot.slane %v4697, 4
  %v4727 = vsel %vm2398, %v4726, %v4685
  %v4728 = vrot.slane %v4685, 4
  %v4729 = vsel %vm2398, %v4697, %v4728
  %v4731 = vunpack.c.l.s4 1934713408
  %v4732 = vunpack.c.0.s8 %v4731
  %v4733 = vperm.slane %v4727, %v4732
  %v4735 = vunpack.c.l.s4 1934713408
  %v4736 = vunpack.c.0.s8 %v4735
  %v4737 = vperm.slane %v4729, %v4736
  %v4738 = vrot.slane %v4701, 4
  %v4739 = vsel %vm2398, %v4738, %v4689
  %v4740 = vrot.slane %v4689, 4
  %v4741 = vsel %vm2398, %v4701, %v4740
  %v4743 = vunpack.c.l.s4 1934713408
  %v4744 = vunpack.c.0.s8 %v4743
  %v4745 = vperm.slane %v4739, %v4744
  %v4747 = vunpack.c.l.s4 1934713408
  %v4748 = vunpack.c.0.s8 %v4747
  %v4749 = vperm.slane %v4741, %v4748
  %v4750 = vrot.slane %v4733, 4
  %v4751 = vsel %vm2398, %v4750, %v4709
  %v4752 = vrot.slane %v4709, 4
  %v4753 = vsel %vm2398, %v4733, %v4752
  %v4754 = vrot.slane %v4737, 4
  %v4755 = vsel %vm2398, %v4754, %v4713
  %v4756 = vrot.slane %v4713, 4
  %v4757 = vsel %vm2398, %v4737, %v4756
  %v4758 = vrot.slane %v4745, 4
  %v4759 = vsel %vm2398, %v4758, %v4721
  %v4760 = vrot.slane %v4721, 4
  %v4761 = vsel %vm2398, %v4745, %v4760
  %v4762 = vrot.slane %v4749, 4
  %v4763 = vsel %vm2398, %v4762, %v4725
  %v4764 = vrot.slane %v4725, 4
  %v4765 = vsel %vm2398, %v4749, %v4764
  %v4766 = vrot.slane %v4264, 4
  %v4767 = vsel %vm2398, %v4766, %v4256
  %v4768 = vrot.slane %v4256, 4
  %v4769 = vsel %vm2398, %v4264, %v4768
  %v4771 = vunpack.c.l.s4 1983009808
  %v4772 = vunpack.c.0.s8 %v4771
  %v4773 = vperm.slane %v4767, %v4772
  %v4775 = vunpack.c.l.s4 1983009808
  %v4776 = vunpack.c.0.s8 %v4775
  %v4777 = vperm.slane %v4769, %v4776
  %v4778 = vrot.slane %v4268, 4
  %v4779 = vsel %vm2398, %v4778, %v4260
  %v4780 = vrot.slane %v4260, 4
  %v4781 = vsel %vm2398, %v4268, %v4780
  %v4783 = vunpack.c.l.s4 1983009808
  %v4784 = vunpack.c.0.s8 %v4783
  %v4785 = vperm.slane %v4779, %v4784
  %v4787 = vunpack.c.l.s4 1983009808
  %v4788 = vunpack.c.0.s8 %v4787
  %v4789 = vperm.slane %v4781, %v4788
  %v4790 = vrot.slane %v4280, 4
  %v4791 = vsel %vm2398, %v4790, %v4272
  %v4792 = vrot.slane %v4272, 4
  %v4793 = vsel %vm2398, %v4280, %v4792
  %v4795 = vunpack.c.l.s4 1983009808
  %v4796 = vunpack.c.0.s8 %v4795
  %v4797 = vperm.slane %v4791, %v4796
  %v4799 = vunpack.c.l.s4 1983009808
  %v4800 = vunpack.c.0.s8 %v4799
  %v4801 = vperm.slane %v4793, %v4800
  %v4802 = vrot.slane %v4284, 4
  %v4803 = vsel %vm2398, %v4802, %v4276
  %v4804 = vrot.slane %v4276, 4
  %v4805 = vsel %vm2398, %v4284, %v4804
  %v4807 = vunpack.c.l.s4 1983009808
  %v4808 = vunpack.c.0.s8 %v4807
  %v4809 = vperm.slane %v4803, %v4808
  %v4811 = vunpack.c.l.s4 1983009808
  %v4812 = vunpack.c.0.s8 %v4811
  %v4813 = vperm.slane %v4805, %v4812
  %v4814 = vrot.slane %v4785, 4
  %v4815 = vsel %vm2398, %v4814, %v4773
  %v4816 = vrot.slane %v4773, 4
  %v4817 = vsel %vm2398, %v4785, %v4816
  %v4819 = vunpack.c.l.s4 1934713408
  %v4820 = vunpack.c.0.s8 %v4819
  %v4821 = vperm.slane %v4815, %v4820
  %v4823 = vunpack.c.l.s4 1934713408
  %v4824 = vunpack.c.0.s8 %v4823
  %v4825 = vperm.slane %v4817, %v4824
  %v4826 = vrot.slane %v4789, 4
  %v4827 = vsel %vm2398, %v4826, %v4777
  %v4828 = vrot.slane %v4777, 4
  %v4829 = vsel %vm2398, %v4789, %v4828
  %v4831 = vunpack.c.l.s4 1934713408
  %v4832 = vunpack.c.0.s8 %v4831
  %v4833 = vperm.slane %v4827, %v4832
  %v4835 = vunpack.c.l.s4 1934713408
  %v4836 = vunpack.c.0.s8 %v4835
  %v4837 = vperm.slane %v4829, %v4836
  %v4838 = vrot.slane %v4809, 4
  %v4839 = vsel %vm2398, %v4838, %v4797
  %v4840 = vrot.slane %v4797, 4
  %v4841 = vsel %vm2398, %v4809, %v4840
  %v4843 = vunpack.c.l.s4 1934713408
  %v4844 = vunpack.c.0.s8 %v4843
  %v4845 = vperm.slane %v4839, %v4844
  %v4847 = vunpack.c.l.s4 1934713408
  %v4848 = vunpack.c.0.s8 %v4847
  %v4849 = vperm.slane %v4841, %v4848
  %v4850 = vrot.slane %v4813, 4
  %v4851 = vsel %vm2398, %v4850, %v4801
  %v4852 = vrot.slane %v4801, 4
  %v4853 = vsel %vm2398, %v4813, %v4852
  %v4855 = vunpack.c.l.s4 1934713408
  %v4856 = vunpack.c.0.s8 %v4855
  %v4857 = vperm.slane %v4851, %v4856
  %v4859 = vunpack.c.l.s4 1934713408
  %v4860 = vunpack.c.0.s8 %v4859
  %v4861 = vperm.slane %v4853, %v4860
  %v4862 = vrot.slane %v4845, 4
  %v4863 = vsel %vm2398, %v4862, %v4821
  %v4864 = vrot.slane %v4821, 4
  %v4865 = vsel %vm2398, %v4845, %v4864
  %v4866 = vrot.slane %v4849, 4
  %v4867 = vsel %vm2398, %v4866, %v4825
  %v4868 = vrot.slane %v4825, 4
  %v4869 = vsel %vm2398, %v4849, %v4868
  %v4870 = vrot.slane %v4857, 4
  %v4871 = vsel %vm2398, %v4870, %v4833
  %v4872 = vrot.slane %v4833, 4
  %v4873 = vsel %vm2398, %v4857, %v4872
  %v4874 = vrot.slane %v4861, 4
  %v4875 = vsel %vm2398, %v4874, %v4837
  %v4876 = vrot.slane %v4837, 4
  %v4877 = vsel %vm2398, %v4861, %v4876
  %v4878 = vrot.slane %v4296, 4
  %v4879 = vsel %vm2398, %v4878, %v4288
  %v4880 = vrot.slane %v4288, 4
  %v4881 = vsel %vm2398, %v4296, %v4880
  %v4883 = vunpack.c.l.s4 1983009808
  %v4884 = vunpack.c.0.s8 %v4883
  %v4885 = vperm.slane %v4879, %v4884
  %v4887 = vunpack.c.l.s4 1983009808
  %v4888 = vunpack.c.0.s8 %v4887
  %v4889 = vperm.slane %v4881, %v4888
  %v4890 = vrot.slane %v4300, 4
  %v4891 = vsel %vm2398, %v4890, %v4292
  %v4892 = vrot.slane %v4292, 4
  %v4893 = vsel %vm2398, %v4300, %v4892
  %v4895 = vunpack.c.l.s4 1983009808
  %v4896 = vunpack.c.0.s8 %v4895
  %v4897 = vperm.slane %v4891, %v4896
  %v4899 = vunpack.c.l.s4 1983009808
  %v4900 = vunpack.c.0.s8 %v4899
  %v4901 = vperm.slane %v4893, %v4900
  %v4902 = vrot.slane %v4312, 4
  %v4903 = vsel %vm2398, %v4902, %v4304
  %v4904 = vrot.slane %v4304, 4
  %v4905 = vsel %vm2398, %v4312, %v4904
  %v4907 = vunpack.c.l.s4 1983009808
  %v4908 = vunpack.c.0.s8 %v4907
  %v4909 = vperm.slane %v4903, %v4908
  %v4911 = vunpack.c.l.s4 1983009808
  %v4912 = vunpack.c.0.s8 %v4911
  %v4913 = vperm.slane %v4905, %v4912
  %v4914 = vrot.slane %v4316, 4
  %v4915 = vsel %vm2398, %v4914, %v4308
  %v4916 = vrot.slane %v4308, 4
  %v4917 = vsel %vm2398, %v4316, %v4916
  %v4919 = vunpack.c.l.s4 1983009808
  %v4920 = vunpack.c.0.s8 %v4919
  %v4921 = vperm.slane %v4915, %v4920
  %v4923 = vunpack.c.l.s4 1983009808
  %v4924 = vunpack.c.0.s8 %v4923
  %v4925 = vperm.slane %v4917, %v4924
  %v4926 = vrot.slane %v4897, 4
  %v4927 = vsel %vm2398, %v4926, %v4885
  %v4928 = vrot.slane %v4885, 4
  %v4929 = vsel %vm2398, %v4897, %v4928
  %v4931 = vunpack.c.l.s4 1934713408
  %v4932 = vunpack.c.0.s8 %v4931
  %v4933 = vperm.slane %v4927, %v4932
  %v4935 = vunpack.c.l.s4 1934713408
  %v4936 = vunpack.c.0.s8 %v4935
  %v4937 = vperm.slane %v4929, %v4936
  %v4938 = vrot.slane %v4901, 4
  %v4939 = vsel %vm2398, %v4938, %v4889
  %v4940 = vrot.slane %v4889, 4
  %v4941 = vsel %vm2398, %v4901, %v4940
  %v4943 = vunpack.c.l.s4 1934713408
  %v4944 = vunpack.c.0.s8 %v4943
  %v4945 = vperm.slane %v4939, %v4944
  %v4947 = vunpack.c.l.s4 1934713408
  %v4948 = vunpack.c.0.s8 %v4947
  %v4949 = vperm.slane %v4941, %v4948
  %v4950 = vrot.slane %v4921, 4
  %v4951 = vsel %vm2398, %v4950, %v4909
  %v4952 = vrot.slane %v4909, 4
  %v4953 = vsel %vm2398, %v4921, %v4952
  %v4955 = vunpack.c.l.s4 1934713408
  %v4956 = vunpack.c.0.s8 %v4955
  %v4957 = vperm.slane %v4951, %v4956
  %v4959 = vunpack.c.l.s4 1934713408
  %v4960 = vunpack.c.0.s8 %v4959
  %v4961 = vperm.slane %v4953, %v4960
  %v4962 = vrot.slane %v4925, 4
  %v4963 = vsel %vm2398, %v4962, %v4913
  %v4964 = vrot.slane %v4913, 4
  %v4965 = vsel %vm2398, %v4925, %v4964
  %v4967 = vunpack.c.l.s4 1934713408
  %v4968 = vunpack.c.0.s8 %v4967
  %v4969 = vperm.slane %v4963, %v4968
  %v4971 = vunpack.c.l.s4 1934713408
  %v4972 = vunpack.c.0.s8 %v4971
  %v4973 = vperm.slane %v4965, %v4972
  %v4974 = vrot.slane %v4957, 4
  %v4975 = vsel %vm2398, %v4974, %v4933
  %v4976 = vrot.slane %v4933, 4
  %v4977 = vsel %vm2398, %v4957, %v4976
  %v4978 = vrot.slane %v4961, 4
  %v4979 = vsel %vm2398, %v4978, %v4937
  %v4980 = vrot.slane %v4937, 4
  %v4981 = vsel %vm2398, %v4961, %v4980
  %v4982 = vrot.slane %v4969, 4
  %v4983 = vsel %vm2398, %v4982, %v4945
  %v4984 = vrot.slane %v4945, 4
  %v4985 = vsel %vm2398, %v4969, %v4984
  %v4986 = vrot.slane %v4973, 4
  %v4987 = vsel %vm2398, %v4986, %v4949
  %v4988 = vrot.slane %v4949, 4
  %v4989 = vsel %vm2398, %v4973, %v4988
  %v4990 = vrot.slane %v4265, 4
  %v4991 = vsel %vm2398, %v4990, %v4257
  %v4992 = vrot.slane %v4257, 4
  %v4993 = vsel %vm2398, %v4265, %v4992
  %v4995 = vunpack.c.l.s4 1983009808
  %v4996 = vunpack.c.0.s8 %v4995
  %v4997 = vperm.slane %v4991, %v4996
  %v4999 = vunpack.c.l.s4 1983009808
  %v5000 = vunpack.c.0.s8 %v4999
  %v5001 = vperm.slane %v4993, %v5000
  %v5002 = vrot.slane %v4269, 4
  %v5003 = vsel %vm2398, %v5002, %v4261
  %v5004 = vrot.slane %v4261, 4
  %v5005 = vsel %vm2398, %v4269, %v5004
  %v5007 = vunpack.c.l.s4 1983009808
  %v5008 = vunpack.c.0.s8 %v5007
  %v5009 = vperm.slane %v5003, %v5008
  %v5011 = vunpack.c.l.s4 1983009808
  %v5012 = vunpack.c.0.s8 %v5011
  %v5013 = vperm.slane %v5005, %v5012
  %v5014 = vrot.slane %v4281, 4
  %v5015 = vsel %vm2398, %v5014, %v4273
  %v5016 = vrot.slane %v4273, 4
  %v5017 = vsel %vm2398, %v4281, %v5016
  %v5019 = vunpack.c.l.s4 1983009808
  %v5020 = vunpack.c.0.s8 %v5019
  %v5021 = vperm.slane %v5015, %v5020
  %v5023 = vunpack.c.l.s4 1983009808
  %v5024 = vunpack.c.0.s8 %v5023
  %v5025 = vperm.slane %v5017, %v5024
  %v5026 = vrot.slane %v4285, 4
  %v5027 = vsel %vm2398, %v5026, %v4277
  %v5028 = vrot.slane %v4277, 4
  %v5029 = vsel %vm2398, %v4285, %v5028
  %v5031 = vunpack.c.l.s4 1983009808
  %v5032 = vunpack.c.0.s8 %v5031
  %v5033 = vperm.slane %v5027, %v5032
  %v5035 = vunpack.c.l.s4 1983009808
  %v5036 = vunpack.c.0.s8 %v5035
  %v5037 = vperm.slane %v5029, %v5036
  %v5038 = vrot.slane %v5009, 4
  %v5039 = vsel %vm2398, %v5038, %v4997
  %v5040 = vrot.slane %v4997, 4
  %v5041 = vsel %vm2398, %v5009, %v5040
  %v5043 = vunpack.c.l.s4 1934713408
  %v5044 = vunpack.c.0.s8 %v5043
  %v5045 = vperm.slane %v5039, %v5044
  %v5047 = vunpack.c.l.s4 1934713408
  %v5048 = vunpack.c.0.s8 %v5047
  %v5049 = vperm.slane %v5041, %v5048
  %v5050 = vrot.slane %v5013, 4
  %v5051 = vsel %vm2398, %v5050, %v5001
  %v5052 = vrot.slane %v5001, 4
  %v5053 = vsel %vm2398, %v5013, %v5052
  %v5055 = vunpack.c.l.s4 1934713408
  %v5056 = vunpack.c.0.s8 %v5055
  %v5057 = vperm.slane %v5051, %v5056
  %v5059 = vunpack.c.l.s4 1934713408
  %v5060 = vunpack.c.0.s8 %v5059
  %v5061 = vperm.slane %v5053, %v5060
  %v5062 = vrot.slane %v5033, 4
  %v5063 = vsel %vm2398, %v5062, %v5021
  %v5064 = vrot.slane %v5021, 4
  %v5065 = vsel %vm2398, %v5033, %v5064
  %v5067 = vunpack.c.l.s4 1934713408
  %v5068 = vunpack.c.0.s8 %v5067
  %v5069 = vperm.slane %v5063, %v5068
  %v5071 = vunpack.c.l.s4 1934713408
  %v5072 = vunpack.c.0.s8 %v5071
  %v5073 = vperm.slane %v5065, %v5072
  %v5074 = vrot.slane %v5037, 4
  %v5075 = vsel %vm2398, %v5074, %v5025
  %v5076 = vrot.slane %v5025, 4
  %v5077 = vsel %vm2398, %v5037, %v5076
  %v5079 = vunpack.c.l.s4 1934713408
  %v5080 = vunpack.c.0.s8 %v5079
  %v5081 = vperm.slane %v5075, %v5080
  %v5083 = vunpack.c.l.s4 1934713408
  %v5084 = vunpack.c.0.s8 %v5083
  %v5085 = vperm.slane %v5077, %v5084
  %v5086 = vrot.slane %v5069, 4
  %v5087 = vsel %vm2398, %v5086, %v5045
  %v5088 = vrot.slane %v5045, 4
  %v5089 = vsel %vm2398, %v5069, %v5088
  %v5090 = vrot.slane %v5073, 4
  %v5091 = vsel %vm2398, %v5090, %v5049
  %v5092 = vrot.slane %v5049, 4
  %v5093 = vsel %vm2398, %v5073, %v5092
  %v5094 = vrot.slane %v5081, 4
  %v5095 = vsel %vm2398, %v5094, %v5057
  %v5096 = vrot.slane %v5057, 4
  %v5097 = vsel %vm2398, %v5081, %v5096
  %v5098 = vrot.slane %v5085, 4
  %v5099 = vsel %vm2398, %v5098, %v5061
  %v5100 = vrot.slane %v5061, 4
  %v5101 = vsel %vm2398, %v5085, %v5100
  %v5102 = vrot.slane %v4297, 4
  %v5103 = vsel %vm2398, %v5102, %v4289
  %v5104 = vrot.slane %v4289, 4
  %v5105 = vsel %vm2398, %v4297, %v5104
  %v5107 = vunpack.c.l.s4 1983009808
  %v5108 = vunpack.c.0.s8 %v5107
  %v5109 = vperm.slane %v5103, %v5108
  %v5111 = vunpack.c.l.s4 1983009808
  %v5112 = vunpack.c.0.s8 %v5111
  %v5113 = vperm.slane %v5105, %v5112
  %v5114 = vrot.slane %v4301, 4
  %v5115 = vsel %vm2398, %v5114, %v4293
  %v5116 = vrot.slane %v4293, 4
  %v5117 = vsel %vm2398, %v4301, %v5116
  %v5119 = vunpack.c.l.s4 1983009808
  %v5120 = vunpack.c.0.s8 %v5119
  %v5121 = vperm.slane %v5115, %v5120
  %v5123 = vunpack.c.l.s4 1983009808
  %v5124 = vunpack.c.0.s8 %v5123
  %v5125 = vperm.slane %v5117, %v5124
  %v5126 = vrot.slane %v4313, 4
  %v5127 = vsel %vm2398, %v5126, %v4305
  %v5128 = vrot.slane %v4305, 4
  %v5129 = vsel %vm2398, %v4313, %v5128
  %v5131 = vunpack.c.l.s4 1983009808
  %v5132 = vunpack.c.0.s8 %v5131
  %v5133 = vperm.slane %v5127, %v5132
  %v5135 = vunpack.c.l.s4 1983009808
  %v5136 = vunpack.c.0.s8 %v5135
  %v5137 = vperm.slane %v5129, %v5136
  %v5138 = vrot.slane %v4317, 4
  %v5139 = vsel %vm2398, %v5138, %v4309
  %v5140 = vrot.slane %v4309, 4
  %v5141 = vsel %vm2398, %v4317, %v5140
  %v5143 = vunpack.c.l.s4 1983009808
  %v5144 = vunpack.c.0.s8 %v5143
  %v5145 = vperm.slane %v5139, %v5144
  %v5147 = vunpack.c.l.s4 1983009808
  %v5148 = vunpack.c.0.s8 %v5147
  %v5149 = vperm.slane %v5141, %v5148
  %v5150 = vrot.slane %v5121, 4
  %v5151 = vsel %vm2398, %v5150, %v5109
  %v5152 = vrot.slane %v5109, 4
  %v5153 = vsel %vm2398, %v5121, %v5152
  %v5155 = vunpack.c.l.s4 1934713408
  %v5156 = vunpack.c.0.s8 %v5155
  %v5157 = vperm.slane %v5151, %v5156
  %v5159 = vunpack.c.l.s4 1934713408
  %v5160 = vunpack.c.0.s8 %v5159
  %v5161 = vperm.slane %v5153, %v5160
  %v5162 = vrot.slane %v5125, 4
  %v5163 = vsel %vm2398, %v5162, %v5113
  %v5164 = vrot.slane %v5113, 4
  %v5165 = vsel %vm2398, %v5125, %v5164
  %v5167 = vunpack.c.l.s4 1934713408
  %v5168 = vunpack.c.0.s8 %v5167
  %v5169 = vperm.slane %v5163, %v5168
  %v5171 = vunpack.c.l.s4 1934713408
  %v5172 = vunpack.c.0.s8 %v5171
  %v5173 = vperm.slane %v5165, %v5172
  %v5174 = vrot.slane %v5145, 4
  %v5175 = vsel %vm2398, %v5174, %v5133
  %v5176 = vrot.slane %v5133, 4
  %v5177 = vsel %vm2398, %v5145, %v5176
  %v5179 = vunpack.c.l.s4 1934713408
  %v5180 = vunpack.c.0.s8 %v5179
  %v5181 = vperm.slane %v5175, %v5180
  %v5183 = vunpack.c.l.s4 1934713408
  %v5184 = vunpack.c.0.s8 %v5183
  %v5185 = vperm.slane %v5177, %v5184
  %v5186 = vrot.slane %v5149, 4
  %v5187 = vsel %vm2398, %v5186, %v5137
  %v5188 = vrot.slane %v5137, 4
  %v5189 = vsel %vm2398, %v5149, %v5188
  %v5191 = vunpack.c.l.s4 1934713408
  %v5192 = vunpack.c.0.s8 %v5191
  %v5193 = vperm.slane %v5187, %v5192
  %v5195 = vunpack.c.l.s4 1934713408
  %v5196 = vunpack.c.0.s8 %v5195
  %v5197 = vperm.slane %v5189, %v5196
  %v5198 = vrot.slane %v5181, 4
  %v5199 = vsel %vm2398, %v5198, %v5157
  %v5200 = vrot.slane %v5157, 4
  %v5201 = vsel %vm2398, %v5181, %v5200
  %v5202 = vrot.slane %v5185, 4
  %v5203 = vsel %vm2398, %v5202, %v5161
  %v5204 = vrot.slane %v5161, 4
  %v5205 = vsel %vm2398, %v5185, %v5204
  %v5206 = vrot.slane %v5193, 4
  %v5207 = vsel %vm2398, %v5206, %v5169
  %v5208 = vrot.slane %v5169, 4
  %v5209 = vsel %vm2398, %v5193, %v5208
  %v5210 = vrot.slane %v5197, 4
  %v5211 = vsel %vm2398, %v5210, %v5173
  %v5212 = vrot.slane %v5173, 4
  %v5213 = vsel %vm2398, %v5197, %v5212
  %5216 = vrot.lane.b32.xlu0 %v4417, 32
  %v5217 = vpop.permute.xlu0 %5216
  %5218 = vrot.lane.b32.xlu0 %v4529, 32
  %v5219 = vpop.permute.xlu0 %5218
  %5224 = vrot.lane.b32.xlu0 %v4419, 64
  %v5225 = vpop.permute.xlu0 %5224
  %5226 = vrot.lane.b32.xlu0 %v4531, 64
  %v5227 = vpop.permute.xlu0 %5226
  %5232 = vrot.lane.b32.xlu0 %v4421, 96
  %v5233 = vpop.permute.xlu0 %5232
  %5234 = vrot.lane.b32.xlu0 %v4533, 96
  %v5235 = vpop.permute.xlu0 %5234
  %5240 = vrot.lane.b32.xlu0 %v4425, 32
  %v5241 = vpop.permute.xlu0 %5240
  %5242 = vrot.lane.b32.xlu0 %v4537, 32
  %v5243 = vpop.permute.xlu0 %5242
  %5248 = vrot.lane.b32.xlu0 %v4427, 64
  %v5249 = vpop.permute.xlu0 %5248
  %5250 = vrot.lane.b32.xlu0 %v4539, 64
  %v5251 = vpop.permute.xlu0 %5250
  %5256 = vrot.lane.b32.xlu0 %v4429, 96
  %v5257 = vpop.permute.xlu0 %5256
  %5258 = vrot.lane.b32.xlu0 %v4541, 96
  %v5259 = vpop.permute.xlu0 %5258
  %5264 = vrot.lane.b32.xlu0 %v4641, 32
  %v5265 = vpop.permute.xlu0 %5264
  %5266 = vrot.lane.b32.xlu0 %v4753, 32
  %v5267 = vpop.permute.xlu0 %5266
  %5272 = vrot.lane.b32.xlu0 %v4643, 64
  %v5273 = vpop.permute.xlu0 %5272
  %5274 = vrot.lane.b32.xlu0 %v4755, 64
  %v5275 = vpop.permute.xlu0 %5274
  %5280 = vrot.lane.b32.xlu0 %v4645, 96
  %v5281 = vpop.permute.xlu0 %5280
  %5282 = vrot.lane.b32.xlu0 %v4757, 96
  %v5283 = vpop.permute.xlu0 %5282
  %5288 = vrot.lane.b32.xlu0 %v4649, 32
  %v5289 = vpop.permute.xlu0 %5288
  %5290 = vrot.lane.b32.xlu0 %v4761, 32
  %v5291 = vpop.permute.xlu0 %5290
  %5296 = vrot.lane.b32.xlu0 %v4651, 64
  %v5297 = vpop.permute.xlu0 %5296
  %5298 = vrot.lane.b32.xlu0 %v4763, 64
  %v5299 = vpop.permute.xlu0 %5298
  %5304 = vrot.lane.b32.xlu0 %v4653, 96
  %v5305 = vpop.permute.xlu0 %5304
  %5306 = vrot.lane.b32.xlu0 %v4765, 96
  %v5307 = vpop.permute.xlu0 %5306
  %5312 = vrot.lane.b32.xlu0 %v4865, 32
  %v5313 = vpop.permute.xlu0 %5312
  %5314 = vrot.lane.b32.xlu0 %v4977, 32
  %v5315 = vpop.permute.xlu0 %5314
  %5320 = vrot.lane.b32.xlu0 %v4867, 64
  %v5321 = vpop.permute.xlu0 %5320
  %5322 = vrot.lane.b32.xlu0 %v4979, 64
  %v5323 = vpop.permute.xlu0 %5322
  %5328 = vrot.lane.b32.xlu0 %v4869, 96
  %v5329 = vpop.permute.xlu0 %5328
  %5330 = vrot.lane.b32.xlu0 %v4981, 96
  %v5331 = vpop.permute.xlu0 %5330
  %5336 = vrot.lane.b32.xlu0 %v4873, 32
  %v5337 = vpop.permute.xlu0 %5336
  %5338 = vrot.lane.b32.xlu0 %v4985, 32
  %v5339 = vpop.permute.xlu0 %5338
  %5344 = vrot.lane.b32.xlu0 %v4875, 64
  %v5345 = vpop.permute.xlu0 %5344
  %5346 = vrot.lane.b32.xlu0 %v4987, 64
  %v5347 = vpop.permute.xlu0 %5346
  %5352 = vrot.lane.b32.xlu0 %v4877, 96
  %v5353 = vpop.permute.xlu0 %5352
  %5354 = vrot.lane.b32.xlu0 %v4989, 96
  %v5355 = vpop.permute.xlu0 %5354
  %5360 = vrot.lane.b32.xlu0 %v5089, 32
  %v5361 = vpop.permute.xlu0 %5360
  %5362 = vrot.lane.b32.xlu0 %v5201, 32
  %v5363 = vpop.permute.xlu0 %5362
  %5368 = vrot.lane.b32.xlu0 %v5091, 64
  %v5369 = vpop.permute.xlu0 %5368
  %5370 = vrot.lane.b32.xlu0 %v5203, 64
  %v5371 = vpop.permute.xlu0 %5370
  %5376 = vrot.lane.b32.xlu0 %v5093, 96
  %v5377 = vpop.permute.xlu0 %5376
  %5378 = vrot.lane.b32.xlu0 %v5205, 96
  %v5379 = vpop.permute.xlu0 %5378
  %5384 = vrot.lane.b32.xlu0 %v5097, 32
  %v5385 = vpop.permute.xlu0 %5384
  %5386 = vrot.lane.b32.xlu0 %v5209, 32
  %v5387 = vpop.permute.xlu0 %5386
  %5392 = vrot.lane.b32.xlu0 %v5099, 64
  %v5393 = vpop.permute.xlu0 %5392
  %5394 = vrot.lane.b32.xlu0 %v5211, 64
  %v5395 = vpop.permute.xlu0 %5394
  %5400 = vrot.lane.b32.xlu0 %v5101, 96
  %v5401 = vpop.permute.xlu0 %5400
  %5402 = vrot.lane.b32.xlu0 %v5213, 96
  %v5403 = vpop.permute.xlu0 %5402
  %v5406 = vsel %vm84, %v4415, %v5217
  %v5407 = vsel %vm84, %v4527, %v5219
  %v5408 = vsel %vm644, %v5406, %v5225
  %v5409 = vsel %vm644, %v5407, %v5227
  %v5410 = vsel %vm3490, %v5408, %v5233
  %v5411 = vsel %vm3490, %v5409, %v5235
  %v5412 = vsel %vm84, %v4423, %v5241
  %v5413 = vsel %vm84, %v4535, %v5243
  %v5414 = vsel %vm644, %v5412, %v5249
  %v5415 = vsel %vm644, %v5413, %v5251
  %v5416 = vsel %vm3490, %v5414, %v5257
  %v5417 = vsel %vm3490, %v5415, %v5259
  %v5418 = vsel %vm84, %v4639, %v5265
  %v5419 = vsel %vm84, %v4751, %v5267
  %v5420 = vsel %vm644, %v5418, %v5273
  %v5421 = vsel %vm644, %v5419, %v5275
  %v5422 = vsel %vm3490, %v5420, %v5281
  %v5423 = vsel %vm3490, %v5421, %v5283
  %v5424 = vsel %vm84, %v4647, %v5289
  %v5425 = vsel %vm84, %v4759, %v5291
  %v5426 = vsel %vm644, %v5424, %v5297
  %v5427 = vsel %vm644, %v5425, %v5299
  %v5428 = vsel %vm3490, %v5426, %v5305
  %v5429 = vsel %vm3490, %v5427, %v5307
  %v5430 = vsel %vm84, %v4863, %v5313
  %v5431 = vsel %vm84, %v4975, %v5315
  %v5432 = vsel %vm644, %v5430, %v5321
  %v5433 = vsel %vm644, %v5431, %v5323
  %v5434 = vsel %vm3490, %v5432, %v5329
  %v5435 = vsel %vm3490, %v5433, %v5331
  %v5436 = vsel %vm84, %v4871, %v5337
  %v5437 = vsel %vm84, %v4983, %v5339
  %v5438 = vsel %vm644, %v5436, %v5345
  %v5439 = vsel %vm644, %v5437, %v5347
  %v5440 = vsel %vm3490, %v5438, %v5353
  %v5441 = vsel %vm3490, %v5439, %v5355
  %v5442 = vsel %vm84, %v5087, %v5361
  %v5443 = vsel %vm84, %v5199, %v5363
  %v5444 = vsel %vm644, %v5442, %v5369
  %v5445 = vsel %vm644, %v5443, %v5371
  %v5446 = vsel %vm3490, %v5444, %v5377
  %v5447 = vsel %vm3490, %v5445, %v5379
  %v5448 = vsel %vm84, %v5095, %v5385
  %v5449 = vsel %vm84, %v5207, %v5387
  %v5450 = vsel %vm644, %v5448, %v5393
  %v5451 = vsel %vm644, %v5449, %v5395
  %v5452 = vsel %vm3490, %v5450, %v5401
  %v5453 = vsel %vm3490, %v5451, %v5403
  %v5454 = vpack.c.bf16 %v5411, %v5410
  %v5455 = vpack.c.bf16 %v5417, %v5416
  %v5456 = vpack.c.bf16 %v5423, %v5422
  %v5457 = vpack.c.bf16 %v5429, %v5428
  %v5458 = vpack.c.bf16 %v5435, %v5434
  %v5459 = vpack.c.bf16 %v5441, %v5440
  %v5460 = vpack.c.bf16 %v5447, %v5446
  %v5461 = vpack.c.bf16 %v5453, %v5452
  %s5462 = scalar_lea.vmem %s13, 512
  %v5463 = vld [vmem:[%s5462] sm:$0xf]
  %v5464 = vld [vmem:[%s5462 + $0x4] sm:$0xf]
  %v5465 = vld [vmem:[%s5462 + $0x8] sm:$0xf]
  %v5466 = vld [vmem:[%s5462 + $0xc] sm:$0xf]
  %v5467 = vld [vmem:[%s5462 + $0x10] sm:$0xf]
  %v5468 = vld [vmem:[%s5462 + $0x14] sm:$0xf]
  %v5469 = vld [vmem:[%s5462 + $0x18] sm:$0xf]
  %v5470 = vld [vmem:[%s5462 + $0x1c] sm:$0xf]
  %v5471 = vld [vmem:[%s5462 + $0x20] sm:$0xf]
  %v5472 = vld [vmem:[%s5462 + $0x24] sm:$0xf]
  %v5473 = vld [vmem:[%s5462 + $0x28] sm:$0xf]
  %v5474 = vld [vmem:[%s5462 + $0x2c] sm:$0xf]
  %v5475 = vld [vmem:[%s5462 + $0x30] sm:$0xf]
  %v5476 = vld [vmem:[%s5462 + $0x34] sm:$0xf]
  %v5477 = vld [vmem:[%s5462 + $0x38] sm:$0xf]
  %v5478 = vld [vmem:[%s5462 + $0x3c] sm:$0xf]
  %v5479 = vld [vmem:[%s5462 + $0x40] sm:$0xf]
  %v5480 = vld [vmem:[%s5462 + $0x44] sm:$0xf]
  %v5481 = vld [vmem:[%s5462 + $0x48] sm:$0xf]
  %v5482 = vld [vmem:[%s5462 + $0x4c] sm:$0xf]
  %v5483 = vld [vmem:[%s5462 + $0x50] sm:$0xf]
  %v5484 = vld [vmem:[%s5462 + $0x54] sm:$0xf]
  %v5485 = vld [vmem:[%s5462 + $0x58] sm:$0xf]
  %v5486 = vld [vmem:[%s5462 + $0x5c] sm:$0xf]
  %v5487 = vld [vmem:[%s5462 + $0x60] sm:$0xf]
  %v5488 = vld [vmem:[%s5462 + $0x64] sm:$0xf]
  %v5489 = vld [vmem:[%s5462 + $0x68] sm:$0xf]
  %v5490 = vld [vmem:[%s5462 + $0x6c] sm:$0xf]
  %v5491 = vld [vmem:[%s5462 + $0x70] sm:$0xf]
  %v5492 = vld [vmem:[%s5462 + $0x74] sm:$0xf]
  %v5493 = vld [vmem:[%s5462 + $0x78] sm:$0xf]
  %v5494 = vld [vmem:[%s5462 + $0x7c] sm:$0xf]
  %v5495 = vld [vmem:[%s5462 + $0x80] sm:$0xf]
  %v5496 = vld [vmem:[%s5462 + $0x84] sm:$0xf]
  %v5497 = vld [vmem:[%s5462 + $0x88] sm:$0xf]
  %v5498 = vld [vmem:[%s5462 + $0x8c] sm:$0xf]
  %v5499 = vld [vmem:[%s5462 + $0x90] sm:$0xf]
  %v5500 = vld [vmem:[%s5462 + $0x94] sm:$0xf]
  %v5501 = vld [vmem:[%s5462 + $0x98] sm:$0xf]
  %v5502 = vld [vmem:[%s5462 + $0x9c] sm:$0xf]
  %v5503 = vld [vmem:[%s5462 + $0xa0] sm:$0xf]
  %v5504 = vld [vmem:[%s5462 + $0xa4] sm:$0xf]
  %v5505 = vld [vmem:[%s5462 + $0xa8] sm:$0xf]
  %v5506 = vld [vmem:[%s5462 + $0xac] sm:$0xf]
  %v5507 = vld [vmem:[%s5462 + $0xb0] sm:$0xf]
  %v5508 = vld [vmem:[%s5462 + $0xb4] sm:$0xf]
  %v5509 = vld [vmem:[%s5462 + $0xb8] sm:$0xf]
  %v5510 = vld [vmem:[%s5462 + $0xbc] sm:$0xf]
  %v5511 = vld [vmem:[%s5462 + $0xc0] sm:$0xf]
  %v5512 = vld [vmem:[%s5462 + $0xc4] sm:$0xf]
  %v5513 = vld [vmem:[%s5462 + $0xc8] sm:$0xf]
  %v5514 = vld [vmem:[%s5462 + $0xcc] sm:$0xf]
  %v5515 = vld [vmem:[%s5462 + $0xd0] sm:$0xf]
  %v5516 = vld [vmem:[%s5462 + $0xd4] sm:$0xf]
  %v5517 = vld [vmem:[%s5462 + $0xd8] sm:$0xf]
  %v5518 = vld [vmem:[%s5462 + $0xdc] sm:$0xf]
  %v5519 = vld [vmem:[%s5462 + $0xe0] sm:$0xf]
  %v5520 = vld [vmem:[%s5462 + $0xe4] sm:$0xf]
  %v5521 = vld [vmem:[%s5462 + $0xe8] sm:$0xf]
  %v5522 = vld [vmem:[%s5462 + $0xec] sm:$0xf]
  %v5523 = vld [vmem:[%s5462 + $0xf0] sm:$0xf]
  %v5524 = vld [vmem:[%s5462 + $0xf4] sm:$0xf]
  %v5525 = vld [vmem:[%s5462 + $0xf8] sm:$0xf]
  %v5526 = vld [vmem:[%s5462 + $0xfc] sm:$0xf]
  %v5527 = vld [vmem:[%s5462 + $0x100] sm:$0xf]
  %v5528 = vld [vmem:[%s5462 + $0x104] sm:$0xf]
  %v5529 = vld [vmem:[%s5462 + $0x108] sm:$0xf]
  %v5530 = vld [vmem:[%s5462 + $0x10c] sm:$0xf]
  %v5531 = vld [vmem:[%s5462 + $0x110] sm:$0xf]
  %v5532 = vld [vmem:[%s5462 + $0x114] sm:$0xf]
  %v5533 = vld [vmem:[%s5462 + $0x118] sm:$0xf]
  %v5534 = vld [vmem:[%s5462 + $0x11c] sm:$0xf]
  %v5535 = vld [vmem:[%s5462 + $0x120] sm:$0xf]
  %v5536 = vld [vmem:[%s5462 + $0x124] sm:$0xf]
  %v5537 = vld [vmem:[%s5462 + $0x128] sm:$0xf]
  %v5538 = vld [vmem:[%s5462 + $0x12c] sm:$0xf]
  %v5539 = vld [vmem:[%s5462 + $0x130] sm:$0xf]
  %v5540 = vld [vmem:[%s5462 + $0x134] sm:$0xf]
  %v5541 = vld [vmem:[%s5462 + $0x138] sm:$0xf]
  %v5542 = vld [vmem:[%s5462 + $0x13c] sm:$0xf]
  %v5543 = vld [vmem:[%s5462 + $0x140] sm:$0xf]
  %v5544 = vld [vmem:[%s5462 + $0x144] sm:$0xf]
  %v5545 = vld [vmem:[%s5462 + $0x148] sm:$0xf]
  %v5546 = vld [vmem:[%s5462 + $0x14c] sm:$0xf]
  %v5547 = vld [vmem:[%s5462 + $0x150] sm:$0xf]
  %v5548 = vld [vmem:[%s5462 + $0x154] sm:$0xf]
  %v5549 = vld [vmem:[%s5462 + $0x158] sm:$0xf]
  %v5550 = vld [vmem:[%s5462 + $0x15c] sm:$0xf]
  %v5551 = vld [vmem:[%s5462 + $0x160] sm:$0xf]
  %v5552 = vld [vmem:[%s5462 + $0x164] sm:$0xf]
  %v5553 = vld [vmem:[%s5462 + $0x168] sm:$0xf]
  %v5554 = vld [vmem:[%s5462 + $0x16c] sm:$0xf]
  %v5555 = vld [vmem:[%s5462 + $0x170] sm:$0xf]
  %v5556 = vld [vmem:[%s5462 + $0x174] sm:$0xf]
  %v5557 = vld [vmem:[%s5462 + $0x178] sm:$0xf]
  %v5558 = vld [vmem:[%s5462 + $0x17c] sm:$0xf]
  %v5559 = vld [vmem:[%s5462 + $0x180] sm:$0xf]
  %v5560 = vld [vmem:[%s5462 + $0x184] sm:$0xf]
  %v5561 = vld [vmem:[%s5462 + $0x188] sm:$0xf]
  %v5562 = vld [vmem:[%s5462 + $0x18c] sm:$0xf]
  %v5563 = vld [vmem:[%s5462 + $0x190] sm:$0xf]
  %v5564 = vld [vmem:[%s5462 + $0x194] sm:$0xf]
  %v5565 = vld [vmem:[%s5462 + $0x198] sm:$0xf]
  %v5566 = vld [vmem:[%s5462 + $0x19c] sm:$0xf]
  %v5567 = vld [vmem:[%s5462 + $0x1a0] sm:$0xf]
  %v5568 = vld [vmem:[%s5462 + $0x1a4] sm:$0xf]
  %v5569 = vld [vmem:[%s5462 + $0x1a8] sm:$0xf]
  %v5570 = vld [vmem:[%s5462 + $0x1ac] sm:$0xf]
  %v5571 = vld [vmem:[%s5462 + $0x1b0] sm:$0xf]
  %v5572 = vld [vmem:[%s5462 + $0x1b4] sm:$0xf]
  %v5573 = vld [vmem:[%s5462 + $0x1b8] sm:$0xf]
  %v5574 = vld [vmem:[%s5462 + $0x1bc] sm:$0xf]
  %v5575 = vld [vmem:[%s5462 + $0x1c0] sm:$0xf]
  %v5576 = vld [vmem:[%s5462 + $0x1c4] sm:$0xf]
  %v5577 = vld [vmem:[%s5462 + $0x1c8] sm:$0xf]
  %v5578 = vld [vmem:[%s5462 + $0x1cc] sm:$0xf]
  %v5579 = vld [vmem:[%s5462 + $0x1d0] sm:$0xf]
  %v5580 = vld [vmem:[%s5462 + $0x1d4] sm:$0xf]
  %v5581 = vld [vmem:[%s5462 + $0x1d8] sm:$0xf]
  %v5582 = vld [vmem:[%s5462 + $0x1dc] sm:$0xf]
  %v5583 = vld [vmem:[%s5462 + $0x1e0] sm:$0xf]
  %v5584 = vld [vmem:[%s5462 + $0x1e4] sm:$0xf]
  %v5585 = vld [vmem:[%s5462 + $0x1e8] sm:$0xf]
  %v5586 = vld [vmem:[%s5462 + $0x1ec] sm:$0xf]
  %v5587 = vld [vmem:[%s5462 + $0x1f0] sm:$0xf]
  %v5588 = vld [vmem:[%s5462 + $0x1f4] sm:$0xf]
  %v5589 = vld [vmem:[%s5462 + $0x1f8] sm:$0xf]
  %v5590 = vld [vmem:[%s5462 + $0x1fc] sm:$0xf]
  %v5591 = vpack.c.bf16 %v4205, %v4204
  %s5592 = scalar_lea.vmem %s14, 16
  %v5593 = vld [vmem:[%s5592] sm:$0xf]
  %v5594 = vld [vmem:[%s5592 + $0x4] sm:$0xf]
  %v5595 = vld [vmem:[%s5592 + $0x8] sm:$0xf]
  %v5596 = vld [vmem:[%s5592 + $0xc] sm:$0xf]
  %v5601 = vunpack.c.l.b16 %v5593
  %v5602 = vunpack.c.l.b16 %v5594
  %v5603 = vunpack.c.l.b16 %v5595
  %v5604 = vunpack.c.l.b16 %v5596
  %v5605 = vpack.c.b16 %v5602, %v5601
  %v5606 = vpack.c.b16 %v5604, %v5603
  %v5610 = vsel %vm84, %v5591, 0
  %5612 = vmatpush.bf16.msra.mxu0 0
  %5613 = vmatpush.bf16.msra.mxu0 0
  %5614 = vmatpush.bf16.msra.mxu0 0
  %5615 = vmatpush.bf16.msra.mxu0 0
  %5616 = vmatpush.bf16.msra.mxu0 0
  %5617 = vmatpush.bf16.msra.mxu0 0
  %5618 = vmatpush.bf16.msra.mxu0 %v5606
  %5619 = vmatpush.bf16.msra.mxu0 %v5605
  %5620 = vmatmul.bf16.gmra.mxu0 %v5610
  %v5621 = vpop.f32.mrf.mxu0
  %v5622 = vadd.f32 0.0, %v5621
  %v5623 = vpop.f32.mrf.mxu0
  %v5624 = vadd.f32 0.0, %v5623
  %5625 = vdwg.mxu0
  %v5754 = vunpack.c.l.b16 %v5463
  %v5755 = vunpack.c.l.b16 %v5464
  %v5756 = vunpack.c.l.b16 %v5465
  %v5757 = vunpack.c.l.b16 %v5466
  %v5758 = vunpack.c.l.b16 %v5467
  %v5759 = vunpack.c.l.b16 %v5468
  %v5760 = vunpack.c.l.b16 %v5469
  %v5761 = vunpack.c.l.b16 %v5470
  %v5762 = vunpack.c.l.b16 %v5471
  %v5763 = vunpack.c.l.b16 %v5472
  %v5764 = vunpack.c.l.b16 %v5473
  %v5765 = vunpack.c.l.b16 %v5474
  %v5766 = vunpack.c.l.b16 %v5475
  %v5767 = vunpack.c.l.b16 %v5476
  %v5768 = vunpack.c.l.b16 %v5477
  %v5769 = vunpack.c.l.b16 %v5478
  %v5770 = vunpack.c.l.b16 %v5479
  %v5771 = vunpack.c.l.b16 %v5480
  %v5772 = vunpack.c.l.b16 %v5481
  %v5773 = vunpack.c.l.b16 %v5482
  %v5774 = vunpack.c.l.b16 %v5483
  %v5775 = vunpack.c.l.b16 %v5484
  %v5776 = vunpack.c.l.b16 %v5485
  %v5777 = vunpack.c.l.b16 %v5486
  %v5778 = vunpack.c.l.b16 %v5487
  %v5779 = vunpack.c.l.b16 %v5488
  %v5780 = vunpack.c.l.b16 %v5489
  %v5781 = vunpack.c.l.b16 %v5490
  %v5782 = vunpack.c.l.b16 %v5491
  %v5783 = vunpack.c.l.b16 %v5492
  %v5784 = vunpack.c.l.b16 %v5493
  %v5785 = vunpack.c.l.b16 %v5494
  %v5786 = vunpack.c.l.b16 %v5495
  %v5787 = vunpack.c.l.b16 %v5496
  %v5788 = vunpack.c.l.b16 %v5497
  %v5789 = vunpack.c.l.b16 %v5498
  %v5790 = vunpack.c.l.b16 %v5499
  %v5791 = vunpack.c.l.b16 %v5500
  %v5792 = vunpack.c.l.b16 %v5501
  %v5793 = vunpack.c.l.b16 %v5502
  %v5794 = vunpack.c.l.b16 %v5503
  %v5795 = vunpack.c.l.b16 %v5504
  %v5796 = vunpack.c.l.b16 %v5505
  %v5797 = vunpack.c.l.b16 %v5506
  %v5798 = vunpack.c.l.b16 %v5507
  %v5799 = vunpack.c.l.b16 %v5508
  %v5800 = vunpack.c.l.b16 %v5509
  %v5801 = vunpack.c.l.b16 %v5510
  %v5802 = vunpack.c.l.b16 %v5511
  %v5803 = vunpack.c.l.b16 %v5512
  %v5804 = vunpack.c.l.b16 %v5513
  %v5805 = vunpack.c.l.b16 %v5514
  %v5806 = vunpack.c.l.b16 %v5515
  %v5807 = vunpack.c.l.b16 %v5516
  %v5808 = vunpack.c.l.b16 %v5517
  %v5809 = vunpack.c.l.b16 %v5518
  %v5810 = vunpack.c.l.b16 %v5519
  %v5811 = vunpack.c.l.b16 %v5520
  %v5812 = vunpack.c.l.b16 %v5521
  %v5813 = vunpack.c.l.b16 %v5522
  %v5814 = vunpack.c.l.b16 %v5523
  %v5815 = vunpack.c.l.b16 %v5524
  %v5816 = vunpack.c.l.b16 %v5525
  %v5817 = vunpack.c.l.b16 %v5526
  %v5818 = vunpack.c.l.b16 %v5527
  %v5819 = vunpack.c.l.b16 %v5528
  %v5820 = vunpack.c.l.b16 %v5529
  %v5821 = vunpack.c.l.b16 %v5530
  %v5822 = vunpack.c.l.b16 %v5531
  %v5823 = vunpack.c.l.b16 %v5532
  %v5824 = vunpack.c.l.b16 %v5533
  %v5825 = vunpack.c.l.b16 %v5534
  %v5826 = vunpack.c.l.b16 %v5535
  %v5827 = vunpack.c.l.b16 %v5536
  %v5828 = vunpack.c.l.b16 %v5537
  %v5829 = vunpack.c.l.b16 %v5538
  %v5830 = vunpack.c.l.b16 %v5539
  %v5831 = vunpack.c.l.b16 %v5540
  %v5832 = vunpack.c.l.b16 %v5541
  %v5833 = vunpack.c.l.b16 %v5542
  %v5834 = vunpack.c.l.b16 %v5543
  %v5835 = vunpack.c.l.b16 %v5544
  %v5836 = vunpack.c.l.b16 %v5545
  %v5837 = vunpack.c.l.b16 %v5546
  %v5838 = vunpack.c.l.b16 %v5547
  %v5839 = vunpack.c.l.b16 %v5548
  %v5840 = vunpack.c.l.b16 %v5549
  %v5841 = vunpack.c.l.b16 %v5550
  %v5842 = vunpack.c.l.b16 %v5551
  %v5843 = vunpack.c.l.b16 %v5552
  %v5844 = vunpack.c.l.b16 %v5553
  %v5845 = vunpack.c.l.b16 %v5554
  %v5846 = vunpack.c.l.b16 %v5555
  %v5847 = vunpack.c.l.b16 %v5556
  %v5848 = vunpack.c.l.b16 %v5557
  %v5849 = vunpack.c.l.b16 %v5558
  %v5850 = vunpack.c.l.b16 %v5559
  %v5851 = vunpack.c.l.b16 %v5560
  %v5852 = vunpack.c.l.b16 %v5561
  %v5853 = vunpack.c.l.b16 %v5562
  %v5854 = vunpack.c.l.b16 %v5563
  %v5855 = vunpack.c.l.b16 %v5564
  %v5856 = vunpack.c.l.b16 %v5565
  %v5857 = vunpack.c.l.b16 %v5566
  %v5858 = vunpack.c.l.b16 %v5567
  %v5859 = vunpack.c.l.b16 %v5568
  %v5860 = vunpack.c.l.b16 %v5569
  %v5861 = vunpack.c.l.b16 %v5570
  %v5862 = vunpack.c.l.b16 %v5571
  %v5863 = vunpack.c.l.b16 %v5572
  %v5864 = vunpack.c.l.b16 %v5573
  %v5865 = vunpack.c.l.b16 %v5574
  %v5866 = vunpack.c.l.b16 %v5575
  %v5867 = vunpack.c.l.b16 %v5576
  %v5868 = vunpack.c.l.b16 %v5577
  %v5869 = vunpack.c.l.b16 %v5578
  %v5870 = vunpack.c.l.b16 %v5579
  %v5871 = vunpack.c.l.b16 %v5580
  %v5872 = vunpack.c.l.b16 %v5581
  %v5873 = vunpack.c.l.b16 %v5582
  %v5874 = vunpack.c.l.b16 %v5583
  %v5875 = vunpack.c.l.b16 %v5584
  %v5876 = vunpack.c.l.b16 %v5585
  %v5877 = vunpack.c.l.b16 %v5586
  %v5878 = vunpack.c.l.b16 %v5587
  %v5879 = vunpack.c.l.b16 %v5588
  %v5880 = vunpack.c.l.b16 %v5589
  %v5881 = vunpack.c.l.b16 %v5590
  %v5882 = vpack.c.b16 %v5755, %v5754
  %v5883 = vpack.c.b16 %v5757, %v5756
  %v5884 = vpack.c.b16 %v5759, %v5758
  %v5885 = vpack.c.b16 %v5761, %v5760
  %v5886 = vpack.c.b16 %v5763, %v5762
  %v5887 = vpack.c.b16 %v5765, %v5764
  %v5888 = vpack.c.b16 %v5767, %v5766
  %v5889 = vpack.c.b16 %v5769, %v5768
  %v5890 = vpack.c.b16 %v5771, %v5770
  %v5891 = vpack.c.b16 %v5773, %v5772
  %v5892 = vpack.c.b16 %v5775, %v5774
  %v5893 = vpack.c.b16 %v5777, %v5776
  %v5894 = vpack.c.b16 %v5779, %v5778
  %v5895 = vpack.c.b16 %v5781, %v5780
  %v5896 = vpack.c.b16 %v5783, %v5782
  %v5897 = vpack.c.b16 %v5785, %v5784
  %v5898 = vpack.c.b16 %v5787, %v5786
  %v5899 = vpack.c.b16 %v5789, %v5788
  %v5900 = vpack.c.b16 %v5791, %v5790
  %v5901 = vpack.c.b16 %v5793, %v5792
  %v5902 = vpack.c.b16 %v5795, %v5794
  %v5903 = vpack.c.b16 %v5797, %v5796
  %v5904 = vpack.c.b16 %v5799, %v5798
  %v5905 = vpack.c.b16 %v5801, %v5800
  %v5906 = vpack.c.b16 %v5803, %v5802
  %v5907 = vpack.c.b16 %v5805, %v5804
  %v5908 = vpack.c.b16 %v5807, %v5806
  %v5909 = vpack.c.b16 %v5809, %v5808
  %v5910 = vpack.c.b16 %v5811, %v5810
  %v5911 = vpack.c.b16 %v5813, %v5812
  %v5912 = vpack.c.b16 %v5815, %v5814
  %v5913 = vpack.c.b16 %v5817, %v5816
  %v5914 = vpack.c.b16 %v5819, %v5818
  %v5915 = vpack.c.b16 %v5821, %v5820
  %v5916 = vpack.c.b16 %v5823, %v5822
  %v5917 = vpack.c.b16 %v5825, %v5824
  %v5918 = vpack.c.b16 %v5827, %v5826
  %v5919 = vpack.c.b16 %v5829, %v5828
  %v5920 = vpack.c.b16 %v5831, %v5830
  %v5921 = vpack.c.b16 %v5833, %v5832
  %v5922 = vpack.c.b16 %v5835, %v5834
  %v5923 = vpack.c.b16 %v5837, %v5836
  %v5924 = vpack.c.b16 %v5839, %v5838
  %v5925 = vpack.c.b16 %v5841, %v5840
  %v5926 = vpack.c.b16 %v5843, %v5842
  %v5927 = vpack.c.b16 %v5845, %v5844
  %v5928 = vpack.c.b16 %v5847, %v5846
  %v5929 = vpack.c.b16 %v5849, %v5848
  %v5930 = vpack.c.b16 %v5851, %v5850
  %v5931 = vpack.c.b16 %v5853, %v5852
  %v5932 = vpack.c.b16 %v5855, %v5854
  %v5933 = vpack.c.b16 %v5857, %v5856
  %v5934 = vpack.c.b16 %v5859, %v5858
  %v5935 = vpack.c.b16 %v5861, %v5860
  %v5936 = vpack.c.b16 %v5863, %v5862
  %v5937 = vpack.c.b16 %v5865, %v5864
  %v5938 = vpack.c.b16 %v5867, %v5866
  %v5939 = vpack.c.b16 %v5869, %v5868
  %v5940 = vpack.c.b16 %v5871, %v5870
  %v5941 = vpack.c.b16 %v5873, %v5872
  %v5942 = vpack.c.b16 %v5875, %v5874
  %v5943 = vpack.c.b16 %v5877, %v5876
  %v5944 = vpack.c.b16 %v5879, %v5878
  %v5945 = vpack.c.b16 %v5881, %v5880
  %6010 = vmatpush.bf16.msra.mxu0 %v5889
  %6011 = vmatpush.bf16.msra.mxu0 %v5888
  %6012 = vmatpush.bf16.msra.mxu0 %v5887
  %6013 = vmatpush.bf16.msra.mxu0 %v5886
  %6014 = vmatpush.bf16.msra.mxu0 %v5885
  %6015 = vmatpush.bf16.msra.mxu0 %v5884
  %6016 = vmatpush.bf16.msra.mxu0 %v5883
  %6017 = vmatpush.bf16.msra.mxu0 %v5882
  %6018 = vmatmul.bf16.gmra.mxu0 %v5454
  %v6019 = vpop.f32.mrf.mxu0
  %v6020 = vadd.f32 %v5622, %v6019
  %v6021 = vpop.f32.mrf.mxu0
  %v6022 = vadd.f32 %v5624, %v6021
  %6023 = vdwg.mxu0
  %6024 = vmatpush.bf16.msra.mxu0 %v5897
  %6025 = vmatpush.bf16.msra.mxu0 %v5896
  %6026 = vmatpush.bf16.msra.mxu0 %v5895
  %6027 = vmatpush.bf16.msra.mxu0 %v5894
  %6028 = vmatpush.bf16.msra.mxu0 %v5893
  %6029 = vmatpush.bf16.msra.mxu0 %v5892
  %6030 = vmatpush.bf16.msra.mxu0 %v5891
  %6031 = vmatpush.bf16.msra.mxu0 %v5890
  %6032 = vmatmul.bf16.gmra.mxu0 %v5455
  %v6033 = vpop.f32.mrf.mxu0
  %v6034 = vadd.f32 %v6020, %v6033
  %v6035 = vpop.f32.mrf.mxu0
  %v6036 = vadd.f32 %v6022, %v6035
  %6037 = vdwg.mxu0
  %6038 = vmatpush.bf16.msra.mxu0 %v5905
  %6039 = vmatpush.bf16.msra.mxu0 %v5904
  %6040 = vmatpush.bf16.msra.mxu0 %v5903
  %6041 = vmatpush.bf16.msra.mxu0 %v5902
  %6042 = vmatpush.bf16.msra.mxu0 %v5901
  %6043 = vmatpush.bf16.msra.mxu0 %v5900
  %6044 = vmatpush.bf16.msra.mxu0 %v5899
  %6045 = vmatpush.bf16.msra.mxu0 %v5898
  %6046 = vmatmul.bf16.gmra.mxu0 %v5456
  %v6047 = vpop.f32.mrf.mxu0
  %v6048 = vadd.f32 %v6034, %v6047
  %v6049 = vpop.f32.mrf.mxu0
  %v6050 = vadd.f32 %v6036, %v6049
  %6051 = vdwg.mxu0
  %6052 = vmatpush.bf16.msra.mxu0 %v5913
  %6053 = vmatpush.bf16.msra.mxu0 %v5912
  %6054 = vmatpush.bf16.msra.mxu0 %v5911
  %6055 = vmatpush.bf16.msra.mxu0 %v5910
  %6056 = vmatpush.bf16.msra.mxu0 %v5909
  %6057 = vmatpush.bf16.msra.mxu0 %v5908
  %6058 = vmatpush.bf16.msra.mxu0 %v5907
  %6059 = vmatpush.bf16.msra.mxu0 %v5906
  %6060 = vmatmul.bf16.gmra.mxu0 %v5457
  %v6061 = vpop.f32.mrf.mxu0
  %v6062 = vadd.f32 %v6048, %v6061
  %v6063 = vpop.f32.mrf.mxu0
  %v6064 = vadd.f32 %v6050, %v6063
  %6065 = vdwg.mxu0
  %6066 = vmatpush.bf16.msra.mxu0 %v5921
  %6067 = vmatpush.bf16.msra.mxu0 %v5920
  %6068 = vmatpush.bf16.msra.mxu0 %v5919
  %6069 = vmatpush.bf16.msra.mxu0 %v5918
  %6070 = vmatpush.bf16.msra.mxu0 %v5917
  %6071 = vmatpush.bf16.msra.mxu0 %v5916
  %6072 = vmatpush.bf16.msra.mxu0 %v5915
  %6073 = vmatpush.bf16.msra.mxu0 %v5914
  %6074 = vmatmul.bf16.gmra.mxu0 %v5458
  %v6075 = vpop.f32.mrf.mxu0
  %v6076 = vadd.f32 %v6062, %v6075
  %v6077 = vpop.f32.mrf.mxu0
  %v6078 = vadd.f32 %v6064, %v6077
  %6079 = vdwg.mxu0
  %6080 = vmatpush.bf16.msra.mxu0 %v5929
  %6081 = vmatpush.bf16.msra.mxu0 %v5928
  %6082 = vmatpush.bf16.msra.mxu0 %v5927
  %6083 = vmatpush.bf16.msra.mxu0 %v5926
  %6084 = vmatpush.bf16.msra.mxu0 %v5925
  %6085 = vmatpush.bf16.msra.mxu0 %v5924
  %6086 = vmatpush.bf16.msra.mxu0 %v5923
  %6087 = vmatpush.bf16.msra.mxu0 %v5922
  %6088 = vmatmul.bf16.gmra.mxu0 %v5459
  %v6089 = vpop.f32.mrf.mxu0
  %v6090 = vadd.f32 %v6076, %v6089
  %v6091 = vpop.f32.mrf.mxu0
  %v6092 = vadd.f32 %v6078, %v6091
  %6093 = vdwg.mxu0
  %6094 = vmatpush.bf16.msra.mxu0 %v5937
  %6095 = vmatpush.bf16.msra.mxu0 %v5936
  %6096 = vmatpush.bf16.msra.mxu0 %v5935
  %6097 = vmatpush.bf16.msra.mxu0 %v5934
  %6098 = vmatpush.bf16.msra.mxu0 %v5933
  %6099 = vmatpush.bf16.msra.mxu0 %v5932
  %6100 = vmatpush.bf16.msra.mxu0 %v5931
  %6101 = vmatpush.bf16.msra.mxu0 %v5930
  %6102 = vmatmul.bf16.gmra.mxu0 %v5460
  %v6103 = vpop.f32.mrf.mxu0
  %v6104 = vadd.f32 %v6090, %v6103
  %v6105 = vpop.f32.mrf.mxu0
  %v6106 = vadd.f32 %v6092, %v6105
  %6107 = vdwg.mxu0
  %6108 = vmatpush.bf16.msra.mxu0 %v5945
  %6109 = vmatpush.bf16.msra.mxu0 %v5944
  %6110 = vmatpush.bf16.msra.mxu0 %v5943
  %6111 = vmatpush.bf16.msra.mxu0 %v5942
  %6112 = vmatpush.bf16.msra.mxu0 %v5941
  %6113 = vmatpush.bf16.msra.mxu0 %v5940
  %6114 = vmatpush.bf16.msra.mxu0 %v5939
  %6115 = vmatpush.bf16.msra.mxu0 %v5938
  %6116 = vmatmul.bf16.gmra.mxu0 %v5461
  %v6117 = vpop.f32.mrf.mxu0
  %v6118 = vadd.f32 %v6104, %v6117
  %v6119 = vpop.f32.mrf.mxu0
  %v6120 = vadd.f32 %v6106, %v6119
  %6121 = vdwg.mxu0
  %6124 = vrot.lane.b32.xlu0 %v1625, 96
  %v6125 = vpop.permute.xlu0 %6124
  %6126 = vrot.lane.b32.xlu0 %v1627, 96
  %v6127 = vpop.permute.xlu0 %6126
  %v6130 = vadd.f32 %v6118, %v6125
  %v6131 = vadd.f32 %v6120, %v6127
  %v6132 = vmul.f32 %v6130, %v138
  %v6133 = vmul.f32 %v6131, %v140
  %v6134 = vsel %vm84, %v6132, 0.0
  %6135 = vadd.xlane.f32.xlu0 %v6134
  %v6136 = vpop.xlane.xlu0 %6135
  %v6137 = vsel %vm84, %v6133, 0.0
  %6138 = vadd.xlane.f32.xlu0 %v6137
  %v6139 = vpop.xlane.xlu0 %6138
  %vm6140 = vcmask 7168
  %6141 = vst.msk [vmem:[%s17] sm:$0xff] %vm6140, %v6136
  %6142 = vst.msk [vmem:[%s17 + $0x8] sm:$0xff] %vm6140, %v6139
  // Predicated region
  $region70: #{gru4rec_forward.1} parent=0 // pred_check
    _
  $region71: #{gru4rec_forward.1} parent=0 // pred_check_branch
    %6144 = sbr.rel (0) target = $region73
  $region72: #{gru4rec_forward.1} parent=0 // pred_region
    _
  $region73: #{gru4rec_forward.1} parent=0 // pred_fallthru
    _
  // Predicated region
  $region74: #{gru4rec_forward.1} parent=0 // pred_check
    _
  $region75: #{gru4rec_forward.1} parent=0 // pred_check_branch
    %6146 = sbr.rel (0) target = $region77
  $region76: #{gru4rec_forward.1} parent=0 // pred_region
    _
  $region77: #{gru4rec_forward.1} parent=0 // pred_fallthru
    _

</llo_original>
